<compile_context>
chip_gen: v5e
topology: v5e:2x2
jax: 0.10.0
libtpu: 0.0.40
codegen_flags: <defaults>
</compile_context>

<pallas_src>
import jax
import jax.numpy as jnp
from jax import lax
from jax.experimental import pallas as pl
from jax.experimental.pallas import tpu as pltpu


# ----------------------------------------------------------------------------
# Small helpers
# ----------------------------------------------------------------------------
def _eye(n, dtype):
    """Identity matrix built in-kernel (2-D iota + compare)."""
    r = lax.broadcasted_iota(jnp.int32, (n, n), 0)
    c = lax.broadcasted_iota(jnp.int32, (n, n), 1)
    return (r == c).astype(dtype)


# ----------------------------------------------------------------------------
# Pallas kernel: one invocation runs the whole coupling-layer chain for one
# batch tile.  Compute layout is batch-on-lanes: state x^T is (D, bt).
# ----------------------------------------------------------------------------
def _realnvp_kernel(
    x_ref, sldj_ref,                         # (bt, D), (1, bt)
    w1T_ref, b1_ref,                         # (L, 2H, D), (L, 2H, 1)
    w2T_ref, b2_ref,                         # fused: (L, 2H, 2H), (L, 2H, 1)
                                             # unfused: (L, 2, H, H), (L, 2, H, 1)
    w3T_ref, b3_ref,                         # fused: (L, 2D, 2H), (L, 2D, 1)
                                             # unfused: (L, 2, D, H), (L, 2, D, 1)
    resc_ref,                                # (L, D, 1)  (= rescale * (1 - mask))
    y_ref, sldj_out_ref,                     # (bt, D), (1, bt)
):
    L = w1T_ref.shape[0]
    D = x_ref.shape[1]
    bt = x_ref.shape[0]
    H = w1T_ref.shape[1] // 2
    fused = len(w2T_ref.shape) == 3          # block-diagonal fused nets (2H <= 128)
    mm = w1T_ref.dtype                       # matmul operand dtype (f32 / gated bf16)

    # --- enter batch-on-lanes layout --------------------------------------
    # HBM layout is (B, D); transpose the (bt, D) block to (D, bt) on the MXU
    # via an identity dot (flash-style contract-last-last -> native
    # transposed-rhs matmul, no vector transpose, no extra HBM pass).
    x_bd = x_ref[...]                                            # (bt, D) f32
    x = lax.dot_general(_eye(D, jnp.float32), x_bd,
                        (((1,), (1,)), ((), ())),
                        preferred_element_type=jnp.float32)      # (D, bt) f32
    sldj = sldj_ref[...]                                         # (1, bt) f32

    def mxu(w, v):                       # w @ v, f32 accumulate, gated bf16 operands
        return jnp.dot(w, v.astype(mm), preferred_element_type=jnp.float32)

    # Static unrolled layer chain (inherently sequential).
    # TODO(synk): switch to lax.fori_loop with dynamic w*_ref[l] indexing if L
    # grows beyond a few dozen layers (instruction footprint / compile time).
    for l in range(L):
        # Fused [scale_net | translate_net] first Linear (mask/BN folded in).
        h = jnp.maximum(mxu(w1T_ref[l], x) + b1_ref[l], 0.0)     # (2H, bt)

        if fused:
            # Block-diagonal fused 2nd/3rd Linears (only emitted when 2H <= 128).
            h = jnp.maximum(mxu(w2T_ref[l], h) + b2_ref[l], 0.0)  # (2H, bt)
            o = mxu(w3T_ref[l], h) + b3_ref[l]                    # (2D, bt)
            s_pre, t = o[:D], o[D:]
        else:
            # Separate per-net matmuls (H >= 128): no structural-zero FLOPs.
            hs = jnp.maximum(mxu(w2T_ref[l, 0], h[:H]) + b2_ref[l, 0], 0.0)
            ht = jnp.maximum(mxu(w2T_ref[l, 1], h[H:]) + b2_ref[l, 1], 0.0)
            s_pre = mxu(w3T_ref[l, 0], hs) + b3_ref[l, 0]         # (D, bt)
            t = mxu(w3T_ref[l, 1], ht) + b3_ref[l, 1]             # (D, bt)

        s = jnp.tanh(s_pre) * resc_ref[l]     # rescale(tanh(s)) * (1 - mask), f32
        # forward (reverse=False): y = x*exp(s) + t ; sldj += sum(s, feature)
        x = x * jnp.exp(s) + t
        sldj = sldj + jnp.sum(s, axis=0, keepdims=True)

    # --- leave batch-on-lanes layout ---------------------------------------
    # Transpose back to (bt, D) for the (B, D) output, again on the MXU.
    y_ref[...] = lax.dot_general(_eye(bt, jnp.float32), x,
                                 (((1,), (1,)), ((), ())),
                                 preferred_element_type=jnp.float32)
    sldj_out_ref[...] = sldj


# ----------------------------------------------------------------------------
# Wrapper: single pallas_call, grid only over batch tiles (parallel), batch
# padded to a 128-lane multiple (pad sliced off afterwards).
# ----------------------------------------------------------------------------
@jax.jit
def realnvp_forward(x, sldj, folded):
    (w1T, b1c, w2T, b2c, w3T, b3c, rescc) = folded
    B, D = x.shape
    H = w1T.shape[1] // 2

    # Lane-dense batch: pad B up to a multiple of 128; padded rows are zeros
    # (finite through the chain) and are sliced off after the call.
    B_pad = max(128, ((B + 127) // 128) * 128)
    if B_pad != B:
        x = jnp.pad(x, ((0, B_pad - B), (0, 0)))
        sldj = jnp.pad(sldj, ((0, B_pad - B),))
    sldj2 = sldj.reshape(1, B_pad)

    # Batch tile: largest 128-multiple divisor of B_pad, capped at 512 and at
    # B_pad // 2 once B_pad >= 256 (so the 'parallel' axis has >= 2 steps and
    # both v7x TensorCores get work; neutral on v5e/v6e).  bt always divides
    # B_pad, so no tail rows are ever dropped.
    # TODO(synk): on v5e/v6e with very large B, raising the cap to 1024 (plus
    # vmem_limit_bytes via CompilerParams) further amortizes per-step overhead.
    cap = 512 if B_pad < 256 else min(512, B_pad // 2)
    bt = 128
    for cand in range(256, cap + 1, 128):
        if B_pad % cand == 0:
            bt = cand
    nb = B_pad // bt

    # bf16 matmul path for big problems (v6e/v7x MXU throughput); keep f32 for
    # the tiny / latency-bound regime.  Elementwise math stays f32 regardless.
    if H >= 128 and bt >= 256:
        w1T = w1T.astype(jnp.bfloat16)
        w2T = w2T.astype(jnp.bfloat16)
        w3T = w3T.astype(jnp.bfloat16)

    def full_spec(arr):
        nd = arr.ndim
        return pl.BlockSpec(arr.shape, lambda i, _nd=nd: (0,) * _nd)

    # TODO(synk): on v7x at large L/D/H, add pipeline_mode=pl.Buffered(1) to
    # the parameter BlockSpecs (constant index_map => no re-fetch needed) to
    # halve the double-buffered parameter residency in the 64 MiB VMEM.
    grid_spec = pltpu.PrefetchScalarGridSpec(
        num_scalar_prefetch=0,
        grid=(nb,),
        in_specs=[
            pl.BlockSpec((bt, D), lambda i: (i, 0)),     # x  (batch-tiled rows)
            pl.BlockSpec((1, bt), lambda i: (0, i)),     # sldj
            full_spec(w1T), full_spec(b1c),              # whole folded parameter
            full_spec(w2T), full_spec(b2c),              #   stack stays resident
            full_spec(w3T), full_spec(b3c),              #   in VMEM
            full_spec(rescc),
        ],
        out_specs=(
            pl.BlockSpec((bt, D), lambda i: (i, 0)),
            pl.BlockSpec((1, bt), lambda i: (0, i)),
        ),
    )

    y, sldj_out = pl.pallas_call(
        _realnvp_kernel,
        out_shape=(
            jax.ShapeDtypeStruct((B_pad, D), jnp.float32),
            jax.ShapeDtypeStruct((1, B_pad), jnp.float32),
        ),
        grid_spec=grid_spec,
        compiler_params=pltpu.CompilerParams(
            dimension_semantics=("parallel",)),          # batch tiles independent
    )(x, sldj2, w1T, b1c, w2T, b2c, w3T, b3c, rescc)

    return y[:B], sldj_out[0, :B]


# ----------------------------------------------------------------------------
# Parameter folding (exact algebraic rewrites, done once in the wrapper):
#   * mask folded into W1 rows
#   * BN1/BN2 (inference affine, post-ReLU) folded into W2/b2 and W3/b3
#   * (1 - mask) folded into rescale (s path) and translate W3/b3 (t path)
#   * scale/translate nets fused via concat; 2nd/3rd Linears fused into
#     block-diagonal weights only when 2H <= 128 (no structural-zero waste
#     for large H)
#   * everything transposed for the batch-on-lanes kernel layout
# ----------------------------------------------------------------------------
def fold_params(params, fuse_nets=None):
    (masks, w1, b1, bn1s, bn1h, w2, b2, bn2s, bn2h, w3, b3, resc) = params
    L, _, D, H = w1.shape
    if fuse_nets is None:
        fuse_nets = (2 * H) <= 128       # block-diag fusion only when it fits a pass
    inv = 1.0 - masks                                            # (L, D)

    # mask into W1; fuse the two nets along the output axis.
    w1m = masks[:, None, :, None] * w1                           # (L, 2, D, H)
    w1f = jnp.concatenate([w1m[:, 0], w1m[:, 1]], axis=-1)       # (L, D, 2H)
    b1f = jnp.concatenate([b1[:, 0, 0], b1[:, 1, 0]], axis=-1)   # (L, 2H)

    # BN1 (h*scale + shift, after ReLU) folded into the second Linear.
    w2p = bn1s[:, :, 0, :, None] * w2                            # (L, 2, H, H)
    b2p = jnp.einsum("lnh,lnhk->lnk", bn1h[:, :, 0, :], w2) + b2[:, :, 0, :]

    # BN2 folded into the third Linear; inv_mask folded into translate output.
    w3p = bn2s[:, :, 0, :, None] * w3                            # (L, 2, H, D)
    b3p = jnp.einsum("lnh,lnhd->lnd", bn2h[:, :, 0, :], w3) + b3[:, :, 0, :]
    w3p = w3p.at[:, 1].multiply(inv[:, None, :])
    b3p = b3p.at[:, 1].multiply(inv)

    rescf = resc * inv                                           # (L, D)

    # Transpose for the x^T (batch-on-lanes) layout.
    w1T = jnp.transpose(w1f, (0, 2, 1))                          # (L, 2H, D)

    if fuse_nets:
        zH = jnp.zeros((L, H, H), jnp.float32)
        w2f = jnp.concatenate(
            [jnp.concatenate([w2p[:, 0], zH], axis=-1),
             jnp.concatenate([zH, w2p[:, 1]], axis=-1)], axis=-2)  # (L, 2H, 2H)
        b2f = jnp.concatenate([b2p[:, 0], b2p[:, 1]], axis=-1)     # (L, 2H)
        zD = jnp.zeros((L, H, D), jnp.float32)
        w3f = jnp.concatenate(
            [jnp.concatenate([w3p[:, 0], zD], axis=-1),
             jnp.concatenate([zD, w3p[:, 1]], axis=-1)], axis=-2)  # (L, 2H, 2D)
        b3f = jnp.concatenate([b3p[:, 0], b3p[:, 1]], axis=-1)     # (L, 2D)

        w2T = jnp.transpose(w2f, (0, 2, 1))                        # (L, 2H, 2H)
        w3T = jnp.transpose(w3f, (0, 2, 1))                        # (L, 2D, 2H)
        b2c = b2f[:, :, None]                                      # (L, 2H, 1)
        b3c = b3f[:, :, None]                                      # (L, 2D, 1)
    else:
        w2T = jnp.transpose(w2p, (0, 1, 3, 2))                     # (L, 2, H, H)
        w3T = jnp.transpose(w3p, (0, 1, 3, 2))                     # (L, 2, D, H)
        b2c = b2p[:, :, :, None]                                   # (L, 2, H, 1)
        b3c = b3p[:, :, :, None]                                   # (L, 2, D, 1)

    return (w1T, b1f[:, :, None], w2T, b2c, w3T, b3c, rescf[:, :, None])


# ----------------------------------------------------------------------------
# Glue: mask construction + raw parameter init (mirrors _RealNVP.__init__).
# ----------------------------------------------------------------------------
def checkerboard_mask(width):
    return (jnp.arange(width) % 2 == 0).astype(jnp.float32)


def half_split_mask(width, reverse):
    m = (jnp.arange(width) < width // 2).astype(jnp.float32)
    return 1.0 - m if reverse else m


def build_coupling_list(scale_idx, num_scales):
    """Static list of (mask_type, reverse_flag) in forward-pass order."""
    is_last = scale_idx == num_scales - 1
    layers = [("checkerboard", False), ("checkerboard", True),
              ("checkerboard", False)]
    if is_last:
        layers.append(("checkerboard", True))
        return layers
    layers += [("simple", False), ("simple", True), ("simple", False)]
    layers += build_coupling_list(scale_idx + 1, num_scales)
    return layers


def init_params(key, layers, D, H):
    L = len(layers)
    ks = jax.random.split(key, 12)

    def rnd(k, shape, scale):
        return (scale * jax.random.normal(k, shape)).astype(jnp.float32)

    w1 = rnd(ks[0], (L, 2, D, H), (2.0 / (D + H)) ** 0.5)
    b1 = rnd(ks[1], (L, 2, 1, H), 0.01)
    w2 = rnd(ks[2], (L, 2, H, H), (2.0 / (H + H)) ** 0.5)
    b2 = rnd(ks[3], (L, 2, 1, H), 0.01)
    w3 = rnd(ks[4], (L, 2, H, D), (2.0 / (H + D)) ** 0.5)
    b3 = rnd(ks[5], (L, 2, 1, D), 0.01)

    # BatchNorm1d (inference mode) as affine: y = x*scale + shift
    eps = 1e-5
    g1 = 1.0 + rnd(ks[6], (L, 2, 1, H), 0.1)
    be1 = rnd(ks[7], (L, 2, 1, H), 0.1)
    mu1 = rnd(ks[8], (L, 2, 1, H), 0.1)
    var1 = jnp.abs(1.0 + rnd(ks[9], (L, 2, 1, H), 0.1))
    bn1s = g1 / jnp.sqrt(var1 + eps)
    bn1h = be1 - mu1 * bn1s

    g2 = 1.0 + rnd(ks[10], (L, 2, 1, H), 0.1)
    bn2s = g2 / jnp.sqrt(1.0 + eps)      # running_var=1, running_mean=0, beta=0
    bn2h = jnp.zeros((L, 2, 1, H), jnp.float32)

    # weight_norm(DataRescale(D)) -> per-feature multiplicative weight
    resc = 1.0 + rnd(ks[11], (L, D), 0.1)

    masks = jnp.stack([
        checkerboard_mask(D) if mt == "checkerboard" else half_split_mask(D, rv)
        for (mt, rv) in layers
    ])  # (L, D)

    return (masks, w1, b1, bn1s, bn1h, w2, b2, bn2s, bn2h, w3, b3, resc)


# ----------------------------------------------------------------------------
# Pure-JAX reference over the RAW (unfolded) params — checks the folding too.
# ----------------------------------------------------------------------------
def realnvp_reference(x, sldj, params):
    (masks, w1, b1, bn1s, bn1h, w2, b2, bn2s, bn2h, w3, b3, resc) = params
    L = masks.shape[0]
    for l in range(L):
        m = masks[l]
        xm = x * m
        outs = []
        for net in range(2):
            h = jnp.maximum(xm @ w1[l, net] + b1[l, net, 0], 0.0)
            h = h * bn1s[l, net, 0] + bn1h[l, net, 0]
            h = jnp.maximum(h @ w2[l, net] + b2[l, net, 0], 0.0)
            h = h * bn2s[l, net, 0] + bn2h[l, net, 0]
            outs.append(h @ w3[l, net] + b3[l, net, 0])
        s, t = outs
        s = jnp.tanh(s) * resc[l]
        s = s * (1.0 - m)
        t = t * (1.0 - m)
        x = x * jnp.exp(s) + t
        sldj = sldj + jnp.sum(s, axis=1)
    return x, sldj


# ----------------------------------------------------------------------------
if __name__ == "__main__":
    B, D, H = 8, 16, 32          # batch, input_dim (=width), hidden_dim
    num_scales = 2               # scale 0 (not last) recurses into scale 1

    layers = build_coupling_list(scale_idx=0, num_scales=num_scales)  # L = 10

    key = jax.random.PRNGKey(0)
    kx, kp = jax.random.split(key)
    x = jax.random.normal(kx, (B, D), dtype=jnp.float32)
    sldj = jnp.zeros((B,), dtype=jnp.float32)

    params = init_params(kp, layers, D, H)
    y_ref, sldj_ref = realnvp_reference(x, sldj, params)

    # Fused block-diagonal path (default for 2H <= 128).
    folded = fold_params(params)
    y, sldj_out = realnvp_forward(x, sldj, folded)
    jax.block_until_ready((y, sldj_out))
    assert y.shape == (B, D) and sldj_out.shape == (B,)
    assert jnp.allclose(y, y_ref, atol=1e-3, rtol=1e-3), "y mismatch (fused)"
    assert jnp.allclose(sldj_out, sldj_ref, atol=1e-3, rtol=1e-3), "sldj mismatch (fused)"

    # Unfused per-net path (the H >= 128 configuration), exercised at toy size.
    folded_nf = fold_params(params, fuse_nets=False)
    y2, sldj2 = realnvp_forward(x, sldj, folded_nf)
    jax.block_until_ready((y2, sldj2))
    assert jnp.allclose(y2, y_ref, atol=1e-3, rtol=1e-3), "y mismatch (unfused)"
    assert jnp.allclose(sldj2, sldj_ref, atol=1e-3, rtol=1e-3), "sldj mismatch (unfused)"

    print("KERNEL_OK")
</pallas_src>

<mosaic_0001>
module attributes {stable_mosaic.version = 11 : i64} {
  func.func @_realnvp_kernel(%arg0: i32, %arg1: memref<128x16xf32, #tpu.memory_space<vmem>>, %arg2: memref<1x128xf32, #tpu.memory_space<vmem>>, %arg3: memref<10x64x16xf32, #tpu.memory_space<vmem>>, %arg4: memref<10x64x1xf32, #tpu.memory_space<vmem>>, %arg5: memref<10x64x64xf32, #tpu.memory_space<vmem>>, %arg6: memref<10x64x1xf32, #tpu.memory_space<vmem>>, %arg7: memref<10x32x64xf32, #tpu.memory_space<vmem>>, %arg8: memref<10x32x1xf32, #tpu.memory_space<vmem>>, %arg9: memref<10x16x1xf32, #tpu.memory_space<vmem>>, %arg10: memref<128x16xf32, #tpu.memory_space<vmem>>, %arg11: memref<1x128xf32, #tpu.memory_space<vmem>>) attributes {dimension_semantics = [#tpu.dimension_semantics<parallel>], iteration_bounds = array<i64: 1>, scalar_prefetch = 0 : i64, scratch_operands = 0 : i64, tpu.core_type = #tpu.core_type<tc>, window_params = [{transform_indices = @transform_0, window_bounds = array<i64: 128, 16>}, {transform_indices = @transform_1, window_bounds = array<i64: 1, 128>}, {pipeline_mode = #tpu.pipeline_mode<synchronous>, transform_indices = @transform_2, window_bounds = array<i64: 10, 64, 16>}, {pipeline_mode = #tpu.pipeline_mode<synchronous>, transform_indices = @transform_3, window_bounds = array<i64: 10, 64, 1>}, {pipeline_mode = #tpu.pipeline_mode<synchronous>, transform_indices = @transform_4, window_bounds = array<i64: 10, 64, 64>}, {pipeline_mode = #tpu.pipeline_mode<synchronous>, transform_indices = @transform_5, window_bounds = array<i64: 10, 64, 1>}, {pipeline_mode = #tpu.pipeline_mode<synchronous>, transform_indices = @transform_6, window_bounds = array<i64: 10, 32, 64>}, {pipeline_mode = #tpu.pipeline_mode<synchronous>, transform_indices = @transform_7, window_bounds = array<i64: 10, 32, 1>}, {pipeline_mode = #tpu.pipeline_mode<synchronous>, transform_indices = @transform_8, window_bounds = array<i64: 10, 16, 1>}, {transform_indices = @transform_9, window_bounds = array<i64: 128, 16>}, {transform_indices = @transform_10, window_bounds = array<i64: 1, 128>}]} {
    %c0 = arith.constant 0 : index
    %c0_0 = arith.constant 0 : index
    %0 = vector.load %arg1[%c0, %c0_0] : memref<128x16xf32, #tpu.memory_space<vmem>>, vector<128x16xf32>
    %1 = tpu.iota {dimensions = array<i32: 0>} : vector<16x16xi32>
    %2 = tpu.iota {dimensions = array<i32: 1>} : vector<16x16xi32>
    %3 = arith.cmpi eq, %1, %2 : vector<16x16xi32>
    %4 = arith.extui %3 : vector<16x16xi1> to vector<16x16xi32>
    %5 = arith.sitofp %4 : vector<16x16xi32> to vector<16x16xf32>
    %cst = arith.constant dense<0.000000e+00> : vector<16x128xf32>
    %6 = tpu.matmul %5, %0, %cst {dimension_numbers = #tpu.dot_dimension_numbers<[1], [1], [0], [0], [0, 0, 1, 0], [], []>} : vector<16x16xf32>, vector<128x16xf32>, vector<16x128xf32> -> vector<16x128xf32>
    %c0_1 = arith.constant 0 : index
    %c0_2 = arith.constant 0 : index
    %7 = vector.load %arg2[%c0_1, %c0_2] : memref<1x128xf32, #tpu.memory_space<vmem>>, vector<1x128xf32>
    %c0_3 = arith.constant 0 : index
    %c0_4 = arith.constant 0 : index
    %c0_5 = arith.constant 0 : index
    %8 = vector.load %arg3[%c0_3, %c0_4, %c0_5] : memref<10x64x16xf32, #tpu.memory_space<vmem>>, vector<1x64x16xf32>
    %9 = vector.shape_cast %8 : vector<1x64x16xf32> to vector<64x16xf32>
    %cst_6 = arith.constant dense<0.000000e+00> : vector<64x128xf32>
    %10 = tpu.matmul %9, %6, %cst_6 {dimension_numbers = #tpu.dot_dimension_numbers<[1], [0], [0], [1], [0, 0, 1, 1], [], []>} : vector<64x16xf32>, vector<16x128xf32>, vector<64x128xf32> -> vector<64x128xf32>
    %c0_7 = arith.constant 0 : index
    %c0_8 = arith.constant 0 : index
    %c0_9 = arith.constant 0 : index
    %11 = vector.load %arg4[%c0_7, %c0_8, %c0_9] : memref<10x64x1xf32, #tpu.memory_space<vmem>>, vector<1x64x1xf32>
    %12 = vector.shape_cast %11 : vector<1x64x1xf32> to vector<64x1xf32>
    %13 = vector.broadcast %12 : vector<64x1xf32> to vector<64x128xf32>
    %14 = arith.addf %10, %13 : vector<64x128xf32>
    %cst_10 = arith.constant 0.000000e+00 : f32
    %15 = vector.broadcast %cst_10 : f32 to vector<64x128xf32>
    %16 = arith.maximumf %14, %15 : vector<64x128xf32>
    %c0_11 = arith.constant 0 : index
    %c0_12 = arith.constant 0 : index
    %c0_13 = arith.constant 0 : index
    %17 = vector.load %arg5[%c0_11, %c0_12, %c0_13] : memref<10x64x64xf32, #tpu.memory_space<vmem>>, vector<1x64x64xf32>
    %18 = vector.shape_cast %17 : vector<1x64x64xf32> to vector<64x64xf32>
    %cst_14 = arith.constant dense<0.000000e+00> : vector<64x128xf32>
    %19 = tpu.matmul %18, %16, %cst_14 {dimension_numbers = #tpu.dot_dimension_numbers<[1], [0], [0], [1], [0, 0, 1, 1], [], []>} : vector<64x64xf32>, vector<64x128xf32>, vector<64x128xf32> -> vector<64x128xf32>
    %c0_15 = arith.constant 0 : index
    %c0_16 = arith.constant 0 : index
    %c0_17 = arith.constant 0 : index
    %20 = vector.load %arg6[%c0_15, %c0_16, %c0_17] : memref<10x64x1xf32, #tpu.memory_space<vmem>>, vector<1x64x1xf32>
    %21 = vector.shape_cast %20 : vector<1x64x1xf32> to vector<64x1xf32>
    %22 = vector.broadcast %21 : vector<64x1xf32> to vector<64x128xf32>
    %23 = arith.addf %19, %22 : vector<64x128xf32>
    %cst_18 = arith.constant 0.000000e+00 : f32
    %24 = vector.broadcast %cst_18 : f32 to vector<64x128xf32>
    %25 = arith.maximumf %23, %24 : vector<64x128xf32>
    %c0_19 = arith.constant 0 : index
    %c0_20 = arith.constant 0 : index
    %c0_21 = arith.constant 0 : index
    %26 = vector.load %arg7[%c0_19, %c0_20, %c0_21] : memref<10x32x64xf32, #tpu.memory_space<vmem>>, vector<1x32x64xf32>
    %27 = vector.shape_cast %26 : vector<1x32x64xf32> to vector<32x64xf32>
    %cst_22 = arith.constant dense<0.000000e+00> : vector<32x128xf32>
    %28 = tpu.matmul %27, %25, %cst_22 {dimension_numbers = #tpu.dot_dimension_numbers<[1], [0], [0], [1], [0, 0, 1, 1], [], []>} : vector<32x64xf32>, vector<64x128xf32>, vector<32x128xf32> -> vector<32x128xf32>
    %c0_23 = arith.constant 0 : index
    %c0_24 = arith.constant 0 : index
    %c0_25 = arith.constant 0 : index
    %29 = vector.load %arg8[%c0_23, %c0_24, %c0_25] : memref<10x32x1xf32, #tpu.memory_space<vmem>>, vector<1x32x1xf32>
    %30 = vector.shape_cast %29 : vector<1x32x1xf32> to vector<32x1xf32>
    %31 = vector.broadcast %30 : vector<32x1xf32> to vector<32x128xf32>
    %32 = arith.addf %28, %31 : vector<32x128xf32>
    %33 = vector.extract_strided_slice %32 {offsets = [0, 0], sizes = [16, 128], strides = [1, 1]} : vector<32x128xf32> to vector<16x128xf32>
    %34 = vector.extract_strided_slice %32 {offsets = [16, 0], sizes = [16, 128], strides = [1, 1]} : vector<32x128xf32> to vector<16x128xf32>
    %35 = math.tanh %33 : vector<16x128xf32>
    %c0_26 = arith.constant 0 : index
    %c0_27 = arith.constant 0 : index
    %c0_28 = arith.constant 0 : index
    %36 = vector.load %arg9[%c0_26, %c0_27, %c0_28] : memref<10x16x1xf32, #tpu.memory_space<vmem>>, vector<1x16x1xf32>
    %37 = vector.shape_cast %36 : vector<1x16x1xf32> to vector<16x1xf32>
    %38 = vector.broadcast %37 : vector<16x1xf32> to vector<16x128xf32>
    %39 = arith.mulf %35, %38 : vector<16x128xf32>
    %40 = math.exp %39 : vector<16x128xf32>
    %41 = arith.mulf %6, %40 : vector<16x128xf32>
    %42 = arith.addf %41, %34 : vector<16x128xf32>
    %cst_29 = arith.constant dense<0.000000e+00> : vector<128xf32>
    %43 = vector.multi_reduction <add>, %39, %cst_29 [0] : vector<16x128xf32> to vector<128xf32>
    %44 = vector.shape_cast %43 : vector<128xf32> to vector<1x128xf32>
    %45 = arith.addf %7, %44 : vector<1x128xf32>
    %c1 = arith.constant 1 : index
    %c0_30 = arith.constant 0 : index
    %c0_31 = arith.constant 0 : index
    %46 = vector.load %arg3[%c1, %c0_30, %c0_31] : memref<10x64x16xf32, #tpu.memory_space<vmem>>, vector<1x64x16xf32>
    %47 = vector.shape_cast %46 : vector<1x64x16xf32> to vector<64x16xf32>
    %cst_32 = arith.constant dense<0.000000e+00> : vector<64x128xf32>
    %48 = tpu.matmul %47, %42, %cst_32 {dimension_numbers = #tpu.dot_dimension_numbers<[1], [0], [0], [1], [0, 0, 1, 1], [], []>} : vector<64x16xf32>, vector<16x128xf32>, vector<64x128xf32> -> vector<64x128xf32>
    %c1_33 = arith.constant 1 : index
    %c0_34 = arith.constant 0 : index
    %c0_35 = arith.constant 0 : index
    %49 = vector.load %arg4[%c1_33, %c0_34, %c0_35] : memref<10x64x1xf32, #tpu.memory_space<vmem>>, vector<1x64x1xf32>
    %50 = vector.shape_cast %49 : vector<1x64x1xf32> to vector<64x1xf32>
    %51 = vector.broadcast %50 : vector<64x1xf32> to vector<64x128xf32>
    %52 = arith.addf %48, %51 : vector<64x128xf32>
    %cst_36 = arith.constant 0.000000e+00 : f32
    %53 = vector.broadcast %cst_36 : f32 to vector<64x128xf32>
    %54 = arith.maximumf %52, %53 : vector<64x128xf32>
    %c1_37 = arith.constant 1 : index
    %c0_38 = arith.constant 0 : index
    %c0_39 = arith.constant 0 : index
    %55 = vector.load %arg5[%c1_37, %c0_38, %c0_39] : memref<10x64x64xf32, #tpu.memory_space<vmem>>, vector<1x64x64xf32>
    %56 = vector.shape_cast %55 : vector<1x64x64xf32> to vector<64x64xf32>
    %cst_40 = arith.constant dense<0.000000e+00> : vector<64x128xf32>
    %57 = tpu.matmul %56, %54, %cst_40 {dimension_numbers = #tpu.dot_dimension_numbers<[1], [0], [0], [1], [0, 0, 1, 1], [], []>} : vector<64x64xf32>, vector<64x128xf32>, vector<64x128xf32> -> vector<64x128xf32>
    %c1_41 = arith.constant 1 : index
    %c0_42 = arith.constant 0 : index
    %c0_43 = arith.constant 0 : index
    %58 = vector.load %arg6[%c1_41, %c0_42, %c0_43] : memref<10x64x1xf32, #tpu.memory_space<vmem>>, vector<1x64x1xf32>
    %59 = vector.shape_cast %58 : vector<1x64x1xf32> to vector<64x1xf32>
    %60 = vector.broadcast %59 : vector<64x1xf32> to vector<64x128xf32>
    %61 = arith.addf %57, %60 : vector<64x128xf32>
    %cst_44 = arith.constant 0.000000e+00 : f32
    %62 = vector.broadcast %cst_44 : f32 to vector<64x128xf32>
    %63 = arith.maximumf %61, %62 : vector<64x128xf32>
    %c1_45 = arith.constant 1 : index
    %c0_46 = arith.constant 0 : index
    %c0_47 = arith.constant 0 : index
    %64 = vector.load %arg7[%c1_45, %c0_46, %c0_47] : memref<10x32x64xf32, #tpu.memory_space<vmem>>, vector<1x32x64xf32>
    %65 = vector.shape_cast %64 : vector<1x32x64xf32> to vector<32x64xf32>
    %cst_48 = arith.constant dense<0.000000e+00> : vector<32x128xf32>
    %66 = tpu.matmul %65, %63, %cst_48 {dimension_numbers = #tpu.dot_dimension_numbers<[1], [0], [0], [1], [0, 0, 1, 1], [], []>} : vector<32x64xf32>, vector<64x128xf32>, vector<32x128xf32> -> vector<32x128xf32>
    %c1_49 = arith.constant 1 : index
    %c0_50 = arith.constant 0 : index
    %c0_51 = arith.constant 0 : index
    %67 = vector.load %arg8[%c1_49, %c0_50, %c0_51] : memref<10x32x1xf32, #tpu.memory_space<vmem>>, vector<1x32x1xf32>
    %68 = vector.shape_cast %67 : vector<1x32x1xf32> to vector<32x1xf32>
    %69 = vector.broadcast %68 : vector<32x1xf32> to vector<32x128xf32>
    %70 = arith.addf %66, %69 : vector<32x128xf32>
    %71 = vector.extract_strided_slice %70 {offsets = [0, 0], sizes = [16, 128], strides = [1, 1]} : vector<32x128xf32> to vector<16x128xf32>
    %72 = vector.extract_strided_slice %70 {offsets = [16, 0], sizes = [16, 128], strides = [1, 1]} : vector<32x128xf32> to vector<16x128xf32>
    %73 = math.tanh %71 : vector<16x128xf32>
    %c1_52 = arith.constant 1 : index
    %c0_53 = arith.constant 0 : index
    %c0_54 = arith.constant 0 : index
    %74 = vector.load %arg9[%c1_52, %c0_53, %c0_54] : memref<10x16x1xf32, #tpu.memory_space<vmem>>, vector<1x16x1xf32>
    %75 = vector.shape_cast %74 : vector<1x16x1xf32> to vector<16x1xf32>
    %76 = vector.broadcast %75 : vector<16x1xf32> to vector<16x128xf32>
    %77 = arith.mulf %73, %76 : vector<16x128xf32>
    %78 = math.exp %77 : vector<16x128xf32>
    %79 = arith.mulf %42, %78 : vector<16x128xf32>
    %80 = arith.addf %79, %72 : vector<16x128xf32>
    %cst_55 = arith.constant dense<0.000000e+00> : vector<128xf32>
    %81 = vector.multi_reduction <add>, %77, %cst_55 [0] : vector<16x128xf32> to vector<128xf32>
    %82 = vector.shape_cast %81 : vector<128xf32> to vector<1x128xf32>
    %83 = arith.addf %45, %82 : vector<1x128xf32>
    %c2 = arith.constant 2 : index
    %c0_56 = arith.constant 0 : index
    %c0_57 = arith.constant 0 : index
    %84 = vector.load %arg3[%c2, %c0_56, %c0_57] : memref<10x64x16xf32, #tpu.memory_space<vmem>>, vector<1x64x16xf32>
    %85 = vector.shape_cast %84 : vector<1x64x16xf32> to vector<64x16xf32>
    %cst_58 = arith.constant dense<0.000000e+00> : vector<64x128xf32>
    %86 = tpu.matmul %85, %80, %cst_58 {dimension_numbers = #tpu.dot_dimension_numbers<[1], [0], [0], [1], [0, 0, 1, 1], [], []>} : vector<64x16xf32>, vector<16x128xf32>, vector<64x128xf32> -> vector<64x128xf32>
    %c2_59 = arith.constant 2 : index
    %c0_60 = arith.constant 0 : index
    %c0_61 = arith.constant 0 : index
    %87 = vector.load %arg4[%c2_59, %c0_60, %c0_61] : memref<10x64x1xf32, #tpu.memory_space<vmem>>, vector<1x64x1xf32>
    %88 = vector.shape_cast %87 : vector<1x64x1xf32> to vector<64x1xf32>
    %89 = vector.broadcast %88 : vector<64x1xf32> to vector<64x128xf32>
    %90 = arith.addf %86, %89 : vector<64x128xf32>
    %cst_62 = arith.constant 0.000000e+00 : f32
    %91 = vector.broadcast %cst_62 : f32 to vector<64x128xf32>
    %92 = arith.maximumf %90, %91 : vector<64x128xf32>
    %c2_63 = arith.constant 2 : index
    %c0_64 = arith.constant 0 : index
    %c0_65 = arith.constant 0 : index
    %93 = vector.load %arg5[%c2_63, %c0_64, %c0_65] : memref<10x64x64xf32, #tpu.memory_space<vmem>>, vector<1x64x64xf32>
    %94 = vector.shape_cast %93 : vector<1x64x64xf32> to vector<64x64xf32>
    %cst_66 = arith.constant dense<0.000000e+00> : vector<64x128xf32>
    %95 = tpu.matmul %94, %92, %cst_66 {dimension_numbers = #tpu.dot_dimension_numbers<[1], [0], [0], [1], [0, 0, 1, 1], [], []>} : vector<64x64xf32>, vector<64x128xf32>, vector<64x128xf32> -> vector<64x128xf32>
    %c2_67 = arith.constant 2 : index
    %c0_68 = arith.constant 0 : index
    %c0_69 = arith.constant 0 : index
    %96 = vector.load %arg6[%c2_67, %c0_68, %c0_69] : memref<10x64x1xf32, #tpu.memory_space<vmem>>, vector<1x64x1xf32>
    %97 = vector.shape_cast %96 : vector<1x64x1xf32> to vector<64x1xf32>
    %98 = vector.broadcast %97 : vector<64x1xf32> to vector<64x128xf32>
    %99 = arith.addf %95, %98 : vector<64x128xf32>
    %cst_70 = arith.constant 0.000000e+00 : f32
    %100 = vector.broadcast %cst_70 : f32 to vector<64x128xf32>
    %101 = arith.maximumf %99, %100 : vector<64x128xf32>
    %c2_71 = arith.constant 2 : index
    %c0_72 = arith.constant 0 : index
    %c0_73 = arith.constant 0 : index
    %102 = vector.load %arg7[%c2_71, %c0_72, %c0_73] : memref<10x32x64xf32, #tpu.memory_space<vmem>>, vector<1x32x64xf32>
    %103 = vector.shape_cast %102 : vector<1x32x64xf32> to vector<32x64xf32>
    %cst_74 = arith.constant dense<0.000000e+00> : vector<32x128xf32>
    %104 = tpu.matmul %103, %101, %cst_74 {dimension_numbers = #tpu.dot_dimension_numbers<[1], [0], [0], [1], [0, 0, 1, 1], [], []>} : vector<32x64xf32>, vector<64x128xf32>, vector<32x128xf32> -> vector<32x128xf32>
    %c2_75 = arith.constant 2 : index
    %c0_76 = arith.constant 0 : index
    %c0_77 = arith.constant 0 : index
    %105 = vector.load %arg8[%c2_75, %c0_76, %c0_77] : memref<10x32x1xf32, #tpu.memory_space<vmem>>, vector<1x32x1xf32>
    %106 = vector.shape_cast %105 : vector<1x32x1xf32> to vector<32x1xf32>
    %107 = vector.broadcast %106 : vector<32x1xf32> to vector<32x128xf32>
    %108 = arith.addf %104, %107 : vector<32x128xf32>
    %109 = vector.extract_strided_slice %108 {offsets = [0, 0], sizes = [16, 128], strides = [1, 1]} : vector<32x128xf32> to vector<16x128xf32>
    %110 = vector.extract_strided_slice %108 {offsets = [16, 0], sizes = [16, 128], strides = [1, 1]} : vector<32x128xf32> to vector<16x128xf32>
    %111 = math.tanh %109 : vector<16x128xf32>
    %c2_78 = arith.constant 2 : index
    %c0_79 = arith.constant 0 : index
    %c0_80 = arith.constant 0 : index
    %112 = vector.load %arg9[%c2_78, %c0_79, %c0_80] : memref<10x16x1xf32, #tpu.memory_space<vmem>>, vector<1x16x1xf32>
    %113 = vector.shape_cast %112 : vector<1x16x1xf32> to vector<16x1xf32>
    %114 = vector.broadcast %113 : vector<16x1xf32> to vector<16x128xf32>
    %115 = arith.mulf %111, %114 : vector<16x128xf32>
    %116 = math.exp %115 : vector<16x128xf32>
    %117 = arith.mulf %80, %116 : vector<16x128xf32>
    %118 = arith.addf %117, %110 : vector<16x128xf32>
    %cst_81 = arith.constant dense<0.000000e+00> : vector<128xf32>
    %119 = vector.multi_reduction <add>, %115, %cst_81 [0] : vector<16x128xf32> to vector<128xf32>
    %120 = vector.shape_cast %119 : vector<128xf32> to vector<1x128xf32>
    %121 = arith.addf %83, %120 : vector<1x128xf32>
    %c3 = arith.constant 3 : index
    %c0_82 = arith.constant 0 : index
    %c0_83 = arith.constant 0 : index
    %122 = vector.load %arg3[%c3, %c0_82, %c0_83] : memref<10x64x16xf32, #tpu.memory_space<vmem>>, vector<1x64x16xf32>
    %123 = vector.shape_cast %122 : vector<1x64x16xf32> to vector<64x16xf32>
    %cst_84 = arith.constant dense<0.000000e+00> : vector<64x128xf32>
    %124 = tpu.matmul %123, %118, %cst_84 {dimension_numbers = #tpu.dot_dimension_numbers<[1], [0], [0], [1], [0, 0, 1, 1], [], []>} : vector<64x16xf32>, vector<16x128xf32>, vector<64x128xf32> -> vector<64x128xf32>
    %c3_85 = arith.constant 3 : index
    %c0_86 = arith.constant 0 : index
    %c0_87 = arith.constant 0 : index
    %125 = vector.load %arg4[%c3_85, %c0_86, %c0_87] : memref<10x64x1xf32, #tpu.memory_space<vmem>>, vector<1x64x1xf32>
    %126 = vector.shape_cast %125 : vector<1x64x1xf32> to vector<64x1xf32>
    %127 = vector.broadcast %126 : vector<64x1xf32> to vector<64x128xf32>
    %128 = arith.addf %124, %127 : vector<64x128xf32>
    %cst_88 = arith.constant 0.000000e+00 : f32
    %129 = vector.broadcast %cst_88 : f32 to vector<64x128xf32>
    %130 = arith.maximumf %128, %129 : vector<64x128xf32>
    %c3_89 = arith.constant 3 : index
    %c0_90 = arith.constant 0 : index
    %c0_91 = arith.constant 0 : index
    %131 = vector.load %arg5[%c3_89, %c0_90, %c0_91] : memref<10x64x64xf32, #tpu.memory_space<vmem>>, vector<1x64x64xf32>
    %132 = vector.shape_cast %131 : vector<1x64x64xf32> to vector<64x64xf32>
    %cst_92 = arith.constant dense<0.000000e+00> : vector<64x128xf32>
    %133 = tpu.matmul %132, %130, %cst_92 {dimension_numbers = #tpu.dot_dimension_numbers<[1], [0], [0], [1], [0, 0, 1, 1], [], []>} : vector<64x64xf32>, vector<64x128xf32>, vector<64x128xf32> -> vector<64x128xf32>
    %c3_93 = arith.constant 3 : index
    %c0_94 = arith.constant 0 : index
    %c0_95 = arith.constant 0 : index
    %134 = vector.load %arg6[%c3_93, %c0_94, %c0_95] : memref<10x64x1xf32, #tpu.memory_space<vmem>>, vector<1x64x1xf32>
    %135 = vector.shape_cast %134 : vector<1x64x1xf32> to vector<64x1xf32>
    %136 = vector.broadcast %135 : vector<64x1xf32> to vector<64x128xf32>
    %137 = arith.addf %133, %136 : vector<64x128xf32>
    %cst_96 = arith.constant 0.000000e+00 : f32
    %138 = vector.broadcast %cst_96 : f32 to vector<64x128xf32>
    %139 = arith.maximumf %137, %138 : vector<64x128xf32>
    %c3_97 = arith.constant 3 : index
    %c0_98 = arith.constant 0 : index
    %c0_99 = arith.constant 0 : index
    %140 = vector.load %arg7[%c3_97, %c0_98, %c0_99] : memref<10x32x64xf32, #tpu.memory_space<vmem>>, vector<1x32x64xf32>
    %141 = vector.shape_cast %140 : vector<1x32x64xf32> to vector<32x64xf32>
    %cst_100 = arith.constant dense<0.000000e+00> : vector<32x128xf32>
    %142 = tpu.matmul %141, %139, %cst_100 {dimension_numbers = #tpu.dot_dimension_numbers<[1], [0], [0], [1], [0, 0, 1, 1], [], []>} : vector<32x64xf32>, vector<64x128xf32>, vector<32x128xf32> -> vector<32x128xf32>
    %c3_101 = arith.constant 3 : index
    %c0_102 = arith.constant 0 : index
    %c0_103 = arith.constant 0 : index
    %143 = vector.load %arg8[%c3_101, %c0_102, %c0_103] : memref<10x32x1xf32, #tpu.memory_space<vmem>>, vector<1x32x1xf32>
    %144 = vector.shape_cast %143 : vector<1x32x1xf32> to vector<32x1xf32>
    %145 = vector.broadcast %144 : vector<32x1xf32> to vector<32x128xf32>
    %146 = arith.addf %142, %145 : vector<32x128xf32>
    %147 = vector.extract_strided_slice %146 {offsets = [0, 0], sizes = [16, 128], strides = [1, 1]} : vector<32x128xf32> to vector<16x128xf32>
    %148 = vector.extract_strided_slice %146 {offsets = [16, 0], sizes = [16, 128], strides = [1, 1]} : vector<32x128xf32> to vector<16x128xf32>
    %149 = math.tanh %147 : vector<16x128xf32>
    %c3_104 = arith.constant 3 : index
    %c0_105 = arith.constant 0 : index
    %c0_106 = arith.constant 0 : index
    %150 = vector.load %arg9[%c3_104, %c0_105, %c0_106] : memref<10x16x1xf32, #tpu.memory_space<vmem>>, vector<1x16x1xf32>
    %151 = vector.shape_cast %150 : vector<1x16x1xf32> to vector<16x1xf32>
    %152 = vector.broadcast %151 : vector<16x1xf32> to vector<16x128xf32>
    %153 = arith.mulf %149, %152 : vector<16x128xf32>
    %154 = math.exp %153 : vector<16x128xf32>
    %155 = arith.mulf %118, %154 : vector<16x128xf32>
    %156 = arith.addf %155, %148 : vector<16x128xf32>
    %cst_107 = arith.constant dense<0.000000e+00> : vector<128xf32>
    %157 = vector.multi_reduction <add>, %153, %cst_107 [0] : vector<16x128xf32> to vector<128xf32>
    %158 = vector.shape_cast %157 : vector<128xf32> to vector<1x128xf32>
    %159 = arith.addf %121, %158 : vector<1x128xf32>
    %c4 = arith.constant 4 : index
    %c0_108 = arith.constant 0 : index
    %c0_109 = arith.constant 0 : index
    %160 = vector.load %arg3[%c4, %c0_108, %c0_109] : memref<10x64x16xf32, #tpu.memory_space<vmem>>, vector<1x64x16xf32>
    %161 = vector.shape_cast %160 : vector<1x64x16xf32> to vector<64x16xf32>
    %cst_110 = arith.constant dense<0.000000e+00> : vector<64x128xf32>
    %162 = tpu.matmul %161, %156, %cst_110 {dimension_numbers = #tpu.dot_dimension_numbers<[1], [0], [0], [1], [0, 0, 1, 1], [], []>} : vector<64x16xf32>, vector<16x128xf32>, vector<64x128xf32> -> vector<64x128xf32>
    %c4_111 = arith.constant 4 : index
    %c0_112 = arith.constant 0 : index
    %c0_113 = arith.constant 0 : index
    %163 = vector.load %arg4[%c4_111, %c0_112, %c0_113] : memref<10x64x1xf32, #tpu.memory_space<vmem>>, vector<1x64x1xf32>
    %164 = vector.shape_cast %163 : vector<1x64x1xf32> to vector<64x1xf32>
    %165 = vector.broadcast %164 : vector<64x1xf32> to vector<64x128xf32>
    %166 = arith.addf %162, %165 : vector<64x128xf32>
    %cst_114 = arith.constant 0.000000e+00 : f32
    %167 = vector.broadcast %cst_114 : f32 to vector<64x128xf32>
    %168 = arith.maximumf %166, %167 : vector<64x128xf32>
    %c4_115 = arith.constant 4 : index
    %c0_116 = arith.constant 0 : index
    %c0_117 = arith.constant 0 : index
    %169 = vector.load %arg5[%c4_115, %c0_116, %c0_117] : memref<10x64x64xf32, #tpu.memory_space<vmem>>, vector<1x64x64xf32>
    %170 = vector.shape_cast %169 : vector<1x64x64xf32> to vector<64x64xf32>
    %cst_118 = arith.constant dense<0.000000e+00> : vector<64x128xf32>
    %171 = tpu.matmul %170, %168, %cst_118 {dimension_numbers = #tpu.dot_dimension_numbers<[1], [0], [0], [1], [0, 0, 1, 1], [], []>} : vector<64x64xf32>, vector<64x128xf32>, vector<64x128xf32> -> vector<64x128xf32>
    %c4_119 = arith.constant 4 : index
    %c0_120 = arith.constant 0 : index
    %c0_121 = arith.constant 0 : index
    %172 = vector.load %arg6[%c4_119, %c0_120, %c0_121] : memref<10x64x1xf32, #tpu.memory_space<vmem>>, vector<1x64x1xf32>
    %173 = vector.shape_cast %172 : vector<1x64x1xf32> to vector<64x1xf32>
    %174 = vector.broadcast %173 : vector<64x1xf32> to vector<64x128xf32>
    %175 = arith.addf %171, %174 : vector<64x128xf32>
    %cst_122 = arith.constant 0.000000e+00 : f32
    %176 = vector.broadcast %cst_122 : f32 to vector<64x128xf32>
    %177 = arith.maximumf %175, %176 : vector<64x128xf32>
    %c4_123 = arith.constant 4 : index
    %c0_124 = arith.constant 0 : index
    %c0_125 = arith.constant 0 : index
    %178 = vector.load %arg7[%c4_123, %c0_124, %c0_125] : memref<10x32x64xf32, #tpu.memory_space<vmem>>, vector<1x32x64xf32>
    %179 = vector.shape_cast %178 : vector<1x32x64xf32> to vector<32x64xf32>
    %cst_126 = arith.constant dense<0.000000e+00> : vector<32x128xf32>
    %180 = tpu.matmul %179, %177, %cst_126 {dimension_numbers = #tpu.dot_dimension_numbers<[1], [0], [0], [1], [0, 0, 1, 1], [], []>} : vector<32x64xf32>, vector<64x128xf32>, vector<32x128xf32> -> vector<32x128xf32>
    %c4_127 = arith.constant 4 : index
    %c0_128 = arith.constant 0 : index
    %c0_129 = arith.constant 0 : index
    %181 = vector.load %arg8[%c4_127, %c0_128, %c0_129] : memref<10x32x1xf32, #tpu.memory_space<vmem>>, vector<1x32x1xf32>
    %182 = vector.shape_cast %181 : vector<1x32x1xf32> to vector<32x1xf32>
    %183 = vector.broadcast %182 : vector<32x1xf32> to vector<32x128xf32>
    %184 = arith.addf %180, %183 : vector<32x128xf32>
    %185 = vector.extract_strided_slice %184 {offsets = [0, 0], sizes = [16, 128], strides = [1, 1]} : vector<32x128xf32> to vector<16x128xf32>
    %186 = vector.extract_strided_slice %184 {offsets = [16, 0], sizes = [16, 128], strides = [1, 1]} : vector<32x128xf32> to vector<16x128xf32>
    %187 = math.tanh %185 : vector<16x128xf32>
    %c4_130 = arith.constant 4 : index
    %c0_131 = arith.constant 0 : index
    %c0_132 = arith.constant 0 : index
    %188 = vector.load %arg9[%c4_130, %c0_131, %c0_132] : memref<10x16x1xf32, #tpu.memory_space<vmem>>, vector<1x16x1xf32>
    %189 = vector.shape_cast %188 : vector<1x16x1xf32> to vector<16x1xf32>
    %190 = vector.broadcast %189 : vector<16x1xf32> to vector<16x128xf32>
    %191 = arith.mulf %187, %190 : vector<16x128xf32>
    %192 = math.exp %191 : vector<16x128xf32>
    %193 = arith.mulf %156, %192 : vector<16x128xf32>
    %194 = arith.addf %193, %186 : vector<16x128xf32>
    %cst_133 = arith.constant dense<0.000000e+00> : vector<128xf32>
    %195 = vector.multi_reduction <add>, %191, %cst_133 [0] : vector<16x128xf32> to vector<128xf32>
    %196 = vector.shape_cast %195 : vector<128xf32> to vector<1x128xf32>
    %197 = arith.addf %159, %196 : vector<1x128xf32>
    %c5 = arith.constant 5 : index
    %c0_134 = arith.constant 0 : index
    %c0_135 = arith.constant 0 : index
    %198 = vector.load %arg3[%c5, %c0_134, %c0_135] : memref<10x64x16xf32, #tpu.memory_space<vmem>>, vector<1x64x16xf32>
    %199 = vector.shape_cast %198 : vector<1x64x16xf32> to vector<64x16xf32>
    %cst_136 = arith.constant dense<0.000000e+00> : vector<64x128xf32>
    %200 = tpu.matmul %199, %194, %cst_136 {dimension_numbers = #tpu.dot_dimension_numbers<[1], [0], [0], [1], [0, 0, 1, 1], [], []>} : vector<64x16xf32>, vector<16x128xf32>, vector<64x128xf32> -> vector<64x128xf32>
    %c5_137 = arith.constant 5 : index
    %c0_138 = arith.constant 0 : index
    %c0_139 = arith.constant 0 : index
    %201 = vector.load %arg4[%c5_137, %c0_138, %c0_139] : memref<10x64x1xf32, #tpu.memory_space<vmem>>, vector<1x64x1xf32>
    %202 = vector.shape_cast %201 : vector<1x64x1xf32> to vector<64x1xf32>
    %203 = vector.broadcast %202 : vector<64x1xf32> to vector<64x128xf32>
    %204 = arith.addf %200, %203 : vector<64x128xf32>
    %cst_140 = arith.constant 0.000000e+00 : f32
    %205 = vector.broadcast %cst_140 : f32 to vector<64x128xf32>
    %206 = arith.maximumf %204, %205 : vector<64x128xf32>
    %c5_141 = arith.constant 5 : index
    %c0_142 = arith.constant 0 : index
    %c0_143 = arith.constant 0 : index
    %207 = vector.load %arg5[%c5_141, %c0_142, %c0_143] : memref<10x64x64xf32, #tpu.memory_space<vmem>>, vector<1x64x64xf32>
    %208 = vector.shape_cast %207 : vector<1x64x64xf32> to vector<64x64xf32>
    %cst_144 = arith.constant dense<0.000000e+00> : vector<64x128xf32>
    %209 = tpu.matmul %208, %206, %cst_144 {dimension_numbers = #tpu.dot_dimension_numbers<[1], [0], [0], [1], [0, 0, 1, 1], [], []>} : vector<64x64xf32>, vector<64x128xf32>, vector<64x128xf32> -> vector<64x128xf32>
    %c5_145 = arith.constant 5 : index
    %c0_146 = arith.constant 0 : index
    %c0_147 = arith.constant 0 : index
    %210 = vector.load %arg6[%c5_145, %c0_146, %c0_147] : memref<10x64x1xf32, #tpu.memory_space<vmem>>, vector<1x64x1xf32>
    %211 = vector.shape_cast %210 : vector<1x64x1xf32> to vector<64x1xf32>
    %212 = vector.broadcast %211 : vector<64x1xf32> to vector<64x128xf32>
    %213 = arith.addf %209, %212 : vector<64x128xf32>
    %cst_148 = arith.constant 0.000000e+00 : f32
    %214 = vector.broadcast %cst_148 : f32 to vector<64x128xf32>
    %215 = arith.maximumf %213, %214 : vector<64x128xf32>
    %c5_149 = arith.constant 5 : index
    %c0_150 = arith.constant 0 : index
    %c0_151 = arith.constant 0 : index
    %216 = vector.load %arg7[%c5_149, %c0_150, %c0_151] : memref<10x32x64xf32, #tpu.memory_space<vmem>>, vector<1x32x64xf32>
    %217 = vector.shape_cast %216 : vector<1x32x64xf32> to vector<32x64xf32>
    %cst_152 = arith.constant dense<0.000000e+00> : vector<32x128xf32>
    %218 = tpu.matmul %217, %215, %cst_152 {dimension_numbers = #tpu.dot_dimension_numbers<[1], [0], [0], [1], [0, 0, 1, 1], [], []>} : vector<32x64xf32>, vector<64x128xf32>, vector<32x128xf32> -> vector<32x128xf32>
    %c5_153 = arith.constant 5 : index
    %c0_154 = arith.constant 0 : index
    %c0_155 = arith.constant 0 : index
    %219 = vector.load %arg8[%c5_153, %c0_154, %c0_155] : memref<10x32x1xf32, #tpu.memory_space<vmem>>, vector<1x32x1xf32>
    %220 = vector.shape_cast %219 : vector<1x32x1xf32> to vector<32x1xf32>
    %221 = vector.broadcast %220 : vector<32x1xf32> to vector<32x128xf32>
    %222 = arith.addf %218, %221 : vector<32x128xf32>
    %223 = vector.extract_strided_slice %222 {offsets = [0, 0], sizes = [16, 128], strides = [1, 1]} : vector<32x128xf32> to vector<16x128xf32>
    %224 = vector.extract_strided_slice %222 {offsets = [16, 0], sizes = [16, 128], strides = [1, 1]} : vector<32x128xf32> to vector<16x128xf32>
    %225 = math.tanh %223 : vector<16x128xf32>
    %c5_156 = arith.constant 5 : index
    %c0_157 = arith.constant 0 : index
    %c0_158 = arith.constant 0 : index
    %226 = vector.load %arg9[%c5_156, %c0_157, %c0_158] : memref<10x16x1xf32, #tpu.memory_space<vmem>>, vector<1x16x1xf32>
    %227 = vector.shape_cast %226 : vector<1x16x1xf32> to vector<16x1xf32>
    %228 = vector.broadcast %227 : vector<16x1xf32> to vector<16x128xf32>
    %229 = arith.mulf %225, %228 : vector<16x128xf32>
    %230 = math.exp %229 : vector<16x128xf32>
    %231 = arith.mulf %194, %230 : vector<16x128xf32>
    %232 = arith.addf %231, %224 : vector<16x128xf32>
    %cst_159 = arith.constant dense<0.000000e+00> : vector<128xf32>
    %233 = vector.multi_reduction <add>, %229, %cst_159 [0] : vector<16x128xf32> to vector<128xf32>
    %234 = vector.shape_cast %233 : vector<128xf32> to vector<1x128xf32>
    %235 = arith.addf %197, %234 : vector<1x128xf32>
    %c6 = arith.constant 6 : index
    %c0_160 = arith.constant 0 : index
    %c0_161 = arith.constant 0 : index
    %236 = vector.load %arg3[%c6, %c0_160, %c0_161] : memref<10x64x16xf32, #tpu.memory_space<vmem>>, vector<1x64x16xf32>
    %237 = vector.shape_cast %236 : vector<1x64x16xf32> to vector<64x16xf32>
    %cst_162 = arith.constant dense<0.000000e+00> : vector<64x128xf32>
    %238 = tpu.matmul %237, %232, %cst_162 {dimension_numbers = #tpu.dot_dimension_numbers<[1], [0], [0], [1], [0, 0, 1, 1], [], []>} : vector<64x16xf32>, vector<16x128xf32>, vector<64x128xf32> -> vector<64x128xf32>
    %c6_163 = arith.constant 6 : index
    %c0_164 = arith.constant 0 : index
    %c0_165 = arith.constant 0 : index
    %239 = vector.load %arg4[%c6_163, %c0_164, %c0_165] : memref<10x64x1xf32, #tpu.memory_space<vmem>>, vector<1x64x1xf32>
    %240 = vector.shape_cast %239 : vector<1x64x1xf32> to vector<64x1xf32>
    %241 = vector.broadcast %240 : vector<64x1xf32> to vector<64x128xf32>
    %242 = arith.addf %238, %241 : vector<64x128xf32>
    %cst_166 = arith.constant 0.000000e+00 : f32
    %243 = vector.broadcast %cst_166 : f32 to vector<64x128xf32>
    %244 = arith.maximumf %242, %243 : vector<64x128xf32>
    %c6_167 = arith.constant 6 : index
    %c0_168 = arith.constant 0 : index
    %c0_169 = arith.constant 0 : index
    %245 = vector.load %arg5[%c6_167, %c0_168, %c0_169] : memref<10x64x64xf32, #tpu.memory_space<vmem>>, vector<1x64x64xf32>
    %246 = vector.shape_cast %245 : vector<1x64x64xf32> to vector<64x64xf32>
    %cst_170 = arith.constant dense<0.000000e+00> : vector<64x128xf32>
    %247 = tpu.matmul %246, %244, %cst_170 {dimension_numbers = #tpu.dot_dimension_numbers<[1], [0], [0], [1], [0, 0, 1, 1], [], []>} : vector<64x64xf32>, vector<64x128xf32>, vector<64x128xf32> -> vector<64x128xf32>
    %c6_171 = arith.constant 6 : index
    %c0_172 = arith.constant 0 : index
    %c0_173 = arith.constant 0 : index
    %248 = vector.load %arg6[%c6_171, %c0_172, %c0_173] : memref<10x64x1xf32, #tpu.memory_space<vmem>>, vector<1x64x1xf32>
    %249 = vector.shape_cast %248 : vector<1x64x1xf32> to vector<64x1xf32>
    %250 = vector.broadcast %249 : vector<64x1xf32> to vector<64x128xf32>
    %251 = arith.addf %247, %250 : vector<64x128xf32>
    %cst_174 = arith.constant 0.000000e+00 : f32
    %252 = vector.broadcast %cst_174 : f32 to vector<64x128xf32>
    %253 = arith.maximumf %251, %252 : vector<64x128xf32>
    %c6_175 = arith.constant 6 : index
    %c0_176 = arith.constant 0 : index
    %c0_177 = arith.constant 0 : index
    %254 = vector.load %arg7[%c6_175, %c0_176, %c0_177] : memref<10x32x64xf32, #tpu.memory_space<vmem>>, vector<1x32x64xf32>
    %255 = vector.shape_cast %254 : vector<1x32x64xf32> to vector<32x64xf32>
    %cst_178 = arith.constant dense<0.000000e+00> : vector<32x128xf32>
    %256 = tpu.matmul %255, %253, %cst_178 {dimension_numbers = #tpu.dot_dimension_numbers<[1], [0], [0], [1], [0, 0, 1, 1], [], []>} : vector<32x64xf32>, vector<64x128xf32>, vector<32x128xf32> -> vector<32x128xf32>
    %c6_179 = arith.constant 6 : index
    %c0_180 = arith.constant 0 : index
    %c0_181 = arith.constant 0 : index
    %257 = vector.load %arg8[%c6_179, %c0_180, %c0_181] : memref<10x32x1xf32, #tpu.memory_space<vmem>>, vector<1x32x1xf32>
    %258 = vector.shape_cast %257 : vector<1x32x1xf32> to vector<32x1xf32>
    %259 = vector.broadcast %258 : vector<32x1xf32> to vector<32x128xf32>
    %260 = arith.addf %256, %259 : vector<32x128xf32>
    %261 = vector.extract_strided_slice %260 {offsets = [0, 0], sizes = [16, 128], strides = [1, 1]} : vector<32x128xf32> to vector<16x128xf32>
    %262 = vector.extract_strided_slice %260 {offsets = [16, 0], sizes = [16, 128], strides = [1, 1]} : vector<32x128xf32> to vector<16x128xf32>
    %263 = math.tanh %261 : vector<16x128xf32>
    %c6_182 = arith.constant 6 : index
    %c0_183 = arith.constant 0 : index
    %c0_184 = arith.constant 0 : index
    %264 = vector.load %arg9[%c6_182, %c0_183, %c0_184] : memref<10x16x1xf32, #tpu.memory_space<vmem>>, vector<1x16x1xf32>
    %265 = vector.shape_cast %264 : vector<1x16x1xf32> to vector<16x1xf32>
    %266 = vector.broadcast %265 : vector<16x1xf32> to vector<16x128xf32>
    %267 = arith.mulf %263, %266 : vector<16x128xf32>
    %268 = math.exp %267 : vector<16x128xf32>
    %269 = arith.mulf %232, %268 : vector<16x128xf32>
    %270 = arith.addf %269, %262 : vector<16x128xf32>
    %cst_185 = arith.constant dense<0.000000e+00> : vector<128xf32>
    %271 = vector.multi_reduction <add>, %267, %cst_185 [0] : vector<16x128xf32> to vector<128xf32>
    %272 = vector.shape_cast %271 : vector<128xf32> to vector<1x128xf32>
    %273 = arith.addf %235, %272 : vector<1x128xf32>
    %c7 = arith.constant 7 : index
    %c0_186 = arith.constant 0 : index
    %c0_187 = arith.constant 0 : index
    %274 = vector.load %arg3[%c7, %c0_186, %c0_187] : memref<10x64x16xf32, #tpu.memory_space<vmem>>, vector<1x64x16xf32>
    %275 = vector.shape_cast %274 : vector<1x64x16xf32> to vector<64x16xf32>
    %cst_188 = arith.constant dense<0.000000e+00> : vector<64x128xf32>
    %276 = tpu.matmul %275, %270, %cst_188 {dimension_numbers = #tpu.dot_dimension_numbers<[1], [0], [0], [1], [0, 0, 1, 1], [], []>} : vector<64x16xf32>, vector<16x128xf32>, vector<64x128xf32> -> vector<64x128xf32>
    %c7_189 = arith.constant 7 : index
    %c0_190 = arith.constant 0 : index
    %c0_191 = arith.constant 0 : index
    %277 = vector.load %arg4[%c7_189, %c0_190, %c0_191] : memref<10x64x1xf32, #tpu.memory_space<vmem>>, vector<1x64x1xf32>
    %278 = vector.shape_cast %277 : vector<1x64x1xf32> to vector<64x1xf32>
    %279 = vector.broadcast %278 : vector<64x1xf32> to vector<64x128xf32>
    %280 = arith.addf %276, %279 : vector<64x128xf32>
    %cst_192 = arith.constant 0.000000e+00 : f32
    %281 = vector.broadcast %cst_192 : f32 to vector<64x128xf32>
    %282 = arith.maximumf %280, %281 : vector<64x128xf32>
    %c7_193 = arith.constant 7 : index
    %c0_194 = arith.constant 0 : index
    %c0_195 = arith.constant 0 : index
    %283 = vector.load %arg5[%c7_193, %c0_194, %c0_195] : memref<10x64x64xf32, #tpu.memory_space<vmem>>, vector<1x64x64xf32>
    %284 = vector.shape_cast %283 : vector<1x64x64xf32> to vector<64x64xf32>
    %cst_196 = arith.constant dense<0.000000e+00> : vector<64x128xf32>
    %285 = tpu.matmul %284, %282, %cst_196 {dimension_numbers = #tpu.dot_dimension_numbers<[1], [0], [0], [1], [0, 0, 1, 1], [], []>} : vector<64x64xf32>, vector<64x128xf32>, vector<64x128xf32> -> vector<64x128xf32>
    %c7_197 = arith.constant 7 : index
    %c0_198 = arith.constant 0 : index
    %c0_199 = arith.constant 0 : index
    %286 = vector.load %arg6[%c7_197, %c0_198, %c0_199] : memref<10x64x1xf32, #tpu.memory_space<vmem>>, vector<1x64x1xf32>
    %287 = vector.shape_cast %286 : vector<1x64x1xf32> to vector<64x1xf32>
    %288 = vector.broadcast %287 : vector<64x1xf32> to vector<64x128xf32>
    %289 = arith.addf %285, %288 : vector<64x128xf32>
    %cst_200 = arith.constant 0.000000e+00 : f32
    %290 = vector.broadcast %cst_200 : f32 to vector<64x128xf32>
    %291 = arith.maximumf %289, %290 : vector<64x128xf32>
    %c7_201 = arith.constant 7 : index
    %c0_202 = arith.constant 0 : index
    %c0_203 = arith.constant 0 : index
    %292 = vector.load %arg7[%c7_201, %c0_202, %c0_203] : memref<10x32x64xf32, #tpu.memory_space<vmem>>, vector<1x32x64xf32>
    %293 = vector.shape_cast %292 : vector<1x32x64xf32> to vector<32x64xf32>
    %cst_204 = arith.constant dense<0.000000e+00> : vector<32x128xf32>
    %294 = tpu.matmul %293, %291, %cst_204 {dimension_numbers = #tpu.dot_dimension_numbers<[1], [0], [0], [1], [0, 0, 1, 1], [], []>} : vector<32x64xf32>, vector<64x128xf32>, vector<32x128xf32> -> vector<32x128xf32>
    %c7_205 = arith.constant 7 : index
    %c0_206 = arith.constant 0 : index
    %c0_207 = arith.constant 0 : index
    %295 = vector.load %arg8[%c7_205, %c0_206, %c0_207] : memref<10x32x1xf32, #tpu.memory_space<vmem>>, vector<1x32x1xf32>
    %296 = vector.shape_cast %295 : vector<1x32x1xf32> to vector<32x1xf32>
    %297 = vector.broadcast %296 : vector<32x1xf32> to vector<32x128xf32>
    %298 = arith.addf %294, %297 : vector<32x128xf32>
    %299 = vector.extract_strided_slice %298 {offsets = [0, 0], sizes = [16, 128], strides = [1, 1]} : vector<32x128xf32> to vector<16x128xf32>
    %300 = vector.extract_strided_slice %298 {offsets = [16, 0], sizes = [16, 128], strides = [1, 1]} : vector<32x128xf32> to vector<16x128xf32>
    %301 = math.tanh %299 : vector<16x128xf32>
    %c7_208 = arith.constant 7 : index
    %c0_209 = arith.constant 0 : index
    %c0_210 = arith.constant 0 : index
    %302 = vector.load %arg9[%c7_208, %c0_209, %c0_210] : memref<10x16x1xf32, #tpu.memory_space<vmem>>, vector<1x16x1xf32>
    %303 = vector.shape_cast %302 : vector<1x16x1xf32> to vector<16x1xf32>
    %304 = vector.broadcast %303 : vector<16x1xf32> to vector<16x128xf32>
    %305 = arith.mulf %301, %304 : vector<16x128xf32>
    %306 = math.exp %305 : vector<16x128xf32>
    %307 = arith.mulf %270, %306 : vector<16x128xf32>
    %308 = arith.addf %307, %300 : vector<16x128xf32>
    %cst_211 = arith.constant dense<0.000000e+00> : vector<128xf32>
    %309 = vector.multi_reduction <add>, %305, %cst_211 [0] : vector<16x128xf32> to vector<128xf32>
    %310 = vector.shape_cast %309 : vector<128xf32> to vector<1x128xf32>
    %311 = arith.addf %273, %310 : vector<1x128xf32>
    %c8 = arith.constant 8 : index
    %c0_212 = arith.constant 0 : index
    %c0_213 = arith.constant 0 : index
    %312 = vector.load %arg3[%c8, %c0_212, %c0_213] : memref<10x64x16xf32, #tpu.memory_space<vmem>>, vector<1x64x16xf32>
    %313 = vector.shape_cast %312 : vector<1x64x16xf32> to vector<64x16xf32>
    %cst_214 = arith.constant dense<0.000000e+00> : vector<64x128xf32>
    %314 = tpu.matmul %313, %308, %cst_214 {dimension_numbers = #tpu.dot_dimension_numbers<[1], [0], [0], [1], [0, 0, 1, 1], [], []>} : vector<64x16xf32>, vector<16x128xf32>, vector<64x128xf32> -> vector<64x128xf32>
    %c8_215 = arith.constant 8 : index
    %c0_216 = arith.constant 0 : index
    %c0_217 = arith.constant 0 : index
    %315 = vector.load %arg4[%c8_215, %c0_216, %c0_217] : memref<10x64x1xf32, #tpu.memory_space<vmem>>, vector<1x64x1xf32>
    %316 = vector.shape_cast %315 : vector<1x64x1xf32> to vector<64x1xf32>
    %317 = vector.broadcast %316 : vector<64x1xf32> to vector<64x128xf32>
    %318 = arith.addf %314, %317 : vector<64x128xf32>
    %cst_218 = arith.constant 0.000000e+00 : f32
    %319 = vector.broadcast %cst_218 : f32 to vector<64x128xf32>
    %320 = arith.maximumf %318, %319 : vector<64x128xf32>
    %c8_219 = arith.constant 8 : index
    %c0_220 = arith.constant 0 : index
    %c0_221 = arith.constant 0 : index
    %321 = vector.load %arg5[%c8_219, %c0_220, %c0_221] : memref<10x64x64xf32, #tpu.memory_space<vmem>>, vector<1x64x64xf32>
    %322 = vector.shape_cast %321 : vector<1x64x64xf32> to vector<64x64xf32>
    %cst_222 = arith.constant dense<0.000000e+00> : vector<64x128xf32>
    %323 = tpu.matmul %322, %320, %cst_222 {dimension_numbers = #tpu.dot_dimension_numbers<[1], [0], [0], [1], [0, 0, 1, 1], [], []>} : vector<64x64xf32>, vector<64x128xf32>, vector<64x128xf32> -> vector<64x128xf32>
    %c8_223 = arith.constant 8 : index
    %c0_224 = arith.constant 0 : index
    %c0_225 = arith.constant 0 : index
    %324 = vector.load %arg6[%c8_223, %c0_224, %c0_225] : memref<10x64x1xf32, #tpu.memory_space<vmem>>, vector<1x64x1xf32>
    %325 = vector.shape_cast %324 : vector<1x64x1xf32> to vector<64x1xf32>
    %326 = vector.broadcast %325 : vector<64x1xf32> to vector<64x128xf32>
    %327 = arith.addf %323, %326 : vector<64x128xf32>
    %cst_226 = arith.constant 0.000000e+00 : f32
    %328 = vector.broadcast %cst_226 : f32 to vector<64x128xf32>
    %329 = arith.maximumf %327, %328 : vector<64x128xf32>
    %c8_227 = arith.constant 8 : index
    %c0_228 = arith.constant 0 : index
    %c0_229 = arith.constant 0 : index
    %330 = vector.load %arg7[%c8_227, %c0_228, %c0_229] : memref<10x32x64xf32, #tpu.memory_space<vmem>>, vector<1x32x64xf32>
    %331 = vector.shape_cast %330 : vector<1x32x64xf32> to vector<32x64xf32>
    %cst_230 = arith.constant dense<0.000000e+00> : vector<32x128xf32>
    %332 = tpu.matmul %331, %329, %cst_230 {dimension_numbers = #tpu.dot_dimension_numbers<[1], [0], [0], [1], [0, 0, 1, 1], [], []>} : vector<32x64xf32>, vector<64x128xf32>, vector<32x128xf32> -> vector<32x128xf32>
    %c8_231 = arith.constant 8 : index
    %c0_232 = arith.constant 0 : index
    %c0_233 = arith.constant 0 : index
    %333 = vector.load %arg8[%c8_231, %c0_232, %c0_233] : memref<10x32x1xf32, #tpu.memory_space<vmem>>, vector<1x32x1xf32>
    %334 = vector.shape_cast %333 : vector<1x32x1xf32> to vector<32x1xf32>
    %335 = vector.broadcast %334 : vector<32x1xf32> to vector<32x128xf32>
    %336 = arith.addf %332, %335 : vector<32x128xf32>
    %337 = vector.extract_strided_slice %336 {offsets = [0, 0], sizes = [16, 128], strides = [1, 1]} : vector<32x128xf32> to vector<16x128xf32>
    %338 = vector.extract_strided_slice %336 {offsets = [16, 0], sizes = [16, 128], strides = [1, 1]} : vector<32x128xf32> to vector<16x128xf32>
    %339 = math.tanh %337 : vector<16x128xf32>
    %c8_234 = arith.constant 8 : index
    %c0_235 = arith.constant 0 : index
    %c0_236 = arith.constant 0 : index
    %340 = vector.load %arg9[%c8_234, %c0_235, %c0_236] : memref<10x16x1xf32, #tpu.memory_space<vmem>>, vector<1x16x1xf32>
    %341 = vector.shape_cast %340 : vector<1x16x1xf32> to vector<16x1xf32>
    %342 = vector.broadcast %341 : vector<16x1xf32> to vector<16x128xf32>
    %343 = arith.mulf %339, %342 : vector<16x128xf32>
    %344 = math.exp %343 : vector<16x128xf32>
    %345 = arith.mulf %308, %344 : vector<16x128xf32>
    %346 = arith.addf %345, %338 : vector<16x128xf32>
    %cst_237 = arith.constant dense<0.000000e+00> : vector<128xf32>
    %347 = vector.multi_reduction <add>, %343, %cst_237 [0] : vector<16x128xf32> to vector<128xf32>
    %348 = vector.shape_cast %347 : vector<128xf32> to vector<1x128xf32>
    %349 = arith.addf %311, %348 : vector<1x128xf32>
    %c9 = arith.constant 9 : index
    %c0_238 = arith.constant 0 : index
    %c0_239 = arith.constant 0 : index
    %350 = vector.load %arg3[%c9, %c0_238, %c0_239] : memref<10x64x16xf32, #tpu.memory_space<vmem>>, vector<1x64x16xf32>
    %351 = vector.shape_cast %350 : vector<1x64x16xf32> to vector<64x16xf32>
    %cst_240 = arith.constant dense<0.000000e+00> : vector<64x128xf32>
    %352 = tpu.matmul %351, %346, %cst_240 {dimension_numbers = #tpu.dot_dimension_numbers<[1], [0], [0], [1], [0, 0, 1, 1], [], []>} : vector<64x16xf32>, vector<16x128xf32>, vector<64x128xf32> -> vector<64x128xf32>
    %c9_241 = arith.constant 9 : index
    %c0_242 = arith.constant 0 : index
    %c0_243 = arith.constant 0 : index
    %353 = vector.load %arg4[%c9_241, %c0_242, %c0_243] : memref<10x64x1xf32, #tpu.memory_space<vmem>>, vector<1x64x1xf32>
    %354 = vector.shape_cast %353 : vector<1x64x1xf32> to vector<64x1xf32>
    %355 = vector.broadcast %354 : vector<64x1xf32> to vector<64x128xf32>
    %356 = arith.addf %352, %355 : vector<64x128xf32>
    %cst_244 = arith.constant 0.000000e+00 : f32
    %357 = vector.broadcast %cst_244 : f32 to vector<64x128xf32>
    %358 = arith.maximumf %356, %357 : vector<64x128xf32>
    %c9_245 = arith.constant 9 : index
    %c0_246 = arith.constant 0 : index
    %c0_247 = arith.constant 0 : index
    %359 = vector.load %arg5[%c9_245, %c0_246, %c0_247] : memref<10x64x64xf32, #tpu.memory_space<vmem>>, vector<1x64x64xf32>
    %360 = vector.shape_cast %359 : vector<1x64x64xf32> to vector<64x64xf32>
    %cst_248 = arith.constant dense<0.000000e+00> : vector<64x128xf32>
    %361 = tpu.matmul %360, %358, %cst_248 {dimension_numbers = #tpu.dot_dimension_numbers<[1], [0], [0], [1], [0, 0, 1, 1], [], []>} : vector<64x64xf32>, vector<64x128xf32>, vector<64x128xf32> -> vector<64x128xf32>
    %c9_249 = arith.constant 9 : index
    %c0_250 = arith.constant 0 : index
    %c0_251 = arith.constant 0 : index
    %362 = vector.load %arg6[%c9_249, %c0_250, %c0_251] : memref<10x64x1xf32, #tpu.memory_space<vmem>>, vector<1x64x1xf32>
    %363 = vector.shape_cast %362 : vector<1x64x1xf32> to vector<64x1xf32>
    %364 = vector.broadcast %363 : vector<64x1xf32> to vector<64x128xf32>
    %365 = arith.addf %361, %364 : vector<64x128xf32>
    %cst_252 = arith.constant 0.000000e+00 : f32
    %366 = vector.broadcast %cst_252 : f32 to vector<64x128xf32>
    %367 = arith.maximumf %365, %366 : vector<64x128xf32>
    %c9_253 = arith.constant 9 : index
    %c0_254 = arith.constant 0 : index
    %c0_255 = arith.constant 0 : index
    %368 = vector.load %arg7[%c9_253, %c0_254, %c0_255] : memref<10x32x64xf32, #tpu.memory_space<vmem>>, vector<1x32x64xf32>
    %369 = vector.shape_cast %368 : vector<1x32x64xf32> to vector<32x64xf32>
    %cst_256 = arith.constant dense<0.000000e+00> : vector<32x128xf32>
    %370 = tpu.matmul %369, %367, %cst_256 {dimension_numbers = #tpu.dot_dimension_numbers<[1], [0], [0], [1], [0, 0, 1, 1], [], []>} : vector<32x64xf32>, vector<64x128xf32>, vector<32x128xf32> -> vector<32x128xf32>
    %c9_257 = arith.constant 9 : index
    %c0_258 = arith.constant 0 : index
    %c0_259 = arith.constant 0 : index
    %371 = vector.load %arg8[%c9_257, %c0_258, %c0_259] : memref<10x32x1xf32, #tpu.memory_space<vmem>>, vector<1x32x1xf32>
    %372 = vector.shape_cast %371 : vector<1x32x1xf32> to vector<32x1xf32>
    %373 = vector.broadcast %372 : vector<32x1xf32> to vector<32x128xf32>
    %374 = arith.addf %370, %373 : vector<32x128xf32>
    %375 = vector.extract_strided_slice %374 {offsets = [0, 0], sizes = [16, 128], strides = [1, 1]} : vector<32x128xf32> to vector<16x128xf32>
    %376 = vector.extract_strided_slice %374 {offsets = [16, 0], sizes = [16, 128], strides = [1, 1]} : vector<32x128xf32> to vector<16x128xf32>
    %377 = math.tanh %375 : vector<16x128xf32>
    %c9_260 = arith.constant 9 : index
    %c0_261 = arith.constant 0 : index
    %c0_262 = arith.constant 0 : index
    %378 = vector.load %arg9[%c9_260, %c0_261, %c0_262] : memref<10x16x1xf32, #tpu.memory_space<vmem>>, vector<1x16x1xf32>
    %379 = vector.shape_cast %378 : vector<1x16x1xf32> to vector<16x1xf32>
    %380 = vector.broadcast %379 : vector<16x1xf32> to vector<16x128xf32>
    %381 = arith.mulf %377, %380 : vector<16x128xf32>
    %382 = math.exp %381 : vector<16x128xf32>
    %383 = arith.mulf %346, %382 : vector<16x128xf32>
    %384 = arith.addf %383, %376 : vector<16x128xf32>
    %cst_263 = arith.constant dense<0.000000e+00> : vector<128xf32>
    %385 = vector.multi_reduction <add>, %381, %cst_263 [0] : vector<16x128xf32> to vector<128xf32>
    %386 = vector.shape_cast %385 : vector<128xf32> to vector<1x128xf32>
    %387 = arith.addf %349, %386 : vector<1x128xf32>
    %388 = tpu.iota {dimensions = array<i32: 0>} : vector<128x128xi32>
    %389 = tpu.iota {dimensions = array<i32: 1>} : vector<128x128xi32>
    %390 = arith.cmpi eq, %388, %389 : vector<128x128xi32>
    %391 = arith.extui %390 : vector<128x128xi1> to vector<128x128xi32>
    %392 = arith.sitofp %391 : vector<128x128xi32> to vector<128x128xf32>
    %cst_264 = arith.constant dense<0.000000e+00> : vector<128x16xf32>
    %393 = tpu.matmul %392, %384, %cst_264 {dimension_numbers = #tpu.dot_dimension_numbers<[1], [1], [0], [0], [0, 0, 1, 0], [], []>} : vector<128x128xf32>, vector<16x128xf32>, vector<128x16xf32> -> vector<128x16xf32>
    %c0_265 = arith.constant 0 : index
    %c0_266 = arith.constant 0 : index
    %394 = vector.load %arg10[%c0_265, %c0_266] : memref<128x16xf32, #tpu.memory_space<vmem>>, vector<128x16xf32>
    tpu.vector_store %arg10[%c0_265, %c0_266], %393 {strides = array<i32>} : memref<128x16xf32, #tpu.memory_space<vmem>>, vector<128x16xf32>,
    %c0_267 = arith.constant 0 : index
    %c0_268 = arith.constant 0 : index
    %395 = vector.load %arg11[%c0_267, %c0_268] : memref<1x128xf32, #tpu.memory_space<vmem>>, vector<1x128xf32>
    tpu.vector_store %arg11[%c0_267, %c0_268], %387 {strides = array<i32>} : memref<1x128xf32, #tpu.memory_space<vmem>>, vector<1x128xf32>,
    return
  }
  func.func @transform_0(%arg0: i32) -> (i32, i32) {
    %c0_i32 = arith.constant 0 : i32
    %c0_i32_0 = arith.constant 0 : i32
    return %arg0, %c0_i32 : i32, i32
  }
  func.func @transform_1(%arg0: i32) -> (i32, i32) {
    %c0_i32 = arith.constant 0 : i32
    %c0_i32_0 = arith.constant 0 : i32
    return %c0_i32, %arg0 : i32, i32
  }
  func.func @transform_2(%arg0: i32) -> (i32, i32, i32) {
    %c0_i32 = arith.constant 0 : i32
    %c0_i32_0 = arith.constant 0 : i32
    %c0_i32_1 = arith.constant 0 : i32
    %c0_i32_2 = arith.constant 0 : i32
    return %c0_i32, %c0_i32_0, %c0_i32_1 : i32, i32, i32
  }
  func.func @transform_3(%arg0: i32) -> (i32, i32, i32) {
    %c0_i32 = arith.constant 0 : i32
    %c0_i32_0 = arith.constant 0 : i32
    %c0_i32_1 = arith.constant 0 : i32
    %c0_i32_2 = arith.constant 0 : i32
    return %c0_i32, %c0_i32_0, %c0_i32_1 : i32, i32, i32
  }
  func.func @transform_4(%arg0: i32) -> (i32, i32, i32) {
    %c0_i32 = arith.constant 0 : i32
    %c0_i32_0 = arith.constant 0 : i32
    %c0_i32_1 = arith.constant 0 : i32
    %c0_i32_2 = arith.constant 0 : i32
    return %c0_i32, %c0_i32_0, %c0_i32_1 : i32, i32, i32
  }
  func.func @transform_5(%arg0: i32) -> (i32, i32, i32) {
    %c0_i32 = arith.constant 0 : i32
    %c0_i32_0 = arith.constant 0 : i32
    %c0_i32_1 = arith.constant 0 : i32
    %c0_i32_2 = arith.constant 0 : i32
    return %c0_i32, %c0_i32_0, %c0_i32_1 : i32, i32, i32
  }
  func.func @transform_6(%arg0: i32) -> (i32, i32, i32) {
    %c0_i32 = arith.constant 0 : i32
    %c0_i32_0 = arith.constant 0 : i32
    %c0_i32_1 = arith.constant 0 : i32
    %c0_i32_2 = arith.constant 0 : i32
    return %c0_i32, %c0_i32_0, %c0_i32_1 : i32, i32, i32
  }
  func.func @transform_7(%arg0: i32) -> (i32, i32, i32) {
    %c0_i32 = arith.constant 0 : i32
    %c0_i32_0 = arith.constant 0 : i32
    %c0_i32_1 = arith.constant 0 : i32
    %c0_i32_2 = arith.constant 0 : i32
    return %c0_i32, %c0_i32_0, %c0_i32_1 : i32, i32, i32
  }
  func.func @transform_8(%arg0: i32) -> (i32, i32, i32) {
    %c0_i32 = arith.constant 0 : i32
    %c0_i32_0 = arith.constant 0 : i32
    %c0_i32_1 = arith.constant 0 : i32
    %c0_i32_2 = arith.constant 0 : i32
    return %c0_i32, %c0_i32_0, %c0_i32_1 : i32, i32, i32
  }
  func.func @transform_9(%arg0: i32) -> (i32, i32) {
    %c0_i32 = arith.constant 0 : i32
    %c0_i32_0 = arith.constant 0 : i32
    return %arg0, %c0_i32 : i32, i32
  }
  func.func @transform_10(%arg0: i32) -> (i32, i32) {
    %c0_i32 = arith.constant 0 : i32
    %c0_i32_0 = arith.constant 0 : i32
    return %c0_i32, %arg0 : i32, i32
  }
}

</mosaic_0001>

<llo_original>
// kernel: realnvp_forward.1
$region0: #{realnvp_forward.1}
  #allocation0 [shape = 'u32[]', space=smem, size = 0x4, offset = 0x4, fixed_abs, tag = 'smem constant byte address 0x4 - core index']
  #allocation1 [shape = 'u32[72,128]{1,0:T(1,128)}', space=vmem, size = 0x9000, scoped, tag = 'internal scratch']
  %s0 = inlined_call_operand.vmem [shape: f32[128,16], index: 0, kind: input, shape index: {}]
  %s1 = inlined_call_operand.vmem [shape: f32[1,128], index: 1, kind: input, shape index: {}]
  %s2 = inlined_call_operand.vmem [shape: f32[10,64,16], index: 2, kind: input, shape index: {}]
  %s3 = inlined_call_operand.vmem [shape: f32[10,64,1], index: 3, kind: input, shape index: {}]
  %s4 = inlined_call_operand.vmem [shape: f32[10,64,64], index: 4, kind: input, shape index: {}]
  %s5 = inlined_call_operand.vmem [shape: f32[10,64,1], index: 5, kind: input, shape index: {}]
  %s6 = inlined_call_operand.vmem [shape: f32[10,32,64], index: 6, kind: input, shape index: {}]
  %s7 = inlined_call_operand.vmem [shape: f32[10,32,1], index: 7, kind: input, shape index: {}]
  %s8 = inlined_call_operand.vmem [shape: f32[10,16,1], index: 8, kind: input, shape index: {}]
  %s9 = inlined_call_operand.vmem [shape: f32[128,16], index: 9, kind: output, shape index: {0}]
  %s10 = inlined_call_operand.vmem [shape: f32[1,128], index: 10, kind: output, shape index: {1}]
  %11 = xla_tuple %s9, %s10
  %s12 = sld [smem:[#allocation0]]
  $region54: #{realnvp_forward.1} parent=0
    _
  %s14 = ssub.s32 1, %s12
  %s15 = scalar_select 0, %s14, %s12
  // Predicated region
  $region2: #{realnvp_forward.1} parent=0 // pred_check
    _
  $region3: #{realnvp_forward.1} parent=0 // pred_check_branch
    %17 = sbr.rel (0) target = $region5
  $region4: #{realnvp_forward.1} parent=0 // pred_region
    _
  $region5: #{realnvp_forward.1} parent=0 // pred_fallthru
    _
  // Predicated region
  $region6: #{realnvp_forward.1} parent=0 // pred_check
    _
  $region7: #{realnvp_forward.1} parent=0 // pred_check_branch
    %19 = sbr.rel (0) target = $region9
  $region8: #{realnvp_forward.1} parent=0 // pred_region
    _
  $region9: #{realnvp_forward.1} parent=0 // pred_fallthru
    _
  // Predicated region
  $region10: #{realnvp_forward.1} parent=0 // pred_check
    _
  $region11: #{realnvp_forward.1} parent=0 // pred_check_branch
    %21 = sbr.rel (0) target = $region13
  $region12: #{realnvp_forward.1} parent=0 // pred_region
    _
  $region13: #{realnvp_forward.1} parent=0 // pred_fallthru
    _
  // Predicated region
  $region14: #{realnvp_forward.1} parent=0 // pred_check
    _
  $region15: #{realnvp_forward.1} parent=0 // pred_check_branch
    %23 = sbr.rel (0) target = $region17
  $region16: #{realnvp_forward.1} parent=0 // pred_region
    _
  $region17: #{realnvp_forward.1} parent=0 // pred_fallthru
    _
  // Predicated region
  $region18: #{realnvp_forward.1} parent=0 // pred_check
    _
  $region19: #{realnvp_forward.1} parent=0 // pred_check_branch
    %25 = sbr.rel (0) target = $region21
  $region20: #{realnvp_forward.1} parent=0 // pred_region
    _
  $region21: #{realnvp_forward.1} parent=0 // pred_fallthru
    _
  // Predicated region
  $region22: #{realnvp_forward.1} parent=0 // pred_check
    _
  $region23: #{realnvp_forward.1} parent=0 // pred_check_branch
    %27 = sbr.rel (0) target = $region25
  $region24: #{realnvp_forward.1} parent=0 // pred_region
    _
  $region25: #{realnvp_forward.1} parent=0 // pred_fallthru
    _
  // Predicated region
  $region26: #{realnvp_forward.1} parent=0 // pred_check
    _
  $region27: #{realnvp_forward.1} parent=0 // pred_check_branch
    %29 = sbr.rel (0) target = $region29
  $region28: #{realnvp_forward.1} parent=0 // pred_region
    _
  $region29: #{realnvp_forward.1} parent=0 // pred_fallthru
    _
  // Predicated region
  $region30: #{realnvp_forward.1} parent=0 // pred_check
    _
  $region31: #{realnvp_forward.1} parent=0 // pred_check_branch
    %31 = sbr.rel (0) target = $region33
  $region32: #{realnvp_forward.1} parent=0 // pred_region
    _
  $region33: #{realnvp_forward.1} parent=0 // pred_fallthru
    _
  // Predicated region
  $region34: #{realnvp_forward.1} parent=0 // pred_check
    _
  $region35: #{realnvp_forward.1} parent=0 // pred_check_branch
    %33 = sbr.rel (0) target = $region37
  $region36: #{realnvp_forward.1} parent=0 // pred_region
    _
  $region37: #{realnvp_forward.1} parent=0 // pred_fallthru
    _
  %v34 = vld [vmem:[%s0] sm:$0xff]
  %v35 = vld [vmem:[%s0 + $0x8] sm:$0xff]
  %v36 = vld [vmem:[%s0 + $0x10] sm:$0xff]
  %v37 = vld [vmem:[%s0 + $0x18] sm:$0xff]
  %v38 = vld [vmem:[%s0 + $0x20] sm:$0xff]
  %v39 = vld [vmem:[%s0 + $0x28] sm:$0xff]
  %v40 = vld [vmem:[%s0 + $0x30] sm:$0xff]
  %v41 = vld [vmem:[%s0 + $0x38] sm:$0xff]
  %v42 = vld [vmem:[%s0 + $0x40] sm:$0xff]
  %v43 = vld [vmem:[%s0 + $0x48] sm:$0xff]
  %v44 = vld [vmem:[%s0 + $0x50] sm:$0xff]
  %v45 = vld [vmem:[%s0 + $0x58] sm:$0xff]
  %v46 = vld [vmem:[%s0 + $0x60] sm:$0xff]
  %v47 = vld [vmem:[%s0 + $0x68] sm:$0xff]
  %v48 = vld [vmem:[%s0 + $0x70] sm:$0xff]
  %v49 = vld [vmem:[%s0 + $0x78] sm:$0xff]
  %v50 = vlaneseq
  %v51 = vshrl.u32 %v50, 7
  %v52 = vadd.s32 %v51, 8
  %v53 = vlaneseq
  %v54 = vand.u32 %v53, 127
  %vm55 = vcmp.eq.s32.totalorder %v51, %v54
  %vm56 = vcmp.eq.s32.totalorder %v52, %v54
  %v57 = vsel %vm55, 1, 0
  %v58 = vsel %vm56, 1, 0
  %v59 = vcvt.s32.f32 %v57
  %v60 = vcvt.s32.f32 %v58
  %vm61 = vcmask 130048
  %v63 = vsel %vm61, %v59, 0
  %v66 = vsel %vm61, %v60, 0
  %v69 = vsel %vm61, %v34, 0
  %v72 = vsel %vm61, %v35, 0
  %v75 = vsel %vm61, %v36, 0
  %v78 = vsel %vm61, %v37, 0
  %v81 = vsel %vm61, %v38, 0
  %v84 = vsel %vm61, %v39, 0
  %v87 = vsel %vm61, %v40, 0
  %v90 = vsel %vm61, %v41, 0
  %v93 = vsel %vm61, %v42, 0
  %v96 = vsel %vm61, %v43, 0
  %v99 = vsel %vm61, %v44, 0
  %v102 = vsel %vm61, %v45, 0
  %v105 = vsel %vm61, %v46, 0
  %v108 = vsel %vm61, %v47, 0
  %v111 = vsel %vm61, %v48, 0
  %v114 = vsel %vm61, %v49, 0
  %116 = vmatpush.xpose.msra.mxu0 %v114
  %117 = vmatpush.xpose.msra.mxu0 %v111
  %118 = vmatpush.xpose.msra.mxu0 %v108
  %119 = vmatpush.xpose.msra.mxu0 %v105
  %120 = vmatpush.xpose.msra.mxu0 %v102
  %121 = vmatpush.xpose.msra.mxu0 %v99
  %122 = vmatpush.xpose.msra.mxu0 %v96
  %123 = vmatpush.xpose.msra.mxu0 %v93
  %124 = vmatpush.xpose.msra.mxu0 %v90
  %125 = vmatpush.xpose.msra.mxu0 %v87
  %126 = vmatpush.xpose.msra.mxu0 %v84
  %127 = vmatpush.xpose.msra.mxu0 %v81
  %128 = vmatpush.xpose.msra.mxu0 %v78
  %129 = vmatpush.xpose.msra.mxu0 %v75
  %130 = vmatpush.xpose.msra.mxu0 %v72
  %131 = vmatpush.xpose.msra.mxu0 %v69
  %132 = vmatmul.f32.gmra.mxu0 %v63
  %v133 = vpop.f32.mrf.mxu0
  %v134 = vadd.f32 0.0, %v133
  %135 = vmatmul.f32.gmra.mxu0 %v66
  %v136 = vpop.f32.mrf.mxu0
  %v137 = vadd.f32 0.0, %v136
  %138 = vdwg.mxu0
  %v139 = vld [vmem:[%s1] sm:$0x1]
  %v140 = vld [vmem:[%s2] sm:$0xff]
  %v141 = vld [vmem:[%s2 + $0x8] sm:$0xff]
  %v142 = vld [vmem:[%s2 + $0x10] sm:$0xff]
  %v143 = vld [vmem:[%s2 + $0x18] sm:$0xff]
  %v144 = vld [vmem:[%s2 + $0x20] sm:$0xff]
  %v145 = vld [vmem:[%s2 + $0x28] sm:$0xff]
  %v146 = vld [vmem:[%s2 + $0x30] sm:$0xff]
  %v147 = vld [vmem:[%s2 + $0x38] sm:$0xff]
  %v148 = vld [vmem:[%s3] sm:$0xff]
  %v149 = vld [vmem:[%s3 + $0x8] sm:$0xff]
  %v150 = vld [vmem:[%s3 + $0x10] sm:$0xff]
  %v151 = vld [vmem:[%s3 + $0x18] sm:$0xff]
  %v152 = vld [vmem:[%s3 + $0x20] sm:$0xff]
  %v153 = vld [vmem:[%s3 + $0x28] sm:$0xff]
  %v154 = vld [vmem:[%s3 + $0x30] sm:$0xff]
  %v155 = vld [vmem:[%s3 + $0x38] sm:$0xff]
  %157 = vset.pattern.permute.xlu0 0
  %158 = vperm.xlu0 %157, %v148
  %v159 = vpop.permute.xlu0 %158
  %162 = vset.pattern.permute.xlu0 0
  %163 = vperm.xlu0 %162, %v149
  %v164 = vpop.permute.xlu0 %163
  %167 = vset.pattern.permute.xlu0 0
  %168 = vperm.xlu0 %167, %v150
  %v169 = vpop.permute.xlu0 %168
  %172 = vset.pattern.permute.xlu0 0
  %173 = vperm.xlu0 %172, %v151
  %v174 = vpop.permute.xlu0 %173
  %177 = vset.pattern.permute.xlu0 0
  %178 = vperm.xlu0 %177, %v152
  %v179 = vpop.permute.xlu0 %178
  %182 = vset.pattern.permute.xlu0 0
  %183 = vperm.xlu0 %182, %v153
  %v184 = vpop.permute.xlu0 %183
  %187 = vset.pattern.permute.xlu0 0
  %188 = vperm.xlu0 %187, %v154
  %v189 = vpop.permute.xlu0 %188
  %192 = vset.pattern.permute.xlu0 0
  %193 = vperm.xlu0 %192, %v155
  %v194 = vpop.permute.xlu0 %193
  %v197 = vsel %vm61, %v140, 0
  %v200 = vsel %vm61, %v141, 0
  %v203 = vsel %vm61, %v142, 0
  %v206 = vsel %vm61, %v143, 0
  %v209 = vsel %vm61, %v144, 0
  %v212 = vsel %vm61, %v145, 0
  %v215 = vsel %vm61, %v146, 0
  %v218 = vsel %vm61, %v147, 0
  %220 = vmatpush.msra.mxu0 0.0
  %221 = vmatpush.msra.mxu0 0.0
  %222 = vmatpush.msra.mxu0 0.0
  %223 = vmatpush.msra.mxu0 0.0
  %224 = vmatpush.msra.mxu0 0.0
  %225 = vmatpush.msra.mxu0 0.0
  %226 = vmatpush.msra.mxu0 0.0
  %227 = vmatpush.msra.mxu0 0.0
  %228 = vmatpush.msra.mxu0 0.0
  %229 = vmatpush.msra.mxu0 0.0
  %230 = vmatpush.msra.mxu0 0.0
  %231 = vmatpush.msra.mxu0 0.0
  %232 = vmatpush.msra.mxu0 0.0
  %233 = vmatpush.msra.mxu0 0.0
  %234 = vmatpush.msra.mxu0 %v137
  %235 = vmatpush.msra.mxu0 %v134
  %236 = vmatmul.f32.gmra.mxu0 %v197
  %v237 = vpop.f32.mrf.mxu0
  %v238 = vadd.f32 %v159, %v237
  %239 = vmatmul.f32.gmra.mxu0 %v200
  %v240 = vpop.f32.mrf.mxu0
  %v241 = vadd.f32 %v164, %v240
  %242 = vmatmul.f32.gmra.mxu0 %v203
  %v243 = vpop.f32.mrf.mxu0
  %v244 = vadd.f32 %v169, %v243
  %245 = vmatmul.f32.gmra.mxu0 %v206
  %v246 = vpop.f32.mrf.mxu0
  %v247 = vadd.f32 %v174, %v246
  %248 = vmatmul.f32.gmra.mxu0 %v209
  %v249 = vpop.f32.mrf.mxu0
  %v250 = vadd.f32 %v179, %v249
  %251 = vmatmul.f32.gmra.mxu0 %v212
  %v252 = vpop.f32.mrf.mxu0
  %v253 = vadd.f32 %v184, %v252
  %254 = vmatmul.f32.gmra.mxu0 %v215
  %v255 = vpop.f32.mrf.mxu0
  %v256 = vadd.f32 %v189, %v255
  %257 = vmatmul.f32.gmra.mxu0 %v218
  %v258 = vpop.f32.mrf.mxu0
  %v259 = vadd.f32 %v194, %v258
  %260 = vdwg.mxu0
  %v261 = vmax.f32 %v238, 0.0
  %v262 = vmax.f32 %v241, 0.0
  %v263 = vmax.f32 %v244, 0.0
  %v264 = vmax.f32 %v247, 0.0
  %v265 = vmax.f32 %v250, 0.0
  %v266 = vmax.f32 %v253, 0.0
  %v267 = vmax.f32 %v256, 0.0
  %v268 = vmax.f32 %v259, 0.0
  %v269 = vld [vmem:[%s4] sm:$0xff]
  %v270 = vld [vmem:[%s4 + $0x8] sm:$0xff]
  %v271 = vld [vmem:[%s4 + $0x10] sm:$0xff]
  %v272 = vld [vmem:[%s4 + $0x18] sm:$0xff]
  %v273 = vld [vmem:[%s4 + $0x20] sm:$0xff]
  %v274 = vld [vmem:[%s4 + $0x28] sm:$0xff]
  %v275 = vld [vmem:[%s4 + $0x30] sm:$0xff]
  %v276 = vld [vmem:[%s4 + $0x38] sm:$0xff]
  %v277 = vld [vmem:[%s5] sm:$0xff]
  %v278 = vld [vmem:[%s5 + $0x8] sm:$0xff]
  %v279 = vld [vmem:[%s5 + $0x10] sm:$0xff]
  %v280 = vld [vmem:[%s5 + $0x18] sm:$0xff]
  %v281 = vld [vmem:[%s5 + $0x20] sm:$0xff]
  %v282 = vld [vmem:[%s5 + $0x28] sm:$0xff]
  %v283 = vld [vmem:[%s5 + $0x30] sm:$0xff]
  %v284 = vld [vmem:[%s5 + $0x38] sm:$0xff]
  %286 = vset.pattern.permute.xlu0 0
  %287 = vperm.xlu0 %286, %v277
  %v288 = vpop.permute.xlu0 %287
  %291 = vset.pattern.permute.xlu0 0
  %292 = vperm.xlu0 %291, %v278
  %v293 = vpop.permute.xlu0 %292
  %296 = vset.pattern.permute.xlu0 0
  %297 = vperm.xlu0 %296, %v279
  %v298 = vpop.permute.xlu0 %297
  %301 = vset.pattern.permute.xlu0 0
  %302 = vperm.xlu0 %301, %v280
  %v303 = vpop.permute.xlu0 %302
  %306 = vset.pattern.permute.xlu0 0
  %307 = vperm.xlu0 %306, %v281
  %v308 = vpop.permute.xlu0 %307
  %311 = vset.pattern.permute.xlu0 0
  %312 = vperm.xlu0 %311, %v282
  %v313 = vpop.permute.xlu0 %312
  %316 = vset.pattern.permute.xlu0 0
  %317 = vperm.xlu0 %316, %v283
  %v318 = vpop.permute.xlu0 %317
  %321 = vset.pattern.permute.xlu0 0
  %322 = vperm.xlu0 %321, %v284
  %v323 = vpop.permute.xlu0 %322
  %vm325 = vcmask 523264
  %v327 = vsel %vm325, %v269, 0
  %v330 = vsel %vm325, %v270, 0
  %v333 = vsel %vm325, %v271, 0
  %v336 = vsel %vm325, %v272, 0
  %v339 = vsel %vm325, %v273, 0
  %v342 = vsel %vm325, %v274, 0
  %v345 = vsel %vm325, %v275, 0
  %v348 = vsel %vm325, %v276, 0
  %350 = vmatpush.msra.mxu0 0.0
  %351 = vmatpush.msra.mxu0 0.0
  %352 = vmatpush.msra.mxu0 0.0
  %353 = vmatpush.msra.mxu0 0.0
  %354 = vmatpush.msra.mxu0 0.0
  %355 = vmatpush.msra.mxu0 0.0
  %356 = vmatpush.msra.mxu0 0.0
  %357 = vmatpush.msra.mxu0 0.0
  %358 = vmatpush.msra.mxu0 %v268
  %359 = vmatpush.msra.mxu0 %v267
  %360 = vmatpush.msra.mxu0 %v266
  %361 = vmatpush.msra.mxu0 %v265
  %362 = vmatpush.msra.mxu0 %v264
  %363 = vmatpush.msra.mxu0 %v263
  %364 = vmatpush.msra.mxu0 %v262
  %365 = vmatpush.msra.mxu0 %v261
  %366 = vmatmul.f32.gmra.mxu0 %v327
  %v367 = vpop.f32.mrf.mxu0
  %v368 = vadd.f32 %v288, %v367
  %369 = vmatmul.f32.gmra.mxu0 %v330
  %v370 = vpop.f32.mrf.mxu0
  %v371 = vadd.f32 %v293, %v370
  %372 = vmatmul.f32.gmra.mxu0 %v333
  %v373 = vpop.f32.mrf.mxu0
  %v374 = vadd.f32 %v298, %v373
  %375 = vmatmul.f32.gmra.mxu0 %v336
  %v376 = vpop.f32.mrf.mxu0
  %v377 = vadd.f32 %v303, %v376
  %378 = vmatmul.f32.gmra.mxu0 %v339
  %v379 = vpop.f32.mrf.mxu0
  %v380 = vadd.f32 %v308, %v379
  %381 = vmatmul.f32.gmra.mxu0 %v342
  %v382 = vpop.f32.mrf.mxu0
  %v383 = vadd.f32 %v313, %v382
  %384 = vmatmul.f32.gmra.mxu0 %v345
  %v385 = vpop.f32.mrf.mxu0
  %v386 = vadd.f32 %v318, %v385
  %387 = vmatmul.f32.gmra.mxu0 %v348
  %v388 = vpop.f32.mrf.mxu0
  %v389 = vadd.f32 %v323, %v388
  %390 = vdwg.mxu0
  %v391 = vmax.f32 %v368, 0.0
  %v392 = vmax.f32 %v371, 0.0
  %v393 = vmax.f32 %v374, 0.0
  %v394 = vmax.f32 %v377, 0.0
  %v395 = vmax.f32 %v380, 0.0
  %v396 = vmax.f32 %v383, 0.0
  %v397 = vmax.f32 %v386, 0.0
  %v398 = vmax.f32 %v389, 0.0
  %v399 = vld [vmem:[%s6] sm:$0xff]
  %v400 = vld [vmem:[%s6 + $0x8] sm:$0xff]
  %v401 = vld [vmem:[%s6 + $0x10] sm:$0xff]
  %v402 = vld [vmem:[%s6 + $0x18] sm:$0xff]
  %v403 = vld [vmem:[%s7] sm:$0xff]
  %v404 = vld [vmem:[%s7 + $0x8] sm:$0xff]
  %v405 = vld [vmem:[%s7 + $0x10] sm:$0xff]
  %v406 = vld [vmem:[%s7 + $0x18] sm:$0xff]
  %408 = vset.pattern.permute.xlu0 0
  %409 = vperm.xlu0 %408, %v403
  %v410 = vpop.permute.xlu0 %409
  %413 = vset.pattern.permute.xlu0 0
  %414 = vperm.xlu0 %413, %v404
  %v415 = vpop.permute.xlu0 %414
  %418 = vset.pattern.permute.xlu0 0
  %419 = vperm.xlu0 %418, %v405
  %v420 = vpop.permute.xlu0 %419
  %423 = vset.pattern.permute.xlu0 0
  %424 = vperm.xlu0 %423, %v406
  %v425 = vpop.permute.xlu0 %424
  %v428 = vsel %vm325, %v399, 0
  %v431 = vsel %vm325, %v400, 0
  %v434 = vsel %vm325, %v401, 0
  %v437 = vsel %vm325, %v402, 0
  %439 = vmatpush.msra.mxu0 0.0
  %440 = vmatpush.msra.mxu0 0.0
  %441 = vmatpush.msra.mxu0 0.0
  %442 = vmatpush.msra.mxu0 0.0
  %443 = vmatpush.msra.mxu0 0.0
  %444 = vmatpush.msra.mxu0 0.0
  %445 = vmatpush.msra.mxu0 0.0
  %446 = vmatpush.msra.mxu0 0.0
  %447 = vmatpush.msra.mxu0 %v398
  %448 = vmatpush.msra.mxu0 %v397
  %449 = vmatpush.msra.mxu0 %v396
  %450 = vmatpush.msra.mxu0 %v395
  %451 = vmatpush.msra.mxu0 %v394
  %452 = vmatpush.msra.mxu0 %v393
  %453 = vmatpush.msra.mxu0 %v392
  %454 = vmatpush.msra.mxu0 %v391
  %455 = vmatmul.f32.gmra.mxu0 %v428
  %v456 = vpop.f32.mrf.mxu0
  %v457 = vadd.f32 %v410, %v456
  %458 = vmatmul.f32.gmra.mxu0 %v431
  %v459 = vpop.f32.mrf.mxu0
  %v460 = vadd.f32 %v415, %v459
  %461 = vmatmul.f32.gmra.mxu0 %v434
  %v462 = vpop.f32.mrf.mxu0
  %v463 = vadd.f32 %v420, %v462
  %464 = vmatmul.f32.gmra.mxu0 %v437
  %v465 = vpop.f32.mrf.mxu0
  %v466 = vadd.f32 %v425, %v465
  %467 = vdwg.mxu0
  %v468 = vtanh.pop %v457
  %v469 = vtanh.pop %v460
  %v470 = vld [vmem:[%s8] sm:$0xff]
  %v471 = vld [vmem:[%s8 + $0x8] sm:$0xff]
  %473 = vset.pattern.permute.xlu0 0
  %474 = vperm.xlu0 %473, %v470
  %v475 = vpop.permute.xlu0 %474
  %478 = vset.pattern.permute.xlu0 0
  %479 = vperm.xlu0 %478, %v471
  %v480 = vpop.permute.xlu0 %479
  %v482 = vmul.f32 %v468, %v475
  %v483 = vmul.f32 %v469, %v480
  %v484 = vmul.f32 %v482, 1.442695
  %v485 = vpow.pop %v484
  %v486 = vmul.f32 %v483, 1.442695
  %v487 = vpow.pop %v486
  %v488 = vmul.f32 %v134, %v485
  %v489 = vmul.f32 %v137, %v487
  %v490 = vadd.f32 %v488, %v463
  %v491 = vadd.f32 %v489, %v466
  %v492 = vadd.f32 %v482, %v483
  %v493 = vrot.slane %v492, 4
  %v494 = vadd.f32 %v492, %v493
  %v495 = vrot.slane %v494, 2
  %v496 = vadd.f32 %v494, %v495
  %v497 = vrot.slane %v496, 1
  %v498 = vadd.f32 %v496, %v497
  %v499 = vadd.f32 %v139, %v498
  %s500 = scalar_lea.vmem %s2, 64
  %v501 = vld [vmem:[%s500] sm:$0xff]
  %v502 = vld [vmem:[%s500 + $0x8] sm:$0xff]
  %v503 = vld [vmem:[%s500 + $0x10] sm:$0xff]
  %v504 = vld [vmem:[%s500 + $0x18] sm:$0xff]
  %v505 = vld [vmem:[%s500 + $0x20] sm:$0xff]
  %v506 = vld [vmem:[%s500 + $0x28] sm:$0xff]
  %v507 = vld [vmem:[%s500 + $0x30] sm:$0xff]
  %v508 = vld [vmem:[%s500 + $0x38] sm:$0xff]
  %s509 = scalar_lea.vmem %s3, 64
  %v510 = vld [vmem:[%s509] sm:$0xff]
  %v511 = vld [vmem:[%s509 + $0x8] sm:$0xff]
  %v512 = vld [vmem:[%s509 + $0x10] sm:$0xff]
  %v513 = vld [vmem:[%s509 + $0x18] sm:$0xff]
  %v514 = vld [vmem:[%s509 + $0x20] sm:$0xff]
  %v515 = vld [vmem:[%s509 + $0x28] sm:$0xff]
  %v516 = vld [vmem:[%s509 + $0x30] sm:$0xff]
  %v517 = vld [vmem:[%s509 + $0x38] sm:$0xff]
  %519 = vset.pattern.permute.xlu0 0
  %520 = vperm.xlu0 %519, %v510
  %v521 = vpop.permute.xlu0 %520
  %524 = vset.pattern.permute.xlu0 0
  %525 = vperm.xlu0 %524, %v511
  %v526 = vpop.permute.xlu0 %525
  %529 = vset.pattern.permute.xlu0 0
  %530 = vperm.xlu0 %529, %v512
  %v531 = vpop.permute.xlu0 %530
  %534 = vset.pattern.permute.xlu0 0
  %535 = vperm.xlu0 %534, %v513
  %v536 = vpop.permute.xlu0 %535
  %539 = vset.pattern.permute.xlu0 0
  %540 = vperm.xlu0 %539, %v514
  %v541 = vpop.permute.xlu0 %540
  %544 = vset.pattern.permute.xlu0 0
  %545 = vperm.xlu0 %544, %v515
  %v546 = vpop.permute.xlu0 %545
  %549 = vset.pattern.permute.xlu0 0
  %550 = vperm.xlu0 %549, %v516
  %v551 = vpop.permute.xlu0 %550
  %554 = vset.pattern.permute.xlu0 0
  %555 = vperm.xlu0 %554, %v517
  %v556 = vpop.permute.xlu0 %555
  %v559 = vsel %vm61, %v501, 0
  %v562 = vsel %vm61, %v502, 0
  %v565 = vsel %vm61, %v503, 0
  %v568 = vsel %vm61, %v504, 0
  %v571 = vsel %vm61, %v505, 0
  %v574 = vsel %vm61, %v506, 0
  %v577 = vsel %vm61, %v507, 0
  %v580 = vsel %vm61, %v508, 0
  %582 = vmatpush.msra.mxu0 0.0
  %583 = vmatpush.msra.mxu0 0.0
  %584 = vmatpush.msra.mxu0 0.0
  %585 = vmatpush.msra.mxu0 0.0
  %586 = vmatpush.msra.mxu0 0.0
  %587 = vmatpush.msra.mxu0 0.0
  %588 = vmatpush.msra.mxu0 0.0
  %589 = vmatpush.msra.mxu0 0.0
  %590 = vmatpush.msra.mxu0 0.0
  %591 = vmatpush.msra.mxu0 0.0
  %592 = vmatpush.msra.mxu0 0.0
  %593 = vmatpush.msra.mxu0 0.0
  %594 = vmatpush.msra.mxu0 0.0
  %595 = vmatpush.msra.mxu0 0.0
  %596 = vmatpush.msra.mxu0 %v491
  %597 = vmatpush.msra.mxu0 %v490
  %598 = vmatmul.f32.gmra.mxu0 %v559
  %v599 = vpop.f32.mrf.mxu0
  %v600 = vadd.f32 %v521, %v599
  %601 = vmatmul.f32.gmra.mxu0 %v562
  %v602 = vpop.f32.mrf.mxu0
  %v603 = vadd.f32 %v526, %v602
  %604 = vmatmul.f32.gmra.mxu0 %v565
  %v605 = vpop.f32.mrf.mxu0
  %v606 = vadd.f32 %v531, %v605
  %607 = vmatmul.f32.gmra.mxu0 %v568
  %v608 = vpop.f32.mrf.mxu0
  %v609 = vadd.f32 %v536, %v608
  %610 = vmatmul.f32.gmra.mxu0 %v571
  %v611 = vpop.f32.mrf.mxu0
  %v612 = vadd.f32 %v541, %v611
  %613 = vmatmul.f32.gmra.mxu0 %v574
  %v614 = vpop.f32.mrf.mxu0
  %v615 = vadd.f32 %v546, %v614
  %616 = vmatmul.f32.gmra.mxu0 %v577
  %v617 = vpop.f32.mrf.mxu0
  %v618 = vadd.f32 %v551, %v617
  %619 = vmatmul.f32.gmra.mxu0 %v580
  %v620 = vpop.f32.mrf.mxu0
  %v621 = vadd.f32 %v556, %v620
  %622 = vdwg.mxu0
  %v623 = vmax.f32 %v600, 0.0
  %v624 = vmax.f32 %v603, 0.0
  %v625 = vmax.f32 %v606, 0.0
  %v626 = vmax.f32 %v609, 0.0
  %v627 = vmax.f32 %v612, 0.0
  %v628 = vmax.f32 %v615, 0.0
  %v629 = vmax.f32 %v618, 0.0
  %v630 = vmax.f32 %v621, 0.0
  %s631 = scalar_lea.vmem %s4, 64
  %v632 = vld [vmem:[%s631] sm:$0xff]
  %v633 = vld [vmem:[%s631 + $0x8] sm:$0xff]
  %v634 = vld [vmem:[%s631 + $0x10] sm:$0xff]
  %v635 = vld [vmem:[%s631 + $0x18] sm:$0xff]
  %v636 = vld [vmem:[%s631 + $0x20] sm:$0xff]
  %v637 = vld [vmem:[%s631 + $0x28] sm:$0xff]
  %v638 = vld [vmem:[%s631 + $0x30] sm:$0xff]
  %v639 = vld [vmem:[%s631 + $0x38] sm:$0xff]
  %s640 = scalar_lea.vmem %s5, 64
  %v641 = vld [vmem:[%s640] sm:$0xff]
  %v642 = vld [vmem:[%s640 + $0x8] sm:$0xff]
  %v643 = vld [vmem:[%s640 + $0x10] sm:$0xff]
  %v644 = vld [vmem:[%s640 + $0x18] sm:$0xff]
  %v645 = vld [vmem:[%s640 + $0x20] sm:$0xff]
  %v646 = vld [vmem:[%s640 + $0x28] sm:$0xff]
  %v647 = vld [vmem:[%s640 + $0x30] sm:$0xff]
  %v648 = vld [vmem:[%s640 + $0x38] sm:$0xff]
  %650 = vset.pattern.permute.xlu0 0
  %651 = vperm.xlu0 %650, %v641
  %v652 = vpop.permute.xlu0 %651
  %655 = vset.pattern.permute.xlu0 0
  %656 = vperm.xlu0 %655, %v642
  %v657 = vpop.permute.xlu0 %656
  %660 = vset.pattern.permute.xlu0 0
  %661 = vperm.xlu0 %660, %v643
  %v662 = vpop.permute.xlu0 %661
  %665 = vset.pattern.permute.xlu0 0
  %666 = vperm.xlu0 %665, %v644
  %v667 = vpop.permute.xlu0 %666
  %670 = vset.pattern.permute.xlu0 0
  %671 = vperm.xlu0 %670, %v645
  %v672 = vpop.permute.xlu0 %671
  %675 = vset.pattern.permute.xlu0 0
  %676 = vperm.xlu0 %675, %v646
  %v677 = vpop.permute.xlu0 %676
  %680 = vset.pattern.permute.xlu0 0
  %681 = vperm.xlu0 %680, %v647
  %v682 = vpop.permute.xlu0 %681
  %685 = vset.pattern.permute.xlu0 0
  %686 = vperm.xlu0 %685, %v648
  %v687 = vpop.permute.xlu0 %686
  %v690 = vsel %vm325, %v632, 0
  %v693 = vsel %vm325, %v633, 0
  %v696 = vsel %vm325, %v634, 0
  %v699 = vsel %vm325, %v635, 0
  %v702 = vsel %vm325, %v636, 0
  %v705 = vsel %vm325, %v637, 0
  %v708 = vsel %vm325, %v638, 0
  %v711 = vsel %vm325, %v639, 0
  %713 = vmatpush.msra.mxu0 0.0
  %714 = vmatpush.msra.mxu0 0.0
  %715 = vmatpush.msra.mxu0 0.0
  %716 = vmatpush.msra.mxu0 0.0
  %717 = vmatpush.msra.mxu0 0.0
  %718 = vmatpush.msra.mxu0 0.0
  %719 = vmatpush.msra.mxu0 0.0
  %720 = vmatpush.msra.mxu0 0.0
  %721 = vmatpush.msra.mxu0 %v630
  %722 = vmatpush.msra.mxu0 %v629
  %723 = vmatpush.msra.mxu0 %v628
  %724 = vmatpush.msra.mxu0 %v627
  %725 = vmatpush.msra.mxu0 %v626
  %726 = vmatpush.msra.mxu0 %v625
  %727 = vmatpush.msra.mxu0 %v624
  %728 = vmatpush.msra.mxu0 %v623
  %729 = vmatmul.f32.gmra.mxu0 %v690
  %v730 = vpop.f32.mrf.mxu0
  %v731 = vadd.f32 %v652, %v730
  %732 = vmatmul.f32.gmra.mxu0 %v693
  %v733 = vpop.f32.mrf.mxu0
  %v734 = vadd.f32 %v657, %v733
  %735 = vmatmul.f32.gmra.mxu0 %v696
  %v736 = vpop.f32.mrf.mxu0
  %v737 = vadd.f32 %v662, %v736
  %738 = vmatmul.f32.gmra.mxu0 %v699
  %v739 = vpop.f32.mrf.mxu0
  %v740 = vadd.f32 %v667, %v739
  %741 = vmatmul.f32.gmra.mxu0 %v702
  %v742 = vpop.f32.mrf.mxu0
  %v743 = vadd.f32 %v672, %v742
  %744 = vmatmul.f32.gmra.mxu0 %v705
  %v745 = vpop.f32.mrf.mxu0
  %v746 = vadd.f32 %v677, %v745
  %747 = vmatmul.f32.gmra.mxu0 %v708
  %v748 = vpop.f32.mrf.mxu0
  %v749 = vadd.f32 %v682, %v748
  %750 = vmatmul.f32.gmra.mxu0 %v711
  %v751 = vpop.f32.mrf.mxu0
  %v752 = vadd.f32 %v687, %v751
  %753 = vdwg.mxu0
  %v754 = vmax.f32 %v731, 0.0
  %v755 = vmax.f32 %v734, 0.0
  %v756 = vmax.f32 %v737, 0.0
  %v757 = vmax.f32 %v740, 0.0
  %v758 = vmax.f32 %v743, 0.0
  %v759 = vmax.f32 %v746, 0.0
  %v760 = vmax.f32 %v749, 0.0
  %v761 = vmax.f32 %v752, 0.0
  %s762 = scalar_lea.vmem %s6, 32
  %v763 = vld [vmem:[%s762] sm:$0xff]
  %v764 = vld [vmem:[%s762 + $0x8] sm:$0xff]
  %v765 = vld [vmem:[%s762 + $0x10] sm:$0xff]
  %v766 = vld [vmem:[%s762 + $0x18] sm:$0xff]
  %s767 = scalar_lea.vmem %s7, 32
  %v768 = vld [vmem:[%s767] sm:$0xff]
  %v769 = vld [vmem:[%s767 + $0x8] sm:$0xff]
  %v770 = vld [vmem:[%s767 + $0x10] sm:$0xff]
  %v771 = vld [vmem:[%s767 + $0x18] sm:$0xff]
  %773 = vset.pattern.permute.xlu0 0
  %774 = vperm.xlu0 %773, %v768
  %v775 = vpop.permute.xlu0 %774
  %778 = vset.pattern.permute.xlu0 0
  %779 = vperm.xlu0 %778, %v769
  %v780 = vpop.permute.xlu0 %779
  %783 = vset.pattern.permute.xlu0 0
  %784 = vperm.xlu0 %783, %v770
  %v785 = vpop.permute.xlu0 %784
  %788 = vset.pattern.permute.xlu0 0
  %789 = vperm.xlu0 %788, %v771
  %v790 = vpop.permute.xlu0 %789
  %v793 = vsel %vm325, %v763, 0
  %v796 = vsel %vm325, %v764, 0
  %v799 = vsel %vm325, %v765, 0
  %v802 = vsel %vm325, %v766, 0
  %804 = vmatpush.msra.mxu0 0.0
  %805 = vmatpush.msra.mxu0 0.0
  %806 = vmatpush.msra.mxu0 0.0
  %807 = vmatpush.msra.mxu0 0.0
  %808 = vmatpush.msra.mxu0 0.0
  %809 = vmatpush.msra.mxu0 0.0
  %810 = vmatpush.msra.mxu0 0.0
  %811 = vmatpush.msra.mxu0 0.0
  %812 = vmatpush.msra.mxu0 %v761
  %813 = vmatpush.msra.mxu0 %v760
  %814 = vmatpush.msra.mxu0 %v759
  %815 = vmatpush.msra.mxu0 %v758
  %816 = vmatpush.msra.mxu0 %v757
  %817 = vmatpush.msra.mxu0 %v756
  %818 = vmatpush.msra.mxu0 %v755
  %819 = vmatpush.msra.mxu0 %v754
  %820 = vmatmul.f32.gmra.mxu0 %v793
  %v821 = vpop.f32.mrf.mxu0
  %v822 = vadd.f32 %v775, %v821
  %823 = vmatmul.f32.gmra.mxu0 %v796
  %v824 = vpop.f32.mrf.mxu0
  %v825 = vadd.f32 %v780, %v824
  %826 = vmatmul.f32.gmra.mxu0 %v799
  %v827 = vpop.f32.mrf.mxu0
  %v828 = vadd.f32 %v785, %v827
  %829 = vmatmul.f32.gmra.mxu0 %v802
  %v830 = vpop.f32.mrf.mxu0
  %v831 = vadd.f32 %v790, %v830
  %832 = vdwg.mxu0
  %v833 = vtanh.pop %v822
  %v834 = vtanh.pop %v825
  %s835 = scalar_lea.vmem %s8, 16
  %v836 = vld [vmem:[%s835] sm:$0xff]
  %v837 = vld [vmem:[%s835 + $0x8] sm:$0xff]
  %839 = vset.pattern.permute.xlu0 0
  %840 = vperm.xlu0 %839, %v836
  %v841 = vpop.permute.xlu0 %840
  %844 = vset.pattern.permute.xlu0 0
  %845 = vperm.xlu0 %844, %v837
  %v846 = vpop.permute.xlu0 %845
  %v848 = vmul.f32 %v833, %v841
  %v849 = vmul.f32 %v834, %v846
  %v850 = vmul.f32 %v848, 1.442695
  %v851 = vpow.pop %v850
  %v852 = vmul.f32 %v849, 1.442695
  %v853 = vpow.pop %v852
  %v854 = vmul.f32 %v490, %v851
  %v855 = vmul.f32 %v491, %v853
  %v856 = vadd.f32 %v854, %v828
  %v857 = vadd.f32 %v855, %v831
  %v858 = vadd.f32 %v848, %v849
  %v859 = vrot.slane %v858, 4
  %v860 = vadd.f32 %v858, %v859
  %v861 = vrot.slane %v860, 2
  %v862 = vadd.f32 %v860, %v861
  %v863 = vrot.slane %v862, 1
  %v864 = vadd.f32 %v862, %v863
  %v865 = vadd.f32 %v499, %v864
  %s866 = scalar_lea.vmem %s2, 128
  %v867 = vld [vmem:[%s866] sm:$0xff]
  %v868 = vld [vmem:[%s866 + $0x8] sm:$0xff]
  %v869 = vld [vmem:[%s866 + $0x10] sm:$0xff]
  %v870 = vld [vmem:[%s866 + $0x18] sm:$0xff]
  %v871 = vld [vmem:[%s866 + $0x20] sm:$0xff]
  %v872 = vld [vmem:[%s866 + $0x28] sm:$0xff]
  %v873 = vld [vmem:[%s866 + $0x30] sm:$0xff]
  %v874 = vld [vmem:[%s866 + $0x38] sm:$0xff]
  %s875 = scalar_lea.vmem %s3, 128
  %v876 = vld [vmem:[%s875] sm:$0xff]
  %v877 = vld [vmem:[%s875 + $0x8] sm:$0xff]
  %v878 = vld [vmem:[%s875 + $0x10] sm:$0xff]
  %v879 = vld [vmem:[%s875 + $0x18] sm:$0xff]
  %v880 = vld [vmem:[%s875 + $0x20] sm:$0xff]
  %v881 = vld [vmem:[%s875 + $0x28] sm:$0xff]
  %v882 = vld [vmem:[%s875 + $0x30] sm:$0xff]
  %v883 = vld [vmem:[%s875 + $0x38] sm:$0xff]
  %885 = vset.pattern.permute.xlu0 0
  %886 = vperm.xlu0 %885, %v876
  %v887 = vpop.permute.xlu0 %886
  %890 = vset.pattern.permute.xlu0 0
  %891 = vperm.xlu0 %890, %v877
  %v892 = vpop.permute.xlu0 %891
  %895 = vset.pattern.permute.xlu0 0
  %896 = vperm.xlu0 %895, %v878
  %v897 = vpop.permute.xlu0 %896
  %900 = vset.pattern.permute.xlu0 0
  %901 = vperm.xlu0 %900, %v879
  %v902 = vpop.permute.xlu0 %901
  %905 = vset.pattern.permute.xlu0 0
  %906 = vperm.xlu0 %905, %v880
  %v907 = vpop.permute.xlu0 %906
  %910 = vset.pattern.permute.xlu0 0
  %911 = vperm.xlu0 %910, %v881
  %v912 = vpop.permute.xlu0 %911
  %915 = vset.pattern.permute.xlu0 0
  %916 = vperm.xlu0 %915, %v882
  %v917 = vpop.permute.xlu0 %916
  %920 = vset.pattern.permute.xlu0 0
  %921 = vperm.xlu0 %920, %v883
  %v922 = vpop.permute.xlu0 %921
  %v925 = vsel %vm61, %v867, 0
  %v928 = vsel %vm61, %v868, 0
  %v931 = vsel %vm61, %v869, 0
  %v934 = vsel %vm61, %v870, 0
  %v937 = vsel %vm61, %v871, 0
  %v940 = vsel %vm61, %v872, 0
  %v943 = vsel %vm61, %v873, 0
  %v946 = vsel %vm61, %v874, 0
  %948 = vmatpush.msra.mxu0 0.0
  %949 = vmatpush.msra.mxu0 0.0
  %950 = vmatpush.msra.mxu0 0.0
  %951 = vmatpush.msra.mxu0 0.0
  %952 = vmatpush.msra.mxu0 0.0
  %953 = vmatpush.msra.mxu0 0.0
  %954 = vmatpush.msra.mxu0 0.0
  %955 = vmatpush.msra.mxu0 0.0
  %956 = vmatpush.msra.mxu0 0.0
  %957 = vmatpush.msra.mxu0 0.0
  %958 = vmatpush.msra.mxu0 0.0
  %959 = vmatpush.msra.mxu0 0.0
  %960 = vmatpush.msra.mxu0 0.0
  %961 = vmatpush.msra.mxu0 0.0
  %962 = vmatpush.msra.mxu0 %v857
  %963 = vmatpush.msra.mxu0 %v856
  %964 = vmatmul.f32.gmra.mxu0 %v925
  %v965 = vpop.f32.mrf.mxu0
  %v966 = vadd.f32 %v887, %v965
  %967 = vmatmul.f32.gmra.mxu0 %v928
  %v968 = vpop.f32.mrf.mxu0
  %v969 = vadd.f32 %v892, %v968
  %970 = vmatmul.f32.gmra.mxu0 %v931
  %v971 = vpop.f32.mrf.mxu0
  %v972 = vadd.f32 %v897, %v971
  %973 = vmatmul.f32.gmra.mxu0 %v934
  %v974 = vpop.f32.mrf.mxu0
  %v975 = vadd.f32 %v902, %v974
  %976 = vmatmul.f32.gmra.mxu0 %v937
  %v977 = vpop.f32.mrf.mxu0
  %v978 = vadd.f32 %v907, %v977
  %979 = vmatmul.f32.gmra.mxu0 %v940
  %v980 = vpop.f32.mrf.mxu0
  %v981 = vadd.f32 %v912, %v980
  %982 = vmatmul.f32.gmra.mxu0 %v943
  %v983 = vpop.f32.mrf.mxu0
  %v984 = vadd.f32 %v917, %v983
  %985 = vmatmul.f32.gmra.mxu0 %v946
  %v986 = vpop.f32.mrf.mxu0
  %v987 = vadd.f32 %v922, %v986
  %988 = vdwg.mxu0
  %v989 = vmax.f32 %v966, 0.0
  %v990 = vmax.f32 %v969, 0.0
  %v991 = vmax.f32 %v972, 0.0
  %v992 = vmax.f32 %v975, 0.0
  %v993 = vmax.f32 %v978, 0.0
  %v994 = vmax.f32 %v981, 0.0
  %v995 = vmax.f32 %v984, 0.0
  %v996 = vmax.f32 %v987, 0.0
  %s997 = scalar_lea.vmem %s4, 128
  %v998 = vld [vmem:[%s997] sm:$0xff]
  %v999 = vld [vmem:[%s997 + $0x8] sm:$0xff]
  %v1000 = vld [vmem:[%s997 + $0x10] sm:$0xff]
  %v1001 = vld [vmem:[%s997 + $0x18] sm:$0xff]
  %v1002 = vld [vmem:[%s997 + $0x20] sm:$0xff]
  %v1003 = vld [vmem:[%s997 + $0x28] sm:$0xff]
  %v1004 = vld [vmem:[%s997 + $0x30] sm:$0xff]
  %v1005 = vld [vmem:[%s997 + $0x38] sm:$0xff]
  %s1006 = scalar_lea.vmem %s5, 128
  %v1007 = vld [vmem:[%s1006] sm:$0xff]
  %v1008 = vld [vmem:[%s1006 + $0x8] sm:$0xff]
  %v1009 = vld [vmem:[%s1006 + $0x10] sm:$0xff]
  %v1010 = vld [vmem:[%s1006 + $0x18] sm:$0xff]
  %v1011 = vld [vmem:[%s1006 + $0x20] sm:$0xff]
  %v1012 = vld [vmem:[%s1006 + $0x28] sm:$0xff]
  %v1013 = vld [vmem:[%s1006 + $0x30] sm:$0xff]
  %v1014 = vld [vmem:[%s1006 + $0x38] sm:$0xff]
  %1016 = vset.pattern.permute.xlu0 0
  %1017 = vperm.xlu0 %1016, %v1007
  %v1018 = vpop.permute.xlu0 %1017
  %1021 = vset.pattern.permute.xlu0 0
  %1022 = vperm.xlu0 %1021, %v1008
  %v1023 = vpop.permute.xlu0 %1022
  %1026 = vset.pattern.permute.xlu0 0
  %1027 = vperm.xlu0 %1026, %v1009
  %v1028 = vpop.permute.xlu0 %1027
  %1031 = vset.pattern.permute.xlu0 0
  %1032 = vperm.xlu0 %1031, %v1010
  %v1033 = vpop.permute.xlu0 %1032
  %1036 = vset.pattern.permute.xlu0 0
  %1037 = vperm.xlu0 %1036, %v1011
  %v1038 = vpop.permute.xlu0 %1037
  %1041 = vset.pattern.permute.xlu0 0
  %1042 = vperm.xlu0 %1041, %v1012
  %v1043 = vpop.permute.xlu0 %1042
  %1046 = vset.pattern.permute.xlu0 0
  %1047 = vperm.xlu0 %1046, %v1013
  %v1048 = vpop.permute.xlu0 %1047
  %1051 = vset.pattern.permute.xlu0 0
  %1052 = vperm.xlu0 %1051, %v1014
  %v1053 = vpop.permute.xlu0 %1052
  %v1056 = vsel %vm325, %v998, 0
  %v1059 = vsel %vm325, %v999, 0
  %v1062 = vsel %vm325, %v1000, 0
  %v1065 = vsel %vm325, %v1001, 0
  %v1068 = vsel %vm325, %v1002, 0
  %v1071 = vsel %vm325, %v1003, 0
  %v1074 = vsel %vm325, %v1004, 0
  %v1077 = vsel %vm325, %v1005, 0
  %1079 = vmatpush.msra.mxu0 0.0
  %1080 = vmatpush.msra.mxu0 0.0
  %1081 = vmatpush.msra.mxu0 0.0
  %1082 = vmatpush.msra.mxu0 0.0
  %1083 = vmatpush.msra.mxu0 0.0
  %1084 = vmatpush.msra.mxu0 0.0
  %1085 = vmatpush.msra.mxu0 0.0
  %1086 = vmatpush.msra.mxu0 0.0
  %1087 = vmatpush.msra.mxu0 %v996
  %1088 = vmatpush.msra.mxu0 %v995
  %1089 = vmatpush.msra.mxu0 %v994
  %1090 = vmatpush.msra.mxu0 %v993
  %1091 = vmatpush.msra.mxu0 %v992
  %1092 = vmatpush.msra.mxu0 %v991
  %1093 = vmatpush.msra.mxu0 %v990
  %1094 = vmatpush.msra.mxu0 %v989
  %1095 = vmatmul.f32.gmra.mxu0 %v1056
  %v1096 = vpop.f32.mrf.mxu0
  %v1097 = vadd.f32 %v1018, %v1096
  %1098 = vmatmul.f32.gmra.mxu0 %v1059
  %v1099 = vpop.f32.mrf.mxu0
  %v1100 = vadd.f32 %v1023, %v1099
  %1101 = vmatmul.f32.gmra.mxu0 %v1062
  %v1102 = vpop.f32.mrf.mxu0
  %v1103 = vadd.f32 %v1028, %v1102
  %1104 = vmatmul.f32.gmra.mxu0 %v1065
  %v1105 = vpop.f32.mrf.mxu0
  %v1106 = vadd.f32 %v1033, %v1105
  %1107 = vmatmul.f32.gmra.mxu0 %v1068
  %v1108 = vpop.f32.mrf.mxu0
  %v1109 = vadd.f32 %v1038, %v1108
  %1110 = vmatmul.f32.gmra.mxu0 %v1071
  %v1111 = vpop.f32.mrf.mxu0
  %v1112 = vadd.f32 %v1043, %v1111
  %1113 = vmatmul.f32.gmra.mxu0 %v1074
  %v1114 = vpop.f32.mrf.mxu0
  %v1115 = vadd.f32 %v1048, %v1114
  %1116 = vmatmul.f32.gmra.mxu0 %v1077
  %v1117 = vpop.f32.mrf.mxu0
  %v1118 = vadd.f32 %v1053, %v1117
  %1119 = vdwg.mxu0
  %v1120 = vmax.f32 %v1097, 0.0
  %v1121 = vmax.f32 %v1100, 0.0
  %v1122 = vmax.f32 %v1103, 0.0
  %v1123 = vmax.f32 %v1106, 0.0
  %v1124 = vmax.f32 %v1109, 0.0
  %v1125 = vmax.f32 %v1112, 0.0
  %v1126 = vmax.f32 %v1115, 0.0
  %v1127 = vmax.f32 %v1118, 0.0
  %s1128 = scalar_lea.vmem %s6, 64
  %v1129 = vld [vmem:[%s1128] sm:$0xff]
  %v1130 = vld [vmem:[%s1128 + $0x8] sm:$0xff]
  %v1131 = vld [vmem:[%s1128 + $0x10] sm:$0xff]
  %v1132 = vld [vmem:[%s1128 + $0x18] sm:$0xff]
  %s1133 = scalar_lea.vmem %s7, 64
  %v1134 = vld [vmem:[%s1133] sm:$0xff]
  %v1135 = vld [vmem:[%s1133 + $0x8] sm:$0xff]
  %v1136 = vld [vmem:[%s1133 + $0x10] sm:$0xff]
  %v1137 = vld [vmem:[%s1133 + $0x18] sm:$0xff]
  %1139 = vset.pattern.permute.xlu0 0
  %1140 = vperm.xlu0 %1139, %v1134
  %v1141 = vpop.permute.xlu0 %1140
  %1144 = vset.pattern.permute.xlu0 0
  %1145 = vperm.xlu0 %1144, %v1135
  %v1146 = vpop.permute.xlu0 %1145
  %1149 = vset.pattern.permute.xlu0 0
  %1150 = vperm.xlu0 %1149, %v1136
  %v1151 = vpop.permute.xlu0 %1150
  %1154 = vset.pattern.permute.xlu0 0
  %1155 = vperm.xlu0 %1154, %v1137
  %v1156 = vpop.permute.xlu0 %1155
  %v1159 = vsel %vm325, %v1129, 0
  %v1162 = vsel %vm325, %v1130, 0
  %v1165 = vsel %vm325, %v1131, 0
  %v1168 = vsel %vm325, %v1132, 0
  %1170 = vmatpush.msra.mxu0 0.0
  %1171 = vmatpush.msra.mxu0 0.0
  %1172 = vmatpush.msra.mxu0 0.0
  %1173 = vmatpush.msra.mxu0 0.0
  %1174 = vmatpush.msra.mxu0 0.0
  %1175 = vmatpush.msra.mxu0 0.0
  %1176 = vmatpush.msra.mxu0 0.0
  %1177 = vmatpush.msra.mxu0 0.0
  %1178 = vmatpush.msra.mxu0 %v1127
  %1179 = vmatpush.msra.mxu0 %v1126
  %1180 = vmatpush.msra.mxu0 %v1125
  %1181 = vmatpush.msra.mxu0 %v1124
  %1182 = vmatpush.msra.mxu0 %v1123
  %1183 = vmatpush.msra.mxu0 %v1122
  %1184 = vmatpush.msra.mxu0 %v1121
  %1185 = vmatpush.msra.mxu0 %v1120
  %1186 = vmatmul.f32.gmra.mxu0 %v1159
  %v1187 = vpop.f32.mrf.mxu0
  %v1188 = vadd.f32 %v1141, %v1187
  %1189 = vmatmul.f32.gmra.mxu0 %v1162
  %v1190 = vpop.f32.mrf.mxu0
  %v1191 = vadd.f32 %v1146, %v1190
  %1192 = vmatmul.f32.gmra.mxu0 %v1165
  %v1193 = vpop.f32.mrf.mxu0
  %v1194 = vadd.f32 %v1151, %v1193
  %1195 = vmatmul.f32.gmra.mxu0 %v1168
  %v1196 = vpop.f32.mrf.mxu0
  %v1197 = vadd.f32 %v1156, %v1196
  %1198 = vdwg.mxu0
  %v1199 = vtanh.pop %v1188
  %v1200 = vtanh.pop %v1191
  %s1201 = scalar_lea.vmem %s8, 32
  %v1202 = vld [vmem:[%s1201] sm:$0xff]
  %v1203 = vld [vmem:[%s1201 + $0x8] sm:$0xff]
  %1205 = vset.pattern.permute.xlu0 0
  %1206 = vperm.xlu0 %1205, %v1202
  %v1207 = vpop.permute.xlu0 %1206
  %1210 = vset.pattern.permute.xlu0 0
  %1211 = vperm.xlu0 %1210, %v1203
  %v1212 = vpop.permute.xlu0 %1211
  %v1214 = vmul.f32 %v1199, %v1207
  %v1215 = vmul.f32 %v1200, %v1212
  %v1216 = vmul.f32 %v1214, 1.442695
  %v1217 = vpow.pop %v1216
  %v1218 = vmul.f32 %v1215, 1.442695
  %v1219 = vpow.pop %v1218
  %v1220 = vmul.f32 %v856, %v1217
  %v1221 = vmul.f32 %v857, %v1219
  %v1222 = vadd.f32 %v1220, %v1194
  %v1223 = vadd.f32 %v1221, %v1197
  %v1224 = vadd.f32 %v1214, %v1215
  %v1225 = vrot.slane %v1224, 4
  %v1226 = vadd.f32 %v1224, %v1225
  %v1227 = vrot.slane %v1226, 2
  %v1228 = vadd.f32 %v1226, %v1227
  %v1229 = vrot.slane %v1228, 1
  %v1230 = vadd.f32 %v1228, %v1229
  %v1231 = vadd.f32 %v865, %v1230
  %s1232 = scalar_lea.vmem %s2, 192
  %v1233 = vld [vmem:[%s1232] sm:$0xff]
  %v1234 = vld [vmem:[%s1232 + $0x8] sm:$0xff]
  %v1235 = vld [vmem:[%s1232 + $0x10] sm:$0xff]
  %v1236 = vld [vmem:[%s1232 + $0x18] sm:$0xff]
  %v1237 = vld [vmem:[%s1232 + $0x20] sm:$0xff]
  %v1238 = vld [vmem:[%s1232 + $0x28] sm:$0xff]
  %v1239 = vld [vmem:[%s1232 + $0x30] sm:$0xff]
  %v1240 = vld [vmem:[%s1232 + $0x38] sm:$0xff]
  %s1241 = scalar_lea.vmem %s3, 192
  %v1242 = vld [vmem:[%s1241] sm:$0xff]
  %v1243 = vld [vmem:[%s1241 + $0x8] sm:$0xff]
  %v1244 = vld [vmem:[%s1241 + $0x10] sm:$0xff]
  %v1245 = vld [vmem:[%s1241 + $0x18] sm:$0xff]
  %v1246 = vld [vmem:[%s1241 + $0x20] sm:$0xff]
  %v1247 = vld [vmem:[%s1241 + $0x28] sm:$0xff]
  %v1248 = vld [vmem:[%s1241 + $0x30] sm:$0xff]
  %v1249 = vld [vmem:[%s1241 + $0x38] sm:$0xff]
  %1251 = vset.pattern.permute.xlu0 0
  %1252 = vperm.xlu0 %1251, %v1242
  %v1253 = vpop.permute.xlu0 %1252
  %1256 = vset.pattern.permute.xlu0 0
  %1257 = vperm.xlu0 %1256, %v1243
  %v1258 = vpop.permute.xlu0 %1257
  %1261 = vset.pattern.permute.xlu0 0
  %1262 = vperm.xlu0 %1261, %v1244
  %v1263 = vpop.permute.xlu0 %1262
  %1266 = vset.pattern.permute.xlu0 0
  %1267 = vperm.xlu0 %1266, %v1245
  %v1268 = vpop.permute.xlu0 %1267
  %1271 = vset.pattern.permute.xlu0 0
  %1272 = vperm.xlu0 %1271, %v1246
  %v1273 = vpop.permute.xlu0 %1272
  %1276 = vset.pattern.permute.xlu0 0
  %1277 = vperm.xlu0 %1276, %v1247
  %v1278 = vpop.permute.xlu0 %1277
  %1281 = vset.pattern.permute.xlu0 0
  %1282 = vperm.xlu0 %1281, %v1248
  %v1283 = vpop.permute.xlu0 %1282
  %1286 = vset.pattern.permute.xlu0 0
  %1287 = vperm.xlu0 %1286, %v1249
  %v1288 = vpop.permute.xlu0 %1287
  %v1291 = vsel %vm61, %v1233, 0
  %v1294 = vsel %vm61, %v1234, 0
  %v1297 = vsel %vm61, %v1235, 0
  %v1300 = vsel %vm61, %v1236, 0
  %v1303 = vsel %vm61, %v1237, 0
  %v1306 = vsel %vm61, %v1238, 0
  %v1309 = vsel %vm61, %v1239, 0
  %v1312 = vsel %vm61, %v1240, 0
  %1314 = vmatpush.msra.mxu0 0.0
  %1315 = vmatpush.msra.mxu0 0.0
  %1316 = vmatpush.msra.mxu0 0.0
  %1317 = vmatpush.msra.mxu0 0.0
  %1318 = vmatpush.msra.mxu0 0.0
  %1319 = vmatpush.msra.mxu0 0.0
  %1320 = vmatpush.msra.mxu0 0.0
  %1321 = vmatpush.msra.mxu0 0.0
  %1322 = vmatpush.msra.mxu0 0.0
  %1323 = vmatpush.msra.mxu0 0.0
  %1324 = vmatpush.msra.mxu0 0.0
  %1325 = vmatpush.msra.mxu0 0.0
  %1326 = vmatpush.msra.mxu0 0.0
  %1327 = vmatpush.msra.mxu0 0.0
  %1328 = vmatpush.msra.mxu0 %v1223
  %1329 = vmatpush.msra.mxu0 %v1222
  %1330 = vmatmul.f32.gmra.mxu0 %v1291
  %v1331 = vpop.f32.mrf.mxu0
  %v1332 = vadd.f32 %v1253, %v1331
  %1333 = vmatmul.f32.gmra.mxu0 %v1294
  %v1334 = vpop.f32.mrf.mxu0
  %v1335 = vadd.f32 %v1258, %v1334
  %1336 = vmatmul.f32.gmra.mxu0 %v1297
  %v1337 = vpop.f32.mrf.mxu0
  %v1338 = vadd.f32 %v1263, %v1337
  %1339 = vmatmul.f32.gmra.mxu0 %v1300
  %v1340 = vpop.f32.mrf.mxu0
  %v1341 = vadd.f32 %v1268, %v1340
  %1342 = vmatmul.f32.gmra.mxu0 %v1303
  %v1343 = vpop.f32.mrf.mxu0
  %v1344 = vadd.f32 %v1273, %v1343
  %1345 = vmatmul.f32.gmra.mxu0 %v1306
  %v1346 = vpop.f32.mrf.mxu0
  %v1347 = vadd.f32 %v1278, %v1346
  %1348 = vmatmul.f32.gmra.mxu0 %v1309
  %v1349 = vpop.f32.mrf.mxu0
  %v1350 = vadd.f32 %v1283, %v1349
  %1351 = vmatmul.f32.gmra.mxu0 %v1312
  %v1352 = vpop.f32.mrf.mxu0
  %v1353 = vadd.f32 %v1288, %v1352
  %1354 = vdwg.mxu0
  %v1355 = vmax.f32 %v1332, 0.0
  %v1356 = vmax.f32 %v1335, 0.0
  %v1357 = vmax.f32 %v1338, 0.0
  %v1358 = vmax.f32 %v1341, 0.0
  %v1359 = vmax.f32 %v1344, 0.0
  %v1360 = vmax.f32 %v1347, 0.0
  %v1361 = vmax.f32 %v1350, 0.0
  %v1362 = vmax.f32 %v1353, 0.0
  %s1363 = scalar_lea.vmem %s4, 192
  %v1364 = vld [vmem:[%s1363] sm:$0xff]
  %v1365 = vld [vmem:[%s1363 + $0x8] sm:$0xff]
  %v1366 = vld [vmem:[%s1363 + $0x10] sm:$0xff]
  %v1367 = vld [vmem:[%s1363 + $0x18] sm:$0xff]
  %v1368 = vld [vmem:[%s1363 + $0x20] sm:$0xff]
  %v1369 = vld [vmem:[%s1363 + $0x28] sm:$0xff]
  %v1370 = vld [vmem:[%s1363 + $0x30] sm:$0xff]
  %v1371 = vld [vmem:[%s1363 + $0x38] sm:$0xff]
  %s1372 = scalar_lea.vmem %s5, 192
  %v1373 = vld [vmem:[%s1372] sm:$0xff]
  %v1374 = vld [vmem:[%s1372 + $0x8] sm:$0xff]
  %v1375 = vld [vmem:[%s1372 + $0x10] sm:$0xff]
  %v1376 = vld [vmem:[%s1372 + $0x18] sm:$0xff]
  %v1377 = vld [vmem:[%s1372 + $0x20] sm:$0xff]
  %v1378 = vld [vmem:[%s1372 + $0x28] sm:$0xff]
  %v1379 = vld [vmem:[%s1372 + $0x30] sm:$0xff]
  %v1380 = vld [vmem:[%s1372 + $0x38] sm:$0xff]
  %1382 = vset.pattern.permute.xlu0 0
  %1383 = vperm.xlu0 %1382, %v1373
  %v1384 = vpop.permute.xlu0 %1383
  %1387 = vset.pattern.permute.xlu0 0
  %1388 = vperm.xlu0 %1387, %v1374
  %v1389 = vpop.permute.xlu0 %1388
  %1392 = vset.pattern.permute.xlu0 0
  %1393 = vperm.xlu0 %1392, %v1375
  %v1394 = vpop.permute.xlu0 %1393
  %1397 = vset.pattern.permute.xlu0 0
  %1398 = vperm.xlu0 %1397, %v1376
  %v1399 = vpop.permute.xlu0 %1398
  %1402 = vset.pattern.permute.xlu0 0
  %1403 = vperm.xlu0 %1402, %v1377
  %v1404 = vpop.permute.xlu0 %1403
  %1407 = vset.pattern.permute.xlu0 0
  %1408 = vperm.xlu0 %1407, %v1378
  %v1409 = vpop.permute.xlu0 %1408
  %1412 = vset.pattern.permute.xlu0 0
  %1413 = vperm.xlu0 %1412, %v1379
  %v1414 = vpop.permute.xlu0 %1413
  %1417 = vset.pattern.permute.xlu0 0
  %1418 = vperm.xlu0 %1417, %v1380
  %v1419 = vpop.permute.xlu0 %1418
  %v1422 = vsel %vm325, %v1364, 0
  %v1425 = vsel %vm325, %v1365, 0
  %v1428 = vsel %vm325, %v1366, 0
  %v1431 = vsel %vm325, %v1367, 0
  %v1434 = vsel %vm325, %v1368, 0
  %v1437 = vsel %vm325, %v1369, 0
  %v1440 = vsel %vm325, %v1370, 0
  %v1443 = vsel %vm325, %v1371, 0
  %1445 = vmatpush.msra.mxu0 0.0
  %1446 = vmatpush.msra.mxu0 0.0
  %1447 = vmatpush.msra.mxu0 0.0
  %1448 = vmatpush.msra.mxu0 0.0
  %1449 = vmatpush.msra.mxu0 0.0
  %1450 = vmatpush.msra.mxu0 0.0
  %1451 = vmatpush.msra.mxu0 0.0
  %1452 = vmatpush.msra.mxu0 0.0
  %1453 = vmatpush.msra.mxu0 %v1362
  %1454 = vmatpush.msra.mxu0 %v1361
  %1455 = vmatpush.msra.mxu0 %v1360
  %1456 = vmatpush.msra.mxu0 %v1359
  %1457 = vmatpush.msra.mxu0 %v1358
  %1458 = vmatpush.msra.mxu0 %v1357
  %1459 = vmatpush.msra.mxu0 %v1356
  %1460 = vmatpush.msra.mxu0 %v1355
  %1461 = vmatmul.f32.gmra.mxu0 %v1422
  %v1462 = vpop.f32.mrf.mxu0
  %v1463 = vadd.f32 %v1384, %v1462
  %1464 = vmatmul.f32.gmra.mxu0 %v1425
  %v1465 = vpop.f32.mrf.mxu0
  %v1466 = vadd.f32 %v1389, %v1465
  %1467 = vmatmul.f32.gmra.mxu0 %v1428
  %v1468 = vpop.f32.mrf.mxu0
  %v1469 = vadd.f32 %v1394, %v1468
  %1470 = vmatmul.f32.gmra.mxu0 %v1431
  %v1471 = vpop.f32.mrf.mxu0
  %v1472 = vadd.f32 %v1399, %v1471
  %1473 = vmatmul.f32.gmra.mxu0 %v1434
  %v1474 = vpop.f32.mrf.mxu0
  %v1475 = vadd.f32 %v1404, %v1474
  %1476 = vmatmul.f32.gmra.mxu0 %v1437
  %v1477 = vpop.f32.mrf.mxu0
  %v1478 = vadd.f32 %v1409, %v1477
  %1479 = vmatmul.f32.gmra.mxu0 %v1440
  %v1480 = vpop.f32.mrf.mxu0
  %v1481 = vadd.f32 %v1414, %v1480
  %1482 = vmatmul.f32.gmra.mxu0 %v1443
  %v1483 = vpop.f32.mrf.mxu0
  %v1484 = vadd.f32 %v1419, %v1483
  %1485 = vdwg.mxu0
  %v1486 = vmax.f32 %v1463, 0.0
  %v1487 = vmax.f32 %v1466, 0.0
  %v1488 = vmax.f32 %v1469, 0.0
  %v1489 = vmax.f32 %v1472, 0.0
  %v1490 = vmax.f32 %v1475, 0.0
  %v1491 = vmax.f32 %v1478, 0.0
  %v1492 = vmax.f32 %v1481, 0.0
  %v1493 = vmax.f32 %v1484, 0.0
  %s1494 = scalar_lea.vmem %s6, 96
  %v1495 = vld [vmem:[%s1494] sm:$0xff]
  %v1496 = vld [vmem:[%s1494 + $0x8] sm:$0xff]
  %v1497 = vld [vmem:[%s1494 + $0x10] sm:$0xff]
  %v1498 = vld [vmem:[%s1494 + $0x18] sm:$0xff]
  %s1499 = scalar_lea.vmem %s7, 96
  %v1500 = vld [vmem:[%s1499] sm:$0xff]
  %v1501 = vld [vmem:[%s1499 + $0x8] sm:$0xff]
  %v1502 = vld [vmem:[%s1499 + $0x10] sm:$0xff]
  %v1503 = vld [vmem:[%s1499 + $0x18] sm:$0xff]
  %1505 = vset.pattern.permute.xlu0 0
  %1506 = vperm.xlu0 %1505, %v1500
  %v1507 = vpop.permute.xlu0 %1506
  %1510 = vset.pattern.permute.xlu0 0
  %1511 = vperm.xlu0 %1510, %v1501
  %v1512 = vpop.permute.xlu0 %1511
  %1515 = vset.pattern.permute.xlu0 0
  %1516 = vperm.xlu0 %1515, %v1502
  %v1517 = vpop.permute.xlu0 %1516
  %1520 = vset.pattern.permute.xlu0 0
  %1521 = vperm.xlu0 %1520, %v1503
  %v1522 = vpop.permute.xlu0 %1521
  %v1525 = vsel %vm325, %v1495, 0
  %v1528 = vsel %vm325, %v1496, 0
  %v1531 = vsel %vm325, %v1497, 0
  %v1534 = vsel %vm325, %v1498, 0
  %1536 = vmatpush.msra.mxu0 0.0
  %1537 = vmatpush.msra.mxu0 0.0
  %1538 = vmatpush.msra.mxu0 0.0
  %1539 = vmatpush.msra.mxu0 0.0
  %1540 = vmatpush.msra.mxu0 0.0
  %1541 = vmatpush.msra.mxu0 0.0
  %1542 = vmatpush.msra.mxu0 0.0
  %1543 = vmatpush.msra.mxu0 0.0
  %1544 = vmatpush.msra.mxu0 %v1493
  %1545 = vmatpush.msra.mxu0 %v1492
  %1546 = vmatpush.msra.mxu0 %v1491
  %1547 = vmatpush.msra.mxu0 %v1490
  %1548 = vmatpush.msra.mxu0 %v1489
  %1549 = vmatpush.msra.mxu0 %v1488
  %1550 = vmatpush.msra.mxu0 %v1487
  %1551 = vmatpush.msra.mxu0 %v1486
  %1552 = vmatmul.f32.gmra.mxu0 %v1525
  %v1553 = vpop.f32.mrf.mxu0
  %v1554 = vadd.f32 %v1507, %v1553
  %1555 = vmatmul.f32.gmra.mxu0 %v1528
  %v1556 = vpop.f32.mrf.mxu0
  %v1557 = vadd.f32 %v1512, %v1556
  %1558 = vmatmul.f32.gmra.mxu0 %v1531
  %v1559 = vpop.f32.mrf.mxu0
  %v1560 = vadd.f32 %v1517, %v1559
  %1561 = vmatmul.f32.gmra.mxu0 %v1534
  %v1562 = vpop.f32.mrf.mxu0
  %v1563 = vadd.f32 %v1522, %v1562
  %1564 = vdwg.mxu0
  %v1565 = vtanh.pop %v1554
  %v1566 = vtanh.pop %v1557
  %s1567 = scalar_lea.vmem %s8, 48
  %v1568 = vld [vmem:[%s1567] sm:$0xff]
  %v1569 = vld [vmem:[%s1567 + $0x8] sm:$0xff]
  %1571 = vset.pattern.permute.xlu0 0
  %1572 = vperm.xlu0 %1571, %v1568
  %v1573 = vpop.permute.xlu0 %1572
  %1576 = vset.pattern.permute.xlu0 0
  %1577 = vperm.xlu0 %1576, %v1569
  %v1578 = vpop.permute.xlu0 %1577
  %v1580 = vmul.f32 %v1565, %v1573
  %v1581 = vmul.f32 %v1566, %v1578
  %v1582 = vmul.f32 %v1580, 1.442695
  %v1583 = vpow.pop %v1582
  %v1584 = vmul.f32 %v1581, 1.442695
  %v1585 = vpow.pop %v1584
  %v1586 = vmul.f32 %v1222, %v1583
  %v1587 = vmul.f32 %v1223, %v1585
  %v1588 = vadd.f32 %v1586, %v1560
  %v1589 = vadd.f32 %v1587, %v1563
  %v1590 = vadd.f32 %v1580, %v1581
  %v1591 = vrot.slane %v1590, 4
  %v1592 = vadd.f32 %v1590, %v1591
  %v1593 = vrot.slane %v1592, 2
  %v1594 = vadd.f32 %v1592, %v1593
  %v1595 = vrot.slane %v1594, 1
  %v1596 = vadd.f32 %v1594, %v1595
  %v1597 = vadd.f32 %v1231, %v1596
  %s1598 = scalar_lea.vmem %s2, 256
  %v1599 = vld [vmem:[%s1598] sm:$0xff]
  %v1600 = vld [vmem:[%s1598 + $0x8] sm:$0xff]
  %v1601 = vld [vmem:[%s1598 + $0x10] sm:$0xff]
  %v1602 = vld [vmem:[%s1598 + $0x18] sm:$0xff]
  %v1603 = vld [vmem:[%s1598 + $0x20] sm:$0xff]
  %v1604 = vld [vmem:[%s1598 + $0x28] sm:$0xff]
  %v1605 = vld [vmem:[%s1598 + $0x30] sm:$0xff]
  %v1606 = vld [vmem:[%s1598 + $0x38] sm:$0xff]
  %s1607 = scalar_lea.vmem %s3, 256
  %v1608 = vld [vmem:[%s1607] sm:$0xff]
  %v1609 = vld [vmem:[%s1607 + $0x8] sm:$0xff]
  %v1610 = vld [vmem:[%s1607 + $0x10] sm:$0xff]
  %v1611 = vld [vmem:[%s1607 + $0x18] sm:$0xff]
  %v1612 = vld [vmem:[%s1607 + $0x20] sm:$0xff]
  %v1613 = vld [vmem:[%s1607 + $0x28] sm:$0xff]
  %v1614 = vld [vmem:[%s1607 + $0x30] sm:$0xff]
  %v1615 = vld [vmem:[%s1607 + $0x38] sm:$0xff]
  %1617 = vset.pattern.permute.xlu0 0
  %1618 = vperm.xlu0 %1617, %v1608
  %v1619 = vpop.permute.xlu0 %1618
  %1622 = vset.pattern.permute.xlu0 0
  %1623 = vperm.xlu0 %1622, %v1609
  %v1624 = vpop.permute.xlu0 %1623
  %1627 = vset.pattern.permute.xlu0 0
  %1628 = vperm.xlu0 %1627, %v1610
  %v1629 = vpop.permute.xlu0 %1628
  %1632 = vset.pattern.permute.xlu0 0
  %1633 = vperm.xlu0 %1632, %v1611
  %v1634 = vpop.permute.xlu0 %1633
  %1637 = vset.pattern.permute.xlu0 0
  %1638 = vperm.xlu0 %1637, %v1612
  %v1639 = vpop.permute.xlu0 %1638
  %1642 = vset.pattern.permute.xlu0 0
  %1643 = vperm.xlu0 %1642, %v1613
  %v1644 = vpop.permute.xlu0 %1643
  %1647 = vset.pattern.permute.xlu0 0
  %1648 = vperm.xlu0 %1647, %v1614
  %v1649 = vpop.permute.xlu0 %1648
  %1652 = vset.pattern.permute.xlu0 0
  %1653 = vperm.xlu0 %1652, %v1615
  %v1654 = vpop.permute.xlu0 %1653
  %v1657 = vsel %vm61, %v1599, 0
  %v1660 = vsel %vm61, %v1600, 0
  %v1663 = vsel %vm61, %v1601, 0
  %v1666 = vsel %vm61, %v1602, 0
  %v1669 = vsel %vm61, %v1603, 0
  %v1672 = vsel %vm61, %v1604, 0
  %v1675 = vsel %vm61, %v1605, 0
  %v1678 = vsel %vm61, %v1606, 0
  %1680 = vmatpush.msra.mxu0 0.0
  %1681 = vmatpush.msra.mxu0 0.0
  %1682 = vmatpush.msra.mxu0 0.0
  %1683 = vmatpush.msra.mxu0 0.0
  %1684 = vmatpush.msra.mxu0 0.0
  %1685 = vmatpush.msra.mxu0 0.0
  %1686 = vmatpush.msra.mxu0 0.0
  %1687 = vmatpush.msra.mxu0 0.0
  %1688 = vmatpush.msra.mxu0 0.0
  %1689 = vmatpush.msra.mxu0 0.0
  %1690 = vmatpush.msra.mxu0 0.0
  %1691 = vmatpush.msra.mxu0 0.0
  %1692 = vmatpush.msra.mxu0 0.0
  %1693 = vmatpush.msra.mxu0 0.0
  %1694 = vmatpush.msra.mxu0 %v1589
  %1695 = vmatpush.msra.mxu0 %v1588
  %1696 = vmatmul.f32.gmra.mxu0 %v1657
  %v1697 = vpop.f32.mrf.mxu0
  %v1698 = vadd.f32 %v1619, %v1697
  %1699 = vmatmul.f32.gmra.mxu0 %v1660
  %v1700 = vpop.f32.mrf.mxu0
  %v1701 = vadd.f32 %v1624, %v1700
  %1702 = vmatmul.f32.gmra.mxu0 %v1663
  %v1703 = vpop.f32.mrf.mxu0
  %v1704 = vadd.f32 %v1629, %v1703
  %1705 = vmatmul.f32.gmra.mxu0 %v1666
  %v1706 = vpop.f32.mrf.mxu0
  %v1707 = vadd.f32 %v1634, %v1706
  %1708 = vmatmul.f32.gmra.mxu0 %v1669
  %v1709 = vpop.f32.mrf.mxu0
  %v1710 = vadd.f32 %v1639, %v1709
  %1711 = vmatmul.f32.gmra.mxu0 %v1672
  %v1712 = vpop.f32.mrf.mxu0
  %v1713 = vadd.f32 %v1644, %v1712
  %1714 = vmatmul.f32.gmra.mxu0 %v1675
  %v1715 = vpop.f32.mrf.mxu0
  %v1716 = vadd.f32 %v1649, %v1715
  %1717 = vmatmul.f32.gmra.mxu0 %v1678
  %v1718 = vpop.f32.mrf.mxu0
  %v1719 = vadd.f32 %v1654, %v1718
  %1720 = vdwg.mxu0
  %v1721 = vmax.f32 %v1698, 0.0
  %v1722 = vmax.f32 %v1701, 0.0
  %v1723 = vmax.f32 %v1704, 0.0
  %v1724 = vmax.f32 %v1707, 0.0
  %v1725 = vmax.f32 %v1710, 0.0
  %v1726 = vmax.f32 %v1713, 0.0
  %v1727 = vmax.f32 %v1716, 0.0
  %v1728 = vmax.f32 %v1719, 0.0
  %s1729 = scalar_lea.vmem %s4, 256
  %v1730 = vld [vmem:[%s1729] sm:$0xff]
  %v1731 = vld [vmem:[%s1729 + $0x8] sm:$0xff]
  %v1732 = vld [vmem:[%s1729 + $0x10] sm:$0xff]
  %v1733 = vld [vmem:[%s1729 + $0x18] sm:$0xff]
  %v1734 = vld [vmem:[%s1729 + $0x20] sm:$0xff]
  %v1735 = vld [vmem:[%s1729 + $0x28] sm:$0xff]
  %v1736 = vld [vmem:[%s1729 + $0x30] sm:$0xff]
  %v1737 = vld [vmem:[%s1729 + $0x38] sm:$0xff]
  %s1738 = scalar_lea.vmem %s5, 256
  %v1739 = vld [vmem:[%s1738] sm:$0xff]
  %v1740 = vld [vmem:[%s1738 + $0x8] sm:$0xff]
  %v1741 = vld [vmem:[%s1738 + $0x10] sm:$0xff]
  %v1742 = vld [vmem:[%s1738 + $0x18] sm:$0xff]
  %v1743 = vld [vmem:[%s1738 + $0x20] sm:$0xff]
  %v1744 = vld [vmem:[%s1738 + $0x28] sm:$0xff]
  %v1745 = vld [vmem:[%s1738 + $0x30] sm:$0xff]
  %v1746 = vld [vmem:[%s1738 + $0x38] sm:$0xff]
  %1748 = vset.pattern.permute.xlu0 0
  %1749 = vperm.xlu0 %1748, %v1739
  %v1750 = vpop.permute.xlu0 %1749
  %1753 = vset.pattern.permute.xlu0 0
  %1754 = vperm.xlu0 %1753, %v1740
  %v1755 = vpop.permute.xlu0 %1754
  %1758 = vset.pattern.permute.xlu0 0
  %1759 = vperm.xlu0 %1758, %v1741
  %v1760 = vpop.permute.xlu0 %1759
  %1763 = vset.pattern.permute.xlu0 0
  %1764 = vperm.xlu0 %1763, %v1742
  %v1765 = vpop.permute.xlu0 %1764
  %1768 = vset.pattern.permute.xlu0 0
  %1769 = vperm.xlu0 %1768, %v1743
  %v1770 = vpop.permute.xlu0 %1769
  %1773 = vset.pattern.permute.xlu0 0
  %1774 = vperm.xlu0 %1773, %v1744
  %v1775 = vpop.permute.xlu0 %1774
  %1778 = vset.pattern.permute.xlu0 0
  %1779 = vperm.xlu0 %1778, %v1745
  %v1780 = vpop.permute.xlu0 %1779
  %1783 = vset.pattern.permute.xlu0 0
  %1784 = vperm.xlu0 %1783, %v1746
  %v1785 = vpop.permute.xlu0 %1784
  %v1788 = vsel %vm325, %v1730, 0
  %v1791 = vsel %vm325, %v1731, 0
  %v1794 = vsel %vm325, %v1732, 0
  %v1797 = vsel %vm325, %v1733, 0
  %v1800 = vsel %vm325, %v1734, 0
  %v1803 = vsel %vm325, %v1735, 0
  %v1806 = vsel %vm325, %v1736, 0
  %v1809 = vsel %vm325, %v1737, 0
  %1811 = vmatpush.msra.mxu0 0.0
  %1812 = vmatpush.msra.mxu0 0.0
  %1813 = vmatpush.msra.mxu0 0.0
  %1814 = vmatpush.msra.mxu0 0.0
  %1815 = vmatpush.msra.mxu0 0.0
  %1816 = vmatpush.msra.mxu0 0.0
  %1817 = vmatpush.msra.mxu0 0.0
  %1818 = vmatpush.msra.mxu0 0.0
  %1819 = vmatpush.msra.mxu0 %v1728
  %1820 = vmatpush.msra.mxu0 %v1727
  %1821 = vmatpush.msra.mxu0 %v1726
  %1822 = vmatpush.msra.mxu0 %v1725
  %1823 = vmatpush.msra.mxu0 %v1724
  %1824 = vmatpush.msra.mxu0 %v1723
  %1825 = vmatpush.msra.mxu0 %v1722
  %1826 = vmatpush.msra.mxu0 %v1721
  %1827 = vmatmul.f32.gmra.mxu0 %v1788
  %v1828 = vpop.f32.mrf.mxu0
  %v1829 = vadd.f32 %v1750, %v1828
  %1830 = vmatmul.f32.gmra.mxu0 %v1791
  %v1831 = vpop.f32.mrf.mxu0
  %v1832 = vadd.f32 %v1755, %v1831
  %1833 = vmatmul.f32.gmra.mxu0 %v1794
  %v1834 = vpop.f32.mrf.mxu0
  %v1835 = vadd.f32 %v1760, %v1834
  %1836 = vmatmul.f32.gmra.mxu0 %v1797
  %v1837 = vpop.f32.mrf.mxu0
  %v1838 = vadd.f32 %v1765, %v1837
  %1839 = vmatmul.f32.gmra.mxu0 %v1800
  %v1840 = vpop.f32.mrf.mxu0
  %v1841 = vadd.f32 %v1770, %v1840
  %1842 = vmatmul.f32.gmra.mxu0 %v1803
  %v1843 = vpop.f32.mrf.mxu0
  %v1844 = vadd.f32 %v1775, %v1843
  %1845 = vmatmul.f32.gmra.mxu0 %v1806
  %v1846 = vpop.f32.mrf.mxu0
  %v1847 = vadd.f32 %v1780, %v1846
  %1848 = vmatmul.f32.gmra.mxu0 %v1809
  %v1849 = vpop.f32.mrf.mxu0
  %v1850 = vadd.f32 %v1785, %v1849
  %1851 = vdwg.mxu0
  %v1852 = vmax.f32 %v1829, 0.0
  %v1853 = vmax.f32 %v1832, 0.0
  %v1854 = vmax.f32 %v1835, 0.0
  %v1855 = vmax.f32 %v1838, 0.0
  %v1856 = vmax.f32 %v1841, 0.0
  %v1857 = vmax.f32 %v1844, 0.0
  %v1858 = vmax.f32 %v1847, 0.0
  %v1859 = vmax.f32 %v1850, 0.0
  %s1860 = scalar_lea.vmem %s6, 128
  %v1861 = vld [vmem:[%s1860] sm:$0xff]
  %v1862 = vld [vmem:[%s1860 + $0x8] sm:$0xff]
  %v1863 = vld [vmem:[%s1860 + $0x10] sm:$0xff]
  %v1864 = vld [vmem:[%s1860 + $0x18] sm:$0xff]
  %s1865 = scalar_lea.vmem %s7, 128
  %v1866 = vld [vmem:[%s1865] sm:$0xff]
  %v1867 = vld [vmem:[%s1865 + $0x8] sm:$0xff]
  %v1868 = vld [vmem:[%s1865 + $0x10] sm:$0xff]
  %v1869 = vld [vmem:[%s1865 + $0x18] sm:$0xff]
  %1871 = vset.pattern.permute.xlu0 0
  %1872 = vperm.xlu0 %1871, %v1866
  %v1873 = vpop.permute.xlu0 %1872
  %1876 = vset.pattern.permute.xlu0 0
  %1877 = vperm.xlu0 %1876, %v1867
  %v1878 = vpop.permute.xlu0 %1877
  %1881 = vset.pattern.permute.xlu0 0
  %1882 = vperm.xlu0 %1881, %v1868
  %v1883 = vpop.permute.xlu0 %1882
  %1886 = vset.pattern.permute.xlu0 0
  %1887 = vperm.xlu0 %1886, %v1869
  %v1888 = vpop.permute.xlu0 %1887
  %v1891 = vsel %vm325, %v1861, 0
  %v1894 = vsel %vm325, %v1862, 0
  %v1897 = vsel %vm325, %v1863, 0
  %v1900 = vsel %vm325, %v1864, 0
  %1902 = vmatpush.msra.mxu0 0.0
  %1903 = vmatpush.msra.mxu0 0.0
  %1904 = vmatpush.msra.mxu0 0.0
  %1905 = vmatpush.msra.mxu0 0.0
  %1906 = vmatpush.msra.mxu0 0.0
  %1907 = vmatpush.msra.mxu0 0.0
  %1908 = vmatpush.msra.mxu0 0.0
  %1909 = vmatpush.msra.mxu0 0.0
  %1910 = vmatpush.msra.mxu0 %v1859
  %1911 = vmatpush.msra.mxu0 %v1858
  %1912 = vmatpush.msra.mxu0 %v1857
  %1913 = vmatpush.msra.mxu0 %v1856
  %1914 = vmatpush.msra.mxu0 %v1855
  %1915 = vmatpush.msra.mxu0 %v1854
  %1916 = vmatpush.msra.mxu0 %v1853
  %1917 = vmatpush.msra.mxu0 %v1852
  %1918 = vmatmul.f32.gmra.mxu0 %v1891
  %v1919 = vpop.f32.mrf.mxu0
  %v1920 = vadd.f32 %v1873, %v1919
  %1921 = vmatmul.f32.gmra.mxu0 %v1894
  %v1922 = vpop.f32.mrf.mxu0
  %v1923 = vadd.f32 %v1878, %v1922
  %1924 = vmatmul.f32.gmra.mxu0 %v1897
  %v1925 = vpop.f32.mrf.mxu0
  %v1926 = vadd.f32 %v1883, %v1925
  %1927 = vmatmul.f32.gmra.mxu0 %v1900
  %v1928 = vpop.f32.mrf.mxu0
  %v1929 = vadd.f32 %v1888, %v1928
  %1930 = vdwg.mxu0
  %v1931 = vtanh.pop %v1920
  %v1932 = vtanh.pop %v1923
  %s1933 = scalar_lea.vmem %s8, 64
  %v1934 = vld [vmem:[%s1933] sm:$0xff]
  %v1935 = vld [vmem:[%s1933 + $0x8] sm:$0xff]
  %1937 = vset.pattern.permute.xlu0 0
  %1938 = vperm.xlu0 %1937, %v1934
  %v1939 = vpop.permute.xlu0 %1938
  %1942 = vset.pattern.permute.xlu0 0
  %1943 = vperm.xlu0 %1942, %v1935
  %v1944 = vpop.permute.xlu0 %1943
  %v1946 = vmul.f32 %v1931, %v1939
  %v1947 = vmul.f32 %v1932, %v1944
  %v1948 = vmul.f32 %v1946, 1.442695
  %v1949 = vpow.pop %v1948
  %v1950 = vmul.f32 %v1947, 1.442695
  %v1951 = vpow.pop %v1950
  %v1952 = vmul.f32 %v1588, %v1949
  %v1953 = vmul.f32 %v1589, %v1951
  %v1954 = vadd.f32 %v1952, %v1926
  %v1955 = vadd.f32 %v1953, %v1929
  %v1956 = vadd.f32 %v1946, %v1947
  %v1957 = vrot.slane %v1956, 4
  %v1958 = vadd.f32 %v1956, %v1957
  %v1959 = vrot.slane %v1958, 2
  %v1960 = vadd.f32 %v1958, %v1959
  %v1961 = vrot.slane %v1960, 1
  %v1962 = vadd.f32 %v1960, %v1961
  %v1963 = vadd.f32 %v1597, %v1962
  %s1964 = scalar_lea.vmem %s2, 320
  %v1965 = vld [vmem:[%s1964] sm:$0xff]
  %v1966 = vld [vmem:[%s1964 + $0x8] sm:$0xff]
  %v1967 = vld [vmem:[%s1964 + $0x10] sm:$0xff]
  %v1968 = vld [vmem:[%s1964 + $0x18] sm:$0xff]
  %v1969 = vld [vmem:[%s1964 + $0x20] sm:$0xff]
  %v1970 = vld [vmem:[%s1964 + $0x28] sm:$0xff]
  %v1971 = vld [vmem:[%s1964 + $0x30] sm:$0xff]
  %v1972 = vld [vmem:[%s1964 + $0x38] sm:$0xff]
  %s1973 = scalar_lea.vmem %s3, 320
  %v1974 = vld [vmem:[%s1973] sm:$0xff]
  %v1975 = vld [vmem:[%s1973 + $0x8] sm:$0xff]
  %v1976 = vld [vmem:[%s1973 + $0x10] sm:$0xff]
  %v1977 = vld [vmem:[%s1973 + $0x18] sm:$0xff]
  %v1978 = vld [vmem:[%s1973 + $0x20] sm:$0xff]
  %v1979 = vld [vmem:[%s1973 + $0x28] sm:$0xff]
  %v1980 = vld [vmem:[%s1973 + $0x30] sm:$0xff]
  %v1981 = vld [vmem:[%s1973 + $0x38] sm:$0xff]
  %1983 = vset.pattern.permute.xlu0 0
  %1984 = vperm.xlu0 %1983, %v1974
  %v1985 = vpop.permute.xlu0 %1984
  %1988 = vset.pattern.permute.xlu0 0
  %1989 = vperm.xlu0 %1988, %v1975
  %v1990 = vpop.permute.xlu0 %1989
  %1993 = vset.pattern.permute.xlu0 0
  %1994 = vperm.xlu0 %1993, %v1976
  %v1995 = vpop.permute.xlu0 %1994
  %1998 = vset.pattern.permute.xlu0 0
  %1999 = vperm.xlu0 %1998, %v1977
  %v2000 = vpop.permute.xlu0 %1999
  %2003 = vset.pattern.permute.xlu0 0
  %2004 = vperm.xlu0 %2003, %v1978
  %v2005 = vpop.permute.xlu0 %2004
  %2008 = vset.pattern.permute.xlu0 0
  %2009 = vperm.xlu0 %2008, %v1979
  %v2010 = vpop.permute.xlu0 %2009
  %2013 = vset.pattern.permute.xlu0 0
  %2014 = vperm.xlu0 %2013, %v1980
  %v2015 = vpop.permute.xlu0 %2014
  %2018 = vset.pattern.permute.xlu0 0
  %2019 = vperm.xlu0 %2018, %v1981
  %v2020 = vpop.permute.xlu0 %2019
  %v2023 = vsel %vm61, %v1965, 0
  %v2026 = vsel %vm61, %v1966, 0
  %v2029 = vsel %vm61, %v1967, 0
  %v2032 = vsel %vm61, %v1968, 0
  %v2035 = vsel %vm61, %v1969, 0
  %v2038 = vsel %vm61, %v1970, 0
  %v2041 = vsel %vm61, %v1971, 0
  %v2044 = vsel %vm61, %v1972, 0
  %2046 = vmatpush.msra.mxu0 0.0
  %2047 = vmatpush.msra.mxu0 0.0
  %2048 = vmatpush.msra.mxu0 0.0
  %2049 = vmatpush.msra.mxu0 0.0
  %2050 = vmatpush.msra.mxu0 0.0
  %2051 = vmatpush.msra.mxu0 0.0
  %2052 = vmatpush.msra.mxu0 0.0
  %2053 = vmatpush.msra.mxu0 0.0
  %2054 = vmatpush.msra.mxu0 0.0
  %2055 = vmatpush.msra.mxu0 0.0
  %2056 = vmatpush.msra.mxu0 0.0
  %2057 = vmatpush.msra.mxu0 0.0
  %2058 = vmatpush.msra.mxu0 0.0
  %2059 = vmatpush.msra.mxu0 0.0
  %2060 = vmatpush.msra.mxu0 %v1955
  %2061 = vmatpush.msra.mxu0 %v1954
  %2062 = vmatmul.f32.gmra.mxu0 %v2023
  %v2063 = vpop.f32.mrf.mxu0
  %v2064 = vadd.f32 %v1985, %v2063
  %2065 = vmatmul.f32.gmra.mxu0 %v2026
  %v2066 = vpop.f32.mrf.mxu0
  %v2067 = vadd.f32 %v1990, %v2066
  %2068 = vmatmul.f32.gmra.mxu0 %v2029
  %v2069 = vpop.f32.mrf.mxu0
  %v2070 = vadd.f32 %v1995, %v2069
  %2071 = vmatmul.f32.gmra.mxu0 %v2032
  %v2072 = vpop.f32.mrf.mxu0
  %v2073 = vadd.f32 %v2000, %v2072
  %2074 = vmatmul.f32.gmra.mxu0 %v2035
  %v2075 = vpop.f32.mrf.mxu0
  %v2076 = vadd.f32 %v2005, %v2075
  %2077 = vmatmul.f32.gmra.mxu0 %v2038
  %v2078 = vpop.f32.mrf.mxu0
  %v2079 = vadd.f32 %v2010, %v2078
  %2080 = vmatmul.f32.gmra.mxu0 %v2041
  %v2081 = vpop.f32.mrf.mxu0
  %v2082 = vadd.f32 %v2015, %v2081
  %2083 = vmatmul.f32.gmra.mxu0 %v2044
  %v2084 = vpop.f32.mrf.mxu0
  %v2085 = vadd.f32 %v2020, %v2084
  %2086 = vdwg.mxu0
  %v2087 = vmax.f32 %v2064, 0.0
  %v2088 = vmax.f32 %v2067, 0.0
  %v2089 = vmax.f32 %v2070, 0.0
  %v2090 = vmax.f32 %v2073, 0.0
  %v2091 = vmax.f32 %v2076, 0.0
  %v2092 = vmax.f32 %v2079, 0.0
  %v2093 = vmax.f32 %v2082, 0.0
  %v2094 = vmax.f32 %v2085, 0.0
  %s2095 = scalar_lea.vmem %s4, 320
  %v2096 = vld [vmem:[%s2095] sm:$0xff]
  %v2097 = vld [vmem:[%s2095 + $0x8] sm:$0xff]
  %v2098 = vld [vmem:[%s2095 + $0x10] sm:$0xff]
  %v2099 = vld [vmem:[%s2095 + $0x18] sm:$0xff]
  %v2100 = vld [vmem:[%s2095 + $0x20] sm:$0xff]
  %v2101 = vld [vmem:[%s2095 + $0x28] sm:$0xff]
  %v2102 = vld [vmem:[%s2095 + $0x30] sm:$0xff]
  %v2103 = vld [vmem:[%s2095 + $0x38] sm:$0xff]
  %s2104 = scalar_lea.vmem %s5, 320
  %v2105 = vld [vmem:[%s2104] sm:$0xff]
  %v2106 = vld [vmem:[%s2104 + $0x8] sm:$0xff]
  %v2107 = vld [vmem:[%s2104 + $0x10] sm:$0xff]
  %v2108 = vld [vmem:[%s2104 + $0x18] sm:$0xff]
  %v2109 = vld [vmem:[%s2104 + $0x20] sm:$0xff]
  %v2110 = vld [vmem:[%s2104 + $0x28] sm:$0xff]
  %v2111 = vld [vmem:[%s2104 + $0x30] sm:$0xff]
  %v2112 = vld [vmem:[%s2104 + $0x38] sm:$0xff]
  %2114 = vset.pattern.permute.xlu0 0
  %2115 = vperm.xlu0 %2114, %v2105
  %v2116 = vpop.permute.xlu0 %2115
  %2119 = vset.pattern.permute.xlu0 0
  %2120 = vperm.xlu0 %2119, %v2106
  %v2121 = vpop.permute.xlu0 %2120
  %2124 = vset.pattern.permute.xlu0 0
  %2125 = vperm.xlu0 %2124, %v2107
  %v2126 = vpop.permute.xlu0 %2125
  %2129 = vset.pattern.permute.xlu0 0
  %2130 = vperm.xlu0 %2129, %v2108
  %v2131 = vpop.permute.xlu0 %2130
  %2134 = vset.pattern.permute.xlu0 0
  %2135 = vperm.xlu0 %2134, %v2109
  %v2136 = vpop.permute.xlu0 %2135
  %2139 = vset.pattern.permute.xlu0 0
  %2140 = vperm.xlu0 %2139, %v2110
  %v2141 = vpop.permute.xlu0 %2140
  %2144 = vset.pattern.permute.xlu0 0
  %2145 = vperm.xlu0 %2144, %v2111
  %v2146 = vpop.permute.xlu0 %2145
  %2149 = vset.pattern.permute.xlu0 0
  %2150 = vperm.xlu0 %2149, %v2112
  %v2151 = vpop.permute.xlu0 %2150
  %v2154 = vsel %vm325, %v2096, 0
  %v2157 = vsel %vm325, %v2097, 0
  %v2160 = vsel %vm325, %v2098, 0
  %v2163 = vsel %vm325, %v2099, 0
  %v2166 = vsel %vm325, %v2100, 0
  %v2169 = vsel %vm325, %v2101, 0
  %v2172 = vsel %vm325, %v2102, 0
  %v2175 = vsel %vm325, %v2103, 0
  %2177 = vmatpush.msra.mxu0 0.0
  %2178 = vmatpush.msra.mxu0 0.0
  %2179 = vmatpush.msra.mxu0 0.0
  %2180 = vmatpush.msra.mxu0 0.0
  %2181 = vmatpush.msra.mxu0 0.0
  %2182 = vmatpush.msra.mxu0 0.0
  %2183 = vmatpush.msra.mxu0 0.0
  %2184 = vmatpush.msra.mxu0 0.0
  %2185 = vmatpush.msra.mxu0 %v2094
  %2186 = vmatpush.msra.mxu0 %v2093
  %2187 = vmatpush.msra.mxu0 %v2092
  %2188 = vmatpush.msra.mxu0 %v2091
  %2189 = vmatpush.msra.mxu0 %v2090
  %2190 = vmatpush.msra.mxu0 %v2089
  %2191 = vmatpush.msra.mxu0 %v2088
  %2192 = vmatpush.msra.mxu0 %v2087
  %2193 = vmatmul.f32.gmra.mxu0 %v2154
  %v2194 = vpop.f32.mrf.mxu0
  %v2195 = vadd.f32 %v2116, %v2194
  %2196 = vmatmul.f32.gmra.mxu0 %v2157
  %v2197 = vpop.f32.mrf.mxu0
  %v2198 = vadd.f32 %v2121, %v2197
  %2199 = vmatmul.f32.gmra.mxu0 %v2160
  %v2200 = vpop.f32.mrf.mxu0
  %v2201 = vadd.f32 %v2126, %v2200
  %2202 = vmatmul.f32.gmra.mxu0 %v2163
  %v2203 = vpop.f32.mrf.mxu0
  %v2204 = vadd.f32 %v2131, %v2203
  %2205 = vmatmul.f32.gmra.mxu0 %v2166
  %v2206 = vpop.f32.mrf.mxu0
  %v2207 = vadd.f32 %v2136, %v2206
  %2208 = vmatmul.f32.gmra.mxu0 %v2169
  %v2209 = vpop.f32.mrf.mxu0
  %v2210 = vadd.f32 %v2141, %v2209
  %2211 = vmatmul.f32.gmra.mxu0 %v2172
  %v2212 = vpop.f32.mrf.mxu0
  %v2213 = vadd.f32 %v2146, %v2212
  %2214 = vmatmul.f32.gmra.mxu0 %v2175
  %v2215 = vpop.f32.mrf.mxu0
  %v2216 = vadd.f32 %v2151, %v2215
  %2217 = vdwg.mxu0
  %v2218 = vmax.f32 %v2195, 0.0
  %v2219 = vmax.f32 %v2198, 0.0
  %v2220 = vmax.f32 %v2201, 0.0
  %v2221 = vmax.f32 %v2204, 0.0
  %v2222 = vmax.f32 %v2207, 0.0
  %v2223 = vmax.f32 %v2210, 0.0
  %v2224 = vmax.f32 %v2213, 0.0
  %v2225 = vmax.f32 %v2216, 0.0
  %s2226 = scalar_lea.vmem %s6, 160
  %v2227 = vld [vmem:[%s2226] sm:$0xff]
  %v2228 = vld [vmem:[%s2226 + $0x8] sm:$0xff]
  %v2229 = vld [vmem:[%s2226 + $0x10] sm:$0xff]
  %v2230 = vld [vmem:[%s2226 + $0x18] sm:$0xff]
  %s2231 = scalar_lea.vmem %s7, 160
  %v2232 = vld [vmem:[%s2231] sm:$0xff]
  %v2233 = vld [vmem:[%s2231 + $0x8] sm:$0xff]
  %v2234 = vld [vmem:[%s2231 + $0x10] sm:$0xff]
  %v2235 = vld [vmem:[%s2231 + $0x18] sm:$0xff]
  %2237 = vset.pattern.permute.xlu0 0
  %2238 = vperm.xlu0 %2237, %v2232
  %v2239 = vpop.permute.xlu0 %2238
  %2242 = vset.pattern.permute.xlu0 0
  %2243 = vperm.xlu0 %2242, %v2233
  %v2244 = vpop.permute.xlu0 %2243
  %2247 = vset.pattern.permute.xlu0 0
  %2248 = vperm.xlu0 %2247, %v2234
  %v2249 = vpop.permute.xlu0 %2248
  %2252 = vset.pattern.permute.xlu0 0
  %2253 = vperm.xlu0 %2252, %v2235
  %v2254 = vpop.permute.xlu0 %2253
  %v2257 = vsel %vm325, %v2227, 0
  %v2260 = vsel %vm325, %v2228, 0
  %v2263 = vsel %vm325, %v2229, 0
  %v2266 = vsel %vm325, %v2230, 0
  %2268 = vmatpush.msra.mxu0 0.0
  %2269 = vmatpush.msra.mxu0 0.0
  %2270 = vmatpush.msra.mxu0 0.0
  %2271 = vmatpush.msra.mxu0 0.0
  %2272 = vmatpush.msra.mxu0 0.0
  %2273 = vmatpush.msra.mxu0 0.0
  %2274 = vmatpush.msra.mxu0 0.0
  %2275 = vmatpush.msra.mxu0 0.0
  %2276 = vmatpush.msra.mxu0 %v2225
  %2277 = vmatpush.msra.mxu0 %v2224
  %2278 = vmatpush.msra.mxu0 %v2223
  %2279 = vmatpush.msra.mxu0 %v2222
  %2280 = vmatpush.msra.mxu0 %v2221
  %2281 = vmatpush.msra.mxu0 %v2220
  %2282 = vmatpush.msra.mxu0 %v2219
  %2283 = vmatpush.msra.mxu0 %v2218
  %2284 = vmatmul.f32.gmra.mxu0 %v2257
  %v2285 = vpop.f32.mrf.mxu0
  %v2286 = vadd.f32 %v2239, %v2285
  %2287 = vmatmul.f32.gmra.mxu0 %v2260
  %v2288 = vpop.f32.mrf.mxu0
  %v2289 = vadd.f32 %v2244, %v2288
  %2290 = vmatmul.f32.gmra.mxu0 %v2263
  %v2291 = vpop.f32.mrf.mxu0
  %v2292 = vadd.f32 %v2249, %v2291
  %2293 = vmatmul.f32.gmra.mxu0 %v2266
  %v2294 = vpop.f32.mrf.mxu0
  %v2295 = vadd.f32 %v2254, %v2294
  %2296 = vdwg.mxu0
  %v2297 = vtanh.pop %v2286
  %v2298 = vtanh.pop %v2289
  %s2299 = scalar_lea.vmem %s8, 80
  %v2300 = vld [vmem:[%s2299] sm:$0xff]
  %v2301 = vld [vmem:[%s2299 + $0x8] sm:$0xff]
  %2303 = vset.pattern.permute.xlu0 0
  %2304 = vperm.xlu0 %2303, %v2300
  %v2305 = vpop.permute.xlu0 %2304
  %2308 = vset.pattern.permute.xlu0 0
  %2309 = vperm.xlu0 %2308, %v2301
  %v2310 = vpop.permute.xlu0 %2309
  %v2312 = vmul.f32 %v2297, %v2305
  %v2313 = vmul.f32 %v2298, %v2310
  %v2314 = vmul.f32 %v2312, 1.442695
  %v2315 = vpow.pop %v2314
  %v2316 = vmul.f32 %v2313, 1.442695
  %v2317 = vpow.pop %v2316
  %v2318 = vmul.f32 %v1954, %v2315
  %v2319 = vmul.f32 %v1955, %v2317
  %v2320 = vadd.f32 %v2318, %v2292
  %v2321 = vadd.f32 %v2319, %v2295
  %v2322 = vadd.f32 %v2312, %v2313
  %v2323 = vrot.slane %v2322, 4
  %v2324 = vadd.f32 %v2322, %v2323
  %v2325 = vrot.slane %v2324, 2
  %v2326 = vadd.f32 %v2324, %v2325
  %v2327 = vrot.slane %v2326, 1
  %v2328 = vadd.f32 %v2326, %v2327
  %v2329 = vadd.f32 %v1963, %v2328
  %s2330 = scalar_lea.vmem %s2, 384
  %v2331 = vld [vmem:[%s2330] sm:$0xff]
  %v2332 = vld [vmem:[%s2330 + $0x8] sm:$0xff]
  %v2333 = vld [vmem:[%s2330 + $0x10] sm:$0xff]
  %v2334 = vld [vmem:[%s2330 + $0x18] sm:$0xff]
  %v2335 = vld [vmem:[%s2330 + $0x20] sm:$0xff]
  %v2336 = vld [vmem:[%s2330 + $0x28] sm:$0xff]
  %v2337 = vld [vmem:[%s2330 + $0x30] sm:$0xff]
  %v2338 = vld [vmem:[%s2330 + $0x38] sm:$0xff]
  %s2339 = scalar_lea.vmem %s3, 384
  %v2340 = vld [vmem:[%s2339] sm:$0xff]
  %v2341 = vld [vmem:[%s2339 + $0x8] sm:$0xff]
  %v2342 = vld [vmem:[%s2339 + $0x10] sm:$0xff]
  %v2343 = vld [vmem:[%s2339 + $0x18] sm:$0xff]
  %v2344 = vld [vmem:[%s2339 + $0x20] sm:$0xff]
  %v2345 = vld [vmem:[%s2339 + $0x28] sm:$0xff]
  %v2346 = vld [vmem:[%s2339 + $0x30] sm:$0xff]
  %v2347 = vld [vmem:[%s2339 + $0x38] sm:$0xff]
  %2349 = vset.pattern.permute.xlu0 0
  %2350 = vperm.xlu0 %2349, %v2340
  %v2351 = vpop.permute.xlu0 %2350
  %2354 = vset.pattern.permute.xlu0 0
  %2355 = vperm.xlu0 %2354, %v2341
  %v2356 = vpop.permute.xlu0 %2355
  %2359 = vset.pattern.permute.xlu0 0
  %2360 = vperm.xlu0 %2359, %v2342
  %v2361 = vpop.permute.xlu0 %2360
  %2364 = vset.pattern.permute.xlu0 0
  %2365 = vperm.xlu0 %2364, %v2343
  %v2366 = vpop.permute.xlu0 %2365
  %2369 = vset.pattern.permute.xlu0 0
  %2370 = vperm.xlu0 %2369, %v2344
  %v2371 = vpop.permute.xlu0 %2370
  %2374 = vset.pattern.permute.xlu0 0
  %2375 = vperm.xlu0 %2374, %v2345
  %v2376 = vpop.permute.xlu0 %2375
  %2379 = vset.pattern.permute.xlu0 0
  %2380 = vperm.xlu0 %2379, %v2346
  %v2381 = vpop.permute.xlu0 %2380
  %2384 = vset.pattern.permute.xlu0 0
  %2385 = vperm.xlu0 %2384, %v2347
  %v2386 = vpop.permute.xlu0 %2385
  %v2389 = vsel %vm61, %v2331, 0
  %v2392 = vsel %vm61, %v2332, 0
  %v2395 = vsel %vm61, %v2333, 0
  %v2398 = vsel %vm61, %v2334, 0
  %v2401 = vsel %vm61, %v2335, 0
  %v2404 = vsel %vm61, %v2336, 0
  %v2407 = vsel %vm61, %v2337, 0
  %v2410 = vsel %vm61, %v2338, 0
  %2412 = vmatpush.msra.mxu0 0.0
  %2413 = vmatpush.msra.mxu0 0.0
  %2414 = vmatpush.msra.mxu0 0.0
  %2415 = vmatpush.msra.mxu0 0.0
  %2416 = vmatpush.msra.mxu0 0.0
  %2417 = vmatpush.msra.mxu0 0.0
  %2418 = vmatpush.msra.mxu0 0.0
  %2419 = vmatpush.msra.mxu0 0.0
  %2420 = vmatpush.msra.mxu0 0.0
  %2421 = vmatpush.msra.mxu0 0.0
  %2422 = vmatpush.msra.mxu0 0.0
  %2423 = vmatpush.msra.mxu0 0.0
  %2424 = vmatpush.msra.mxu0 0.0
  %2425 = vmatpush.msra.mxu0 0.0
  %2426 = vmatpush.msra.mxu0 %v2321
  %2427 = vmatpush.msra.mxu0 %v2320
  %2428 = vmatmul.f32.gmra.mxu0 %v2389
  %v2429 = vpop.f32.mrf.mxu0
  %v2430 = vadd.f32 %v2351, %v2429
  %2431 = vmatmul.f32.gmra.mxu0 %v2392
  %v2432 = vpop.f32.mrf.mxu0
  %v2433 = vadd.f32 %v2356, %v2432
  %2434 = vmatmul.f32.gmra.mxu0 %v2395
  %v2435 = vpop.f32.mrf.mxu0
  %v2436 = vadd.f32 %v2361, %v2435
  %2437 = vmatmul.f32.gmra.mxu0 %v2398
  %v2438 = vpop.f32.mrf.mxu0
  %v2439 = vadd.f32 %v2366, %v2438
  %2440 = vmatmul.f32.gmra.mxu0 %v2401
  %v2441 = vpop.f32.mrf.mxu0
  %v2442 = vadd.f32 %v2371, %v2441
  %2443 = vmatmul.f32.gmra.mxu0 %v2404
  %v2444 = vpop.f32.mrf.mxu0
  %v2445 = vadd.f32 %v2376, %v2444
  %2446 = vmatmul.f32.gmra.mxu0 %v2407
  %v2447 = vpop.f32.mrf.mxu0
  %v2448 = vadd.f32 %v2381, %v2447
  %2449 = vmatmul.f32.gmra.mxu0 %v2410
  %v2450 = vpop.f32.mrf.mxu0
  %v2451 = vadd.f32 %v2386, %v2450
  %2452 = vdwg.mxu0
  %v2453 = vmax.f32 %v2430, 0.0
  %v2454 = vmax.f32 %v2433, 0.0
  %v2455 = vmax.f32 %v2436, 0.0
  %v2456 = vmax.f32 %v2439, 0.0
  %v2457 = vmax.f32 %v2442, 0.0
  %v2458 = vmax.f32 %v2445, 0.0
  %v2459 = vmax.f32 %v2448, 0.0
  %v2460 = vmax.f32 %v2451, 0.0
  %s2461 = scalar_lea.vmem %s4, 384
  %v2462 = vld [vmem:[%s2461] sm:$0xff]
  %v2463 = vld [vmem:[%s2461 + $0x8] sm:$0xff]
  %v2464 = vld [vmem:[%s2461 + $0x10] sm:$0xff]
  %v2465 = vld [vmem:[%s2461 + $0x18] sm:$0xff]
  %v2466 = vld [vmem:[%s2461 + $0x20] sm:$0xff]
  %v2467 = vld [vmem:[%s2461 + $0x28] sm:$0xff]
  %v2468 = vld [vmem:[%s2461 + $0x30] sm:$0xff]
  %v2469 = vld [vmem:[%s2461 + $0x38] sm:$0xff]
  %s2470 = scalar_lea.vmem %s5, 384
  %v2471 = vld [vmem:[%s2470] sm:$0xff]
  %v2472 = vld [vmem:[%s2470 + $0x8] sm:$0xff]
  %v2473 = vld [vmem:[%s2470 + $0x10] sm:$0xff]
  %v2474 = vld [vmem:[%s2470 + $0x18] sm:$0xff]
  %v2475 = vld [vmem:[%s2470 + $0x20] sm:$0xff]
  %v2476 = vld [vmem:[%s2470 + $0x28] sm:$0xff]
  %v2477 = vld [vmem:[%s2470 + $0x30] sm:$0xff]
  %v2478 = vld [vmem:[%s2470 + $0x38] sm:$0xff]
  %2480 = vset.pattern.permute.xlu0 0
  %2481 = vperm.xlu0 %2480, %v2471
  %v2482 = vpop.permute.xlu0 %2481
  %2485 = vset.pattern.permute.xlu0 0
  %2486 = vperm.xlu0 %2485, %v2472
  %v2487 = vpop.permute.xlu0 %2486
  %2490 = vset.pattern.permute.xlu0 0
  %2491 = vperm.xlu0 %2490, %v2473
  %v2492 = vpop.permute.xlu0 %2491
  %2495 = vset.pattern.permute.xlu0 0
  %2496 = vperm.xlu0 %2495, %v2474
  %v2497 = vpop.permute.xlu0 %2496
  %2500 = vset.pattern.permute.xlu0 0
  %2501 = vperm.xlu0 %2500, %v2475
  %v2502 = vpop.permute.xlu0 %2501
  %2505 = vset.pattern.permute.xlu0 0
  %2506 = vperm.xlu0 %2505, %v2476
  %v2507 = vpop.permute.xlu0 %2506
  %2510 = vset.pattern.permute.xlu0 0
  %2511 = vperm.xlu0 %2510, %v2477
  %v2512 = vpop.permute.xlu0 %2511
  %2515 = vset.pattern.permute.xlu0 0
  %2516 = vperm.xlu0 %2515, %v2478
  %v2517 = vpop.permute.xlu0 %2516
  %v2520 = vsel %vm325, %v2462, 0
  %v2523 = vsel %vm325, %v2463, 0
  %v2526 = vsel %vm325, %v2464, 0
  %v2529 = vsel %vm325, %v2465, 0
  %v2532 = vsel %vm325, %v2466, 0
  %v2535 = vsel %vm325, %v2467, 0
  %v2538 = vsel %vm325, %v2468, 0
  %v2541 = vsel %vm325, %v2469, 0
  %2543 = vmatpush.msra.mxu0 0.0
  %2544 = vmatpush.msra.mxu0 0.0
  %2545 = vmatpush.msra.mxu0 0.0
  %2546 = vmatpush.msra.mxu0 0.0
  %2547 = vmatpush.msra.mxu0 0.0
  %2548 = vmatpush.msra.mxu0 0.0
  %2549 = vmatpush.msra.mxu0 0.0
  %2550 = vmatpush.msra.mxu0 0.0
  %2551 = vmatpush.msra.mxu0 %v2460
  %2552 = vmatpush.msra.mxu0 %v2459
  %2553 = vmatpush.msra.mxu0 %v2458
  %2554 = vmatpush.msra.mxu0 %v2457
  %2555 = vmatpush.msra.mxu0 %v2456
  %2556 = vmatpush.msra.mxu0 %v2455
  %2557 = vmatpush.msra.mxu0 %v2454
  %2558 = vmatpush.msra.mxu0 %v2453
  %2559 = vmatmul.f32.gmra.mxu0 %v2520
  %v2560 = vpop.f32.mrf.mxu0
  %v2561 = vadd.f32 %v2482, %v2560
  %2562 = vmatmul.f32.gmra.mxu0 %v2523
  %v2563 = vpop.f32.mrf.mxu0
  %v2564 = vadd.f32 %v2487, %v2563
  %2565 = vmatmul.f32.gmra.mxu0 %v2526
  %v2566 = vpop.f32.mrf.mxu0
  %v2567 = vadd.f32 %v2492, %v2566
  %2568 = vmatmul.f32.gmra.mxu0 %v2529
  %v2569 = vpop.f32.mrf.mxu0
  %v2570 = vadd.f32 %v2497, %v2569
  %2571 = vmatmul.f32.gmra.mxu0 %v2532
  %v2572 = vpop.f32.mrf.mxu0
  %v2573 = vadd.f32 %v2502, %v2572
  %2574 = vmatmul.f32.gmra.mxu0 %v2535
  %v2575 = vpop.f32.mrf.mxu0
  %v2576 = vadd.f32 %v2507, %v2575
  %2577 = vmatmul.f32.gmra.mxu0 %v2538
  %v2578 = vpop.f32.mrf.mxu0
  %v2579 = vadd.f32 %v2512, %v2578
  %2580 = vmatmul.f32.gmra.mxu0 %v2541
  %v2581 = vpop.f32.mrf.mxu0
  %v2582 = vadd.f32 %v2517, %v2581
  %2583 = vdwg.mxu0
  %v2584 = vmax.f32 %v2561, 0.0
  %v2585 = vmax.f32 %v2564, 0.0
  %v2586 = vmax.f32 %v2567, 0.0
  %v2587 = vmax.f32 %v2570, 0.0
  %v2588 = vmax.f32 %v2573, 0.0
  %v2589 = vmax.f32 %v2576, 0.0
  %v2590 = vmax.f32 %v2579, 0.0
  %v2591 = vmax.f32 %v2582, 0.0
  %s2592 = scalar_lea.vmem %s6, 192
  %v2593 = vld [vmem:[%s2592] sm:$0xff]
  %v2594 = vld [vmem:[%s2592 + $0x8] sm:$0xff]
  %v2595 = vld [vmem:[%s2592 + $0x10] sm:$0xff]
  %v2596 = vld [vmem:[%s2592 + $0x18] sm:$0xff]
  %s2597 = scalar_lea.vmem %s7, 192
  %v2598 = vld [vmem:[%s2597] sm:$0xff]
  %v2599 = vld [vmem:[%s2597 + $0x8] sm:$0xff]
  %v2600 = vld [vmem:[%s2597 + $0x10] sm:$0xff]
  %v2601 = vld [vmem:[%s2597 + $0x18] sm:$0xff]
  %2603 = vset.pattern.permute.xlu0 0
  %2604 = vperm.xlu0 %2603, %v2598
  %v2605 = vpop.permute.xlu0 %2604
  %2608 = vset.pattern.permute.xlu0 0
  %2609 = vperm.xlu0 %2608, %v2599
  %v2610 = vpop.permute.xlu0 %2609
  %2613 = vset.pattern.permute.xlu0 0
  %2614 = vperm.xlu0 %2613, %v2600
  %v2615 = vpop.permute.xlu0 %2614
  %2618 = vset.pattern.permute.xlu0 0
  %2619 = vperm.xlu0 %2618, %v2601
  %v2620 = vpop.permute.xlu0 %2619
  %v2623 = vsel %vm325, %v2593, 0
  %v2626 = vsel %vm325, %v2594, 0
  %v2629 = vsel %vm325, %v2595, 0
  %v2632 = vsel %vm325, %v2596, 0
  %2634 = vmatpush.msra.mxu0 0.0
  %2635 = vmatpush.msra.mxu0 0.0
  %2636 = vmatpush.msra.mxu0 0.0
  %2637 = vmatpush.msra.mxu0 0.0
  %2638 = vmatpush.msra.mxu0 0.0
  %2639 = vmatpush.msra.mxu0 0.0
  %2640 = vmatpush.msra.mxu0 0.0
  %2641 = vmatpush.msra.mxu0 0.0
  %2642 = vmatpush.msra.mxu0 %v2591
  %2643 = vmatpush.msra.mxu0 %v2590
  %2644 = vmatpush.msra.mxu0 %v2589
  %2645 = vmatpush.msra.mxu0 %v2588
  %2646 = vmatpush.msra.mxu0 %v2587
  %2647 = vmatpush.msra.mxu0 %v2586
  %2648 = vmatpush.msra.mxu0 %v2585
  %2649 = vmatpush.msra.mxu0 %v2584
  %2650 = vmatmul.f32.gmra.mxu0 %v2623
  %v2651 = vpop.f32.mrf.mxu0
  %v2652 = vadd.f32 %v2605, %v2651
  %2653 = vmatmul.f32.gmra.mxu0 %v2626
  %v2654 = vpop.f32.mrf.mxu0
  %v2655 = vadd.f32 %v2610, %v2654
  %2656 = vmatmul.f32.gmra.mxu0 %v2629
  %v2657 = vpop.f32.mrf.mxu0
  %v2658 = vadd.f32 %v2615, %v2657
  %2659 = vmatmul.f32.gmra.mxu0 %v2632
  %v2660 = vpop.f32.mrf.mxu0
  %v2661 = vadd.f32 %v2620, %v2660
  %2662 = vdwg.mxu0
  %v2663 = vtanh.pop %v2652
  %v2664 = vtanh.pop %v2655
  %s2665 = scalar_lea.vmem %s8, 96
  %v2666 = vld [vmem:[%s2665] sm:$0xff]
  %v2667 = vld [vmem:[%s2665 + $0x8] sm:$0xff]
  %2669 = vset.pattern.permute.xlu0 0
  %2670 = vperm.xlu0 %2669, %v2666
  %v2671 = vpop.permute.xlu0 %2670
  %2674 = vset.pattern.permute.xlu0 0
  %2675 = vperm.xlu0 %2674, %v2667
  %v2676 = vpop.permute.xlu0 %2675
  %v2678 = vmul.f32 %v2663, %v2671
  %v2679 = vmul.f32 %v2664, %v2676
  %v2680 = vmul.f32 %v2678, 1.442695
  %v2681 = vpow.pop %v2680
  %v2682 = vmul.f32 %v2679, 1.442695
  %v2683 = vpow.pop %v2682
  %v2684 = vmul.f32 %v2320, %v2681
  %v2685 = vmul.f32 %v2321, %v2683
  %v2686 = vadd.f32 %v2684, %v2658
  %v2687 = vadd.f32 %v2685, %v2661
  %v2688 = vadd.f32 %v2678, %v2679
  %v2689 = vrot.slane %v2688, 4
  %v2690 = vadd.f32 %v2688, %v2689
  %v2691 = vrot.slane %v2690, 2
  %v2692 = vadd.f32 %v2690, %v2691
  %v2693 = vrot.slane %v2692, 1
  %v2694 = vadd.f32 %v2692, %v2693
  %v2695 = vadd.f32 %v2329, %v2694
  %s2696 = scalar_lea.vmem %s2, 448
  %v2697 = vld [vmem:[%s2696] sm:$0xff]
  %v2698 = vld [vmem:[%s2696 + $0x8] sm:$0xff]
  %v2699 = vld [vmem:[%s2696 + $0x10] sm:$0xff]
  %v2700 = vld [vmem:[%s2696 + $0x18] sm:$0xff]
  %v2701 = vld [vmem:[%s2696 + $0x20] sm:$0xff]
  %v2702 = vld [vmem:[%s2696 + $0x28] sm:$0xff]
  %v2703 = vld [vmem:[%s2696 + $0x30] sm:$0xff]
  %v2704 = vld [vmem:[%s2696 + $0x38] sm:$0xff]
  %s2705 = scalar_lea.vmem %s3, 448
  %v2706 = vld [vmem:[%s2705] sm:$0xff]
  %v2707 = vld [vmem:[%s2705 + $0x8] sm:$0xff]
  %v2708 = vld [vmem:[%s2705 + $0x10] sm:$0xff]
  %v2709 = vld [vmem:[%s2705 + $0x18] sm:$0xff]
  %v2710 = vld [vmem:[%s2705 + $0x20] sm:$0xff]
  %v2711 = vld [vmem:[%s2705 + $0x28] sm:$0xff]
  %v2712 = vld [vmem:[%s2705 + $0x30] sm:$0xff]
  %v2713 = vld [vmem:[%s2705 + $0x38] sm:$0xff]
  %2715 = vset.pattern.permute.xlu0 0
  %2716 = vperm.xlu0 %2715, %v2706
  %v2717 = vpop.permute.xlu0 %2716
  %2720 = vset.pattern.permute.xlu0 0
  %2721 = vperm.xlu0 %2720, %v2707
  %v2722 = vpop.permute.xlu0 %2721
  %2725 = vset.pattern.permute.xlu0 0
  %2726 = vperm.xlu0 %2725, %v2708
  %v2727 = vpop.permute.xlu0 %2726
  %2730 = vset.pattern.permute.xlu0 0
  %2731 = vperm.xlu0 %2730, %v2709
  %v2732 = vpop.permute.xlu0 %2731
  %2735 = vset.pattern.permute.xlu0 0
  %2736 = vperm.xlu0 %2735, %v2710
  %v2737 = vpop.permute.xlu0 %2736
  %2740 = vset.pattern.permute.xlu0 0
  %2741 = vperm.xlu0 %2740, %v2711
  %v2742 = vpop.permute.xlu0 %2741
  %2745 = vset.pattern.permute.xlu0 0
  %2746 = vperm.xlu0 %2745, %v2712
  %v2747 = vpop.permute.xlu0 %2746
  %2750 = vset.pattern.permute.xlu0 0
  %2751 = vperm.xlu0 %2750, %v2713
  %v2752 = vpop.permute.xlu0 %2751
  %v2755 = vsel %vm61, %v2697, 0
  %v2758 = vsel %vm61, %v2698, 0
  %v2761 = vsel %vm61, %v2699, 0
  %v2764 = vsel %vm61, %v2700, 0
  %v2767 = vsel %vm61, %v2701, 0
  %v2770 = vsel %vm61, %v2702, 0
  %v2773 = vsel %vm61, %v2703, 0
  %v2776 = vsel %vm61, %v2704, 0
  %2778 = vmatpush.msra.mxu0 0.0
  %2779 = vmatpush.msra.mxu0 0.0
  %2780 = vmatpush.msra.mxu0 0.0
  %2781 = vmatpush.msra.mxu0 0.0
  %2782 = vmatpush.msra.mxu0 0.0
  %2783 = vmatpush.msra.mxu0 0.0
  %2784 = vmatpush.msra.mxu0 0.0
  %2785 = vmatpush.msra.mxu0 0.0
  %2786 = vmatpush.msra.mxu0 0.0
  %2787 = vmatpush.msra.mxu0 0.0
  %2788 = vmatpush.msra.mxu0 0.0
  %2789 = vmatpush.msra.mxu0 0.0
  %2790 = vmatpush.msra.mxu0 0.0
  %2791 = vmatpush.msra.mxu0 0.0
  %2792 = vmatpush.msra.mxu0 %v2687
  %2793 = vmatpush.msra.mxu0 %v2686
  %2794 = vmatmul.f32.gmra.mxu0 %v2755
  %v2795 = vpop.f32.mrf.mxu0
  %v2796 = vadd.f32 %v2717, %v2795
  %2797 = vmatmul.f32.gmra.mxu0 %v2758
  %v2798 = vpop.f32.mrf.mxu0
  %v2799 = vadd.f32 %v2722, %v2798
  %2800 = vmatmul.f32.gmra.mxu0 %v2761
  %v2801 = vpop.f32.mrf.mxu0
  %v2802 = vadd.f32 %v2727, %v2801
  %2803 = vmatmul.f32.gmra.mxu0 %v2764
  %v2804 = vpop.f32.mrf.mxu0
  %v2805 = vadd.f32 %v2732, %v2804
  %2806 = vmatmul.f32.gmra.mxu0 %v2767
  %v2807 = vpop.f32.mrf.mxu0
  %v2808 = vadd.f32 %v2737, %v2807
  %2809 = vmatmul.f32.gmra.mxu0 %v2770
  %v2810 = vpop.f32.mrf.mxu0
  %v2811 = vadd.f32 %v2742, %v2810
  %2812 = vmatmul.f32.gmra.mxu0 %v2773
  %v2813 = vpop.f32.mrf.mxu0
  %v2814 = vadd.f32 %v2747, %v2813
  %2815 = vmatmul.f32.gmra.mxu0 %v2776
  %v2816 = vpop.f32.mrf.mxu0
  %v2817 = vadd.f32 %v2752, %v2816
  %2818 = vdwg.mxu0
  %v2819 = vmax.f32 %v2796, 0.0
  %v2820 = vmax.f32 %v2799, 0.0
  %v2821 = vmax.f32 %v2802, 0.0
  %v2822 = vmax.f32 %v2805, 0.0
  %v2823 = vmax.f32 %v2808, 0.0
  %v2824 = vmax.f32 %v2811, 0.0
  %v2825 = vmax.f32 %v2814, 0.0
  %v2826 = vmax.f32 %v2817, 0.0
  %s2827 = scalar_lea.vmem %s4, 448
  %v2828 = vld [vmem:[%s2827] sm:$0xff]
  %v2829 = vld [vmem:[%s2827 + $0x8] sm:$0xff]
  %v2830 = vld [vmem:[%s2827 + $0x10] sm:$0xff]
  %v2831 = vld [vmem:[%s2827 + $0x18] sm:$0xff]
  %v2832 = vld [vmem:[%s2827 + $0x20] sm:$0xff]
  %v2833 = vld [vmem:[%s2827 + $0x28] sm:$0xff]
  %v2834 = vld [vmem:[%s2827 + $0x30] sm:$0xff]
  %v2835 = vld [vmem:[%s2827 + $0x38] sm:$0xff]
  %s2836 = scalar_lea.vmem %s5, 448
  %v2837 = vld [vmem:[%s2836] sm:$0xff]
  %v2838 = vld [vmem:[%s2836 + $0x8] sm:$0xff]
  %v2839 = vld [vmem:[%s2836 + $0x10] sm:$0xff]
  %v2840 = vld [vmem:[%s2836 + $0x18] sm:$0xff]
  %v2841 = vld [vmem:[%s2836 + $0x20] sm:$0xff]
  %v2842 = vld [vmem:[%s2836 + $0x28] sm:$0xff]
  %v2843 = vld [vmem:[%s2836 + $0x30] sm:$0xff]
  %v2844 = vld [vmem:[%s2836 + $0x38] sm:$0xff]
  %2846 = vset.pattern.permute.xlu0 0
  %2847 = vperm.xlu0 %2846, %v2837
  %v2848 = vpop.permute.xlu0 %2847
  %2851 = vset.pattern.permute.xlu0 0
  %2852 = vperm.xlu0 %2851, %v2838
  %v2853 = vpop.permute.xlu0 %2852
  %2856 = vset.pattern.permute.xlu0 0
  %2857 = vperm.xlu0 %2856, %v2839
  %v2858 = vpop.permute.xlu0 %2857
  %2861 = vset.pattern.permute.xlu0 0
  %2862 = vperm.xlu0 %2861, %v2840
  %v2863 = vpop.permute.xlu0 %2862
  %2866 = vset.pattern.permute.xlu0 0
  %2867 = vperm.xlu0 %2866, %v2841
  %v2868 = vpop.permute.xlu0 %2867
  %2871 = vset.pattern.permute.xlu0 0
  %2872 = vperm.xlu0 %2871, %v2842
  %v2873 = vpop.permute.xlu0 %2872
  %2876 = vset.pattern.permute.xlu0 0
  %2877 = vperm.xlu0 %2876, %v2843
  %v2878 = vpop.permute.xlu0 %2877
  %2881 = vset.pattern.permute.xlu0 0
  %2882 = vperm.xlu0 %2881, %v2844
  %v2883 = vpop.permute.xlu0 %2882
  %v2886 = vsel %vm325, %v2828, 0
  %v2889 = vsel %vm325, %v2829, 0
  %v2892 = vsel %vm325, %v2830, 0
  %v2895 = vsel %vm325, %v2831, 0
  %v2898 = vsel %vm325, %v2832, 0
  %v2901 = vsel %vm325, %v2833, 0
  %v2904 = vsel %vm325, %v2834, 0
  %v2907 = vsel %vm325, %v2835, 0
  %2909 = vmatpush.msra.mxu0 0.0
  %2910 = vmatpush.msra.mxu0 0.0
  %2911 = vmatpush.msra.mxu0 0.0
  %2912 = vmatpush.msra.mxu0 0.0
  %2913 = vmatpush.msra.mxu0 0.0
  %2914 = vmatpush.msra.mxu0 0.0
  %2915 = vmatpush.msra.mxu0 0.0
  %2916 = vmatpush.msra.mxu0 0.0
  %2917 = vmatpush.msra.mxu0 %v2826
  %2918 = vmatpush.msra.mxu0 %v2825
  %2919 = vmatpush.msra.mxu0 %v2824
  %2920 = vmatpush.msra.mxu0 %v2823
  %2921 = vmatpush.msra.mxu0 %v2822
  %2922 = vmatpush.msra.mxu0 %v2821
  %2923 = vmatpush.msra.mxu0 %v2820
  %2924 = vmatpush.msra.mxu0 %v2819
  %2925 = vmatmul.f32.gmra.mxu0 %v2886
  %v2926 = vpop.f32.mrf.mxu0
  %v2927 = vadd.f32 %v2848, %v2926
  %2928 = vmatmul.f32.gmra.mxu0 %v2889
  %v2929 = vpop.f32.mrf.mxu0
  %v2930 = vadd.f32 %v2853, %v2929
  %2931 = vmatmul.f32.gmra.mxu0 %v2892
  %v2932 = vpop.f32.mrf.mxu0
  %v2933 = vadd.f32 %v2858, %v2932
  %2934 = vmatmul.f32.gmra.mxu0 %v2895
  %v2935 = vpop.f32.mrf.mxu0
  %v2936 = vadd.f32 %v2863, %v2935
  %2937 = vmatmul.f32.gmra.mxu0 %v2898
  %v2938 = vpop.f32.mrf.mxu0
  %v2939 = vadd.f32 %v2868, %v2938
  %2940 = vmatmul.f32.gmra.mxu0 %v2901
  %v2941 = vpop.f32.mrf.mxu0
  %v2942 = vadd.f32 %v2873, %v2941
  %2943 = vmatmul.f32.gmra.mxu0 %v2904
  %v2944 = vpop.f32.mrf.mxu0
  %v2945 = vadd.f32 %v2878, %v2944
  %2946 = vmatmul.f32.gmra.mxu0 %v2907
  %v2947 = vpop.f32.mrf.mxu0
  %v2948 = vadd.f32 %v2883, %v2947
  %2949 = vdwg.mxu0
  %v2950 = vmax.f32 %v2927, 0.0
  %v2951 = vmax.f32 %v2930, 0.0
  %v2952 = vmax.f32 %v2933, 0.0
  %v2953 = vmax.f32 %v2936, 0.0
  %v2954 = vmax.f32 %v2939, 0.0
  %v2955 = vmax.f32 %v2942, 0.0
  %v2956 = vmax.f32 %v2945, 0.0
  %v2957 = vmax.f32 %v2948, 0.0
  %s2958 = scalar_lea.vmem %s6, 224
  %v2959 = vld [vmem:[%s2958] sm:$0xff]
  %v2960 = vld [vmem:[%s2958 + $0x8] sm:$0xff]
  %v2961 = vld [vmem:[%s2958 + $0x10] sm:$0xff]
  %v2962 = vld [vmem:[%s2958 + $0x18] sm:$0xff]
  %s2963 = scalar_lea.vmem %s7, 224
  %v2964 = vld [vmem:[%s2963] sm:$0xff]
  %v2965 = vld [vmem:[%s2963 + $0x8] sm:$0xff]
  %v2966 = vld [vmem:[%s2963 + $0x10] sm:$0xff]
  %v2967 = vld [vmem:[%s2963 + $0x18] sm:$0xff]
  %2969 = vset.pattern.permute.xlu0 0
  %2970 = vperm.xlu0 %2969, %v2964
  %v2971 = vpop.permute.xlu0 %2970
  %2974 = vset.pattern.permute.xlu0 0
  %2975 = vperm.xlu0 %2974, %v2965
  %v2976 = vpop.permute.xlu0 %2975
  %2979 = vset.pattern.permute.xlu0 0
  %2980 = vperm.xlu0 %2979, %v2966
  %v2981 = vpop.permute.xlu0 %2980
  %2984 = vset.pattern.permute.xlu0 0
  %2985 = vperm.xlu0 %2984, %v2967
  %v2986 = vpop.permute.xlu0 %2985
  %v2989 = vsel %vm325, %v2959, 0
  %v2992 = vsel %vm325, %v2960, 0
  %v2995 = vsel %vm325, %v2961, 0
  %v2998 = vsel %vm325, %v2962, 0
  %3000 = vmatpush.msra.mxu0 0.0
  %3001 = vmatpush.msra.mxu0 0.0
  %3002 = vmatpush.msra.mxu0 0.0
  %3003 = vmatpush.msra.mxu0 0.0
  %3004 = vmatpush.msra.mxu0 0.0
  %3005 = vmatpush.msra.mxu0 0.0
  %3006 = vmatpush.msra.mxu0 0.0
  %3007 = vmatpush.msra.mxu0 0.0
  %3008 = vmatpush.msra.mxu0 %v2957
  %3009 = vmatpush.msra.mxu0 %v2956
  %3010 = vmatpush.msra.mxu0 %v2955
  %3011 = vmatpush.msra.mxu0 %v2954
  %3012 = vmatpush.msra.mxu0 %v2953
  %3013 = vmatpush.msra.mxu0 %v2952
  %3014 = vmatpush.msra.mxu0 %v2951
  %3015 = vmatpush.msra.mxu0 %v2950
  %3016 = vmatmul.f32.gmra.mxu0 %v2989
  %v3017 = vpop.f32.mrf.mxu0
  %v3018 = vadd.f32 %v2971, %v3017
  %3019 = vmatmul.f32.gmra.mxu0 %v2992
  %v3020 = vpop.f32.mrf.mxu0
  %v3021 = vadd.f32 %v2976, %v3020
  %3022 = vmatmul.f32.gmra.mxu0 %v2995
  %v3023 = vpop.f32.mrf.mxu0
  %v3024 = vadd.f32 %v2981, %v3023
  %3025 = vmatmul.f32.gmra.mxu0 %v2998
  %v3026 = vpop.f32.mrf.mxu0
  %v3027 = vadd.f32 %v2986, %v3026
  %3028 = vdwg.mxu0
  %v3029 = vtanh.pop %v3018
  %v3030 = vtanh.pop %v3021
  %s3031 = scalar_lea.vmem %s8, 112
  %v3032 = vld [vmem:[%s3031] sm:$0xff]
  %v3033 = vld [vmem:[%s3031 + $0x8] sm:$0xff]
  %3035 = vset.pattern.permute.xlu0 0
  %3036 = vperm.xlu0 %3035, %v3032
  %v3037 = vpop.permute.xlu0 %3036
  %3040 = vset.pattern.permute.xlu0 0
  %3041 = vperm.xlu0 %3040, %v3033
  %v3042 = vpop.permute.xlu0 %3041
  %v3044 = vmul.f32 %v3029, %v3037
  %v3045 = vmul.f32 %v3030, %v3042
  %v3046 = vmul.f32 %v3044, 1.442695
  %v3047 = vpow.pop %v3046
  %v3048 = vmul.f32 %v3045, 1.442695
  %v3049 = vpow.pop %v3048
  %v3050 = vmul.f32 %v2686, %v3047
  %v3051 = vmul.f32 %v2687, %v3049
  %v3052 = vadd.f32 %v3050, %v3024
  %v3053 = vadd.f32 %v3051, %v3027
  %v3054 = vadd.f32 %v3044, %v3045
  %v3055 = vrot.slane %v3054, 4
  %v3056 = vadd.f32 %v3054, %v3055
  %v3057 = vrot.slane %v3056, 2
  %v3058 = vadd.f32 %v3056, %v3057
  %v3059 = vrot.slane %v3058, 1
  %v3060 = vadd.f32 %v3058, %v3059
  %v3061 = vadd.f32 %v2695, %v3060
  %s3062 = scalar_lea.vmem %s2, 512
  %v3063 = vld [vmem:[%s3062] sm:$0xff]
  %v3064 = vld [vmem:[%s3062 + $0x8] sm:$0xff]
  %v3065 = vld [vmem:[%s3062 + $0x10] sm:$0xff]
  %v3066 = vld [vmem:[%s3062 + $0x18] sm:$0xff]
  %v3067 = vld [vmem:[%s3062 + $0x20] sm:$0xff]
  %v3068 = vld [vmem:[%s3062 + $0x28] sm:$0xff]
  %v3069 = vld [vmem:[%s3062 + $0x30] sm:$0xff]
  %v3070 = vld [vmem:[%s3062 + $0x38] sm:$0xff]
  %s3071 = scalar_lea.vmem %s3, 512
  %v3072 = vld [vmem:[%s3071] sm:$0xff]
  %v3073 = vld [vmem:[%s3071 + $0x8] sm:$0xff]
  %v3074 = vld [vmem:[%s3071 + $0x10] sm:$0xff]
  %v3075 = vld [vmem:[%s3071 + $0x18] sm:$0xff]
  %v3076 = vld [vmem:[%s3071 + $0x20] sm:$0xff]
  %v3077 = vld [vmem:[%s3071 + $0x28] sm:$0xff]
  %v3078 = vld [vmem:[%s3071 + $0x30] sm:$0xff]
  %v3079 = vld [vmem:[%s3071 + $0x38] sm:$0xff]
  %3081 = vset.pattern.permute.xlu0 0
  %3082 = vperm.xlu0 %3081, %v3072
  %v3083 = vpop.permute.xlu0 %3082
  %3086 = vset.pattern.permute.xlu0 0
  %3087 = vperm.xlu0 %3086, %v3073
  %v3088 = vpop.permute.xlu0 %3087
  %3091 = vset.pattern.permute.xlu0 0
  %3092 = vperm.xlu0 %3091, %v3074
  %v3093 = vpop.permute.xlu0 %3092
  %3096 = vset.pattern.permute.xlu0 0
  %3097 = vperm.xlu0 %3096, %v3075
  %v3098 = vpop.permute.xlu0 %3097
  %3101 = vset.pattern.permute.xlu0 0
  %3102 = vperm.xlu0 %3101, %v3076
  %v3103 = vpop.permute.xlu0 %3102
  %3106 = vset.pattern.permute.xlu0 0
  %3107 = vperm.xlu0 %3106, %v3077
  %v3108 = vpop.permute.xlu0 %3107
  %3111 = vset.pattern.permute.xlu0 0
  %3112 = vperm.xlu0 %3111, %v3078
  %v3113 = vpop.permute.xlu0 %3112
  %3116 = vset.pattern.permute.xlu0 0
  %3117 = vperm.xlu0 %3116, %v3079
  %v3118 = vpop.permute.xlu0 %3117
  %v3121 = vsel %vm61, %v3063, 0
  %v3124 = vsel %vm61, %v3064, 0
  %v3127 = vsel %vm61, %v3065, 0
  %v3130 = vsel %vm61, %v3066, 0
  %v3133 = vsel %vm61, %v3067, 0
  %v3136 = vsel %vm61, %v3068, 0
  %v3139 = vsel %vm61, %v3069, 0
  %v3142 = vsel %vm61, %v3070, 0
  %3144 = vmatpush.msra.mxu0 0.0
  %3145 = vmatpush.msra.mxu0 0.0
  %3146 = vmatpush.msra.mxu0 0.0
  %3147 = vmatpush.msra.mxu0 0.0
  %3148 = vmatpush.msra.mxu0 0.0
  %3149 = vmatpush.msra.mxu0 0.0
  %3150 = vmatpush.msra.mxu0 0.0
  %3151 = vmatpush.msra.mxu0 0.0
  %3152 = vmatpush.msra.mxu0 0.0
  %3153 = vmatpush.msra.mxu0 0.0
  %3154 = vmatpush.msra.mxu0 0.0
  %3155 = vmatpush.msra.mxu0 0.0
  %3156 = vmatpush.msra.mxu0 0.0
  %3157 = vmatpush.msra.mxu0 0.0
  %3158 = vmatpush.msra.mxu0 %v3053
  %3159 = vmatpush.msra.mxu0 %v3052
  %3160 = vmatmul.f32.gmra.mxu0 %v3121
  %v3161 = vpop.f32.mrf.mxu0
  %v3162 = vadd.f32 %v3083, %v3161
  %3163 = vmatmul.f32.gmra.mxu0 %v3124
  %v3164 = vpop.f32.mrf.mxu0
  %v3165 = vadd.f32 %v3088, %v3164
  %3166 = vmatmul.f32.gmra.mxu0 %v3127
  %v3167 = vpop.f32.mrf.mxu0
  %v3168 = vadd.f32 %v3093, %v3167
  %3169 = vmatmul.f32.gmra.mxu0 %v3130
  %v3170 = vpop.f32.mrf.mxu0
  %v3171 = vadd.f32 %v3098, %v3170
  %3172 = vmatmul.f32.gmra.mxu0 %v3133
  %v3173 = vpop.f32.mrf.mxu0
  %v3174 = vadd.f32 %v3103, %v3173
  %3175 = vmatmul.f32.gmra.mxu0 %v3136
  %v3176 = vpop.f32.mrf.mxu0
  %v3177 = vadd.f32 %v3108, %v3176
  %3178 = vmatmul.f32.gmra.mxu0 %v3139
  %v3179 = vpop.f32.mrf.mxu0
  %v3180 = vadd.f32 %v3113, %v3179
  %3181 = vmatmul.f32.gmra.mxu0 %v3142
  %v3182 = vpop.f32.mrf.mxu0
  %v3183 = vadd.f32 %v3118, %v3182
  %3184 = vdwg.mxu0
  %v3185 = vmax.f32 %v3162, 0.0
  %v3186 = vmax.f32 %v3165, 0.0
  %v3187 = vmax.f32 %v3168, 0.0
  %v3188 = vmax.f32 %v3171, 0.0
  %v3189 = vmax.f32 %v3174, 0.0
  %v3190 = vmax.f32 %v3177, 0.0
  %v3191 = vmax.f32 %v3180, 0.0
  %v3192 = vmax.f32 %v3183, 0.0
  %s3193 = scalar_lea.vmem %s4, 512
  %v3194 = vld [vmem:[%s3193] sm:$0xff]
  %v3195 = vld [vmem:[%s3193 + $0x8] sm:$0xff]
  %v3196 = vld [vmem:[%s3193 + $0x10] sm:$0xff]
  %v3197 = vld [vmem:[%s3193 + $0x18] sm:$0xff]
  %v3198 = vld [vmem:[%s3193 + $0x20] sm:$0xff]
  %v3199 = vld [vmem:[%s3193 + $0x28] sm:$0xff]
  %v3200 = vld [vmem:[%s3193 + $0x30] sm:$0xff]
  %v3201 = vld [vmem:[%s3193 + $0x38] sm:$0xff]
  %s3202 = scalar_lea.vmem %s5, 512
  %v3203 = vld [vmem:[%s3202] sm:$0xff]
  %v3204 = vld [vmem:[%s3202 + $0x8] sm:$0xff]
  %v3205 = vld [vmem:[%s3202 + $0x10] sm:$0xff]
  %v3206 = vld [vmem:[%s3202 + $0x18] sm:$0xff]
  %v3207 = vld [vmem:[%s3202 + $0x20] sm:$0xff]
  %v3208 = vld [vmem:[%s3202 + $0x28] sm:$0xff]
  %v3209 = vld [vmem:[%s3202 + $0x30] sm:$0xff]
  %v3210 = vld [vmem:[%s3202 + $0x38] sm:$0xff]
  %3212 = vset.pattern.permute.xlu0 0
  %3213 = vperm.xlu0 %3212, %v3203
  %v3214 = vpop.permute.xlu0 %3213
  %3217 = vset.pattern.permute.xlu0 0
  %3218 = vperm.xlu0 %3217, %v3204
  %v3219 = vpop.permute.xlu0 %3218
  %3222 = vset.pattern.permute.xlu0 0
  %3223 = vperm.xlu0 %3222, %v3205
  %v3224 = vpop.permute.xlu0 %3223
  %3227 = vset.pattern.permute.xlu0 0
  %3228 = vperm.xlu0 %3227, %v3206
  %v3229 = vpop.permute.xlu0 %3228
  %3232 = vset.pattern.permute.xlu0 0
  %3233 = vperm.xlu0 %3232, %v3207
  %v3234 = vpop.permute.xlu0 %3233
  %3237 = vset.pattern.permute.xlu0 0
  %3238 = vperm.xlu0 %3237, %v3208
  %v3239 = vpop.permute.xlu0 %3238
  %3242 = vset.pattern.permute.xlu0 0
  %3243 = vperm.xlu0 %3242, %v3209
  %v3244 = vpop.permute.xlu0 %3243
  %3247 = vset.pattern.permute.xlu0 0
  %3248 = vperm.xlu0 %3247, %v3210
  %v3249 = vpop.permute.xlu0 %3248
  %v3252 = vsel %vm325, %v3194, 0
  %v3255 = vsel %vm325, %v3195, 0
  %v3258 = vsel %vm325, %v3196, 0
  %v3261 = vsel %vm325, %v3197, 0
  %v3264 = vsel %vm325, %v3198, 0
  %v3267 = vsel %vm325, %v3199, 0
  %v3270 = vsel %vm325, %v3200, 0
  %v3273 = vsel %vm325, %v3201, 0
  %3275 = vmatpush.msra.mxu0 0.0
  %3276 = vmatpush.msra.mxu0 0.0
  %3277 = vmatpush.msra.mxu0 0.0
  %3278 = vmatpush.msra.mxu0 0.0
  %3279 = vmatpush.msra.mxu0 0.0
  %3280 = vmatpush.msra.mxu0 0.0
  %3281 = vmatpush.msra.mxu0 0.0
  %3282 = vmatpush.msra.mxu0 0.0
  %3283 = vmatpush.msra.mxu0 %v3192
  %3284 = vmatpush.msra.mxu0 %v3191
  %3285 = vmatpush.msra.mxu0 %v3190
  %3286 = vmatpush.msra.mxu0 %v3189
  %3287 = vmatpush.msra.mxu0 %v3188
  %3288 = vmatpush.msra.mxu0 %v3187
  %3289 = vmatpush.msra.mxu0 %v3186
  %3290 = vmatpush.msra.mxu0 %v3185
  %3291 = vmatmul.f32.gmra.mxu0 %v3252
  %v3292 = vpop.f32.mrf.mxu0
  %v3293 = vadd.f32 %v3214, %v3292
  %3294 = vmatmul.f32.gmra.mxu0 %v3255
  %v3295 = vpop.f32.mrf.mxu0
  %v3296 = vadd.f32 %v3219, %v3295
  %3297 = vmatmul.f32.gmra.mxu0 %v3258
  %v3298 = vpop.f32.mrf.mxu0
  %v3299 = vadd.f32 %v3224, %v3298
  %3300 = vmatmul.f32.gmra.mxu0 %v3261
  %v3301 = vpop.f32.mrf.mxu0
  %v3302 = vadd.f32 %v3229, %v3301
  %3303 = vmatmul.f32.gmra.mxu0 %v3264
  %v3304 = vpop.f32.mrf.mxu0
  %v3305 = vadd.f32 %v3234, %v3304
  %3306 = vmatmul.f32.gmra.mxu0 %v3267
  %v3307 = vpop.f32.mrf.mxu0
  %v3308 = vadd.f32 %v3239, %v3307
  %3309 = vmatmul.f32.gmra.mxu0 %v3270
  %v3310 = vpop.f32.mrf.mxu0
  %v3311 = vadd.f32 %v3244, %v3310
  %3312 = vmatmul.f32.gmra.mxu0 %v3273
  %v3313 = vpop.f32.mrf.mxu0
  %v3314 = vadd.f32 %v3249, %v3313
  %3315 = vdwg.mxu0
  %v3316 = vmax.f32 %v3293, 0.0
  %v3317 = vmax.f32 %v3296, 0.0
  %v3318 = vmax.f32 %v3299, 0.0
  %v3319 = vmax.f32 %v3302, 0.0
  %v3320 = vmax.f32 %v3305, 0.0
  %v3321 = vmax.f32 %v3308, 0.0
  %v3322 = vmax.f32 %v3311, 0.0
  %v3323 = vmax.f32 %v3314, 0.0
  %s3324 = scalar_lea.vmem %s6, 256
  %v3325 = vld [vmem:[%s3324] sm:$0xff]
  %v3326 = vld [vmem:[%s3324 + $0x8] sm:$0xff]
  %v3327 = vld [vmem:[%s3324 + $0x10] sm:$0xff]
  %v3328 = vld [vmem:[%s3324 + $0x18] sm:$0xff]
  %s3329 = scalar_lea.vmem %s7, 256
  %v3330 = vld [vmem:[%s3329] sm:$0xff]
  %v3331 = vld [vmem:[%s3329 + $0x8] sm:$0xff]
  %v3332 = vld [vmem:[%s3329 + $0x10] sm:$0xff]
  %v3333 = vld [vmem:[%s3329 + $0x18] sm:$0xff]
  %3335 = vset.pattern.permute.xlu0 0
  %3336 = vperm.xlu0 %3335, %v3330
  %v3337 = vpop.permute.xlu0 %3336
  %3340 = vset.pattern.permute.xlu0 0
  %3341 = vperm.xlu0 %3340, %v3331
  %v3342 = vpop.permute.xlu0 %3341
  %3345 = vset.pattern.permute.xlu0 0
  %3346 = vperm.xlu0 %3345, %v3332
  %v3347 = vpop.permute.xlu0 %3346
  %3350 = vset.pattern.permute.xlu0 0
  %3351 = vperm.xlu0 %3350, %v3333
  %v3352 = vpop.permute.xlu0 %3351
  %v3355 = vsel %vm325, %v3325, 0
  %v3358 = vsel %vm325, %v3326, 0
  %v3361 = vsel %vm325, %v3327, 0
  %v3364 = vsel %vm325, %v3328, 0
  %3366 = vmatpush.msra.mxu0 0.0
  %3367 = vmatpush.msra.mxu0 0.0
  %3368 = vmatpush.msra.mxu0 0.0
  %3369 = vmatpush.msra.mxu0 0.0
  %3370 = vmatpush.msra.mxu0 0.0
  %3371 = vmatpush.msra.mxu0 0.0
  %3372 = vmatpush.msra.mxu0 0.0
  %3373 = vmatpush.msra.mxu0 0.0
  %3374 = vmatpush.msra.mxu0 %v3323
  %3375 = vmatpush.msra.mxu0 %v3322
  %3376 = vmatpush.msra.mxu0 %v3321
  %3377 = vmatpush.msra.mxu0 %v3320
  %3378 = vmatpush.msra.mxu0 %v3319
  %3379 = vmatpush.msra.mxu0 %v3318
  %3380 = vmatpush.msra.mxu0 %v3317
  %3381 = vmatpush.msra.mxu0 %v3316
  %3382 = vmatmul.f32.gmra.mxu0 %v3355
  %v3383 = vpop.f32.mrf.mxu0
  %v3384 = vadd.f32 %v3337, %v3383
  %3385 = vmatmul.f32.gmra.mxu0 %v3358
  %v3386 = vpop.f32.mrf.mxu0
  %v3387 = vadd.f32 %v3342, %v3386
  %3388 = vmatmul.f32.gmra.mxu0 %v3361
  %v3389 = vpop.f32.mrf.mxu0
  %v3390 = vadd.f32 %v3347, %v3389
  %3391 = vmatmul.f32.gmra.mxu0 %v3364
  %v3392 = vpop.f32.mrf.mxu0
  %v3393 = vadd.f32 %v3352, %v3392
  %3394 = vdwg.mxu0
  %v3395 = vtanh.pop %v3384
  %v3396 = vtanh.pop %v3387
  %s3397 = scalar_lea.vmem %s8, 128
  %v3398 = vld [vmem:[%s3397] sm:$0xff]
  %v3399 = vld [vmem:[%s3397 + $0x8] sm:$0xff]
  %3401 = vset.pattern.permute.xlu0 0
  %3402 = vperm.xlu0 %3401, %v3398
  %v3403 = vpop.permute.xlu0 %3402
  %3406 = vset.pattern.permute.xlu0 0
  %3407 = vperm.xlu0 %3406, %v3399
  %v3408 = vpop.permute.xlu0 %3407
  %v3410 = vmul.f32 %v3395, %v3403
  %v3411 = vmul.f32 %v3396, %v3408
  %v3412 = vmul.f32 %v3410, 1.442695
  %v3413 = vpow.pop %v3412
  %v3414 = vmul.f32 %v3411, 1.442695
  %v3415 = vpow.pop %v3414
  %v3416 = vmul.f32 %v3052, %v3413
  %v3417 = vmul.f32 %v3053, %v3415
  %v3418 = vadd.f32 %v3416, %v3390
  %v3419 = vadd.f32 %v3417, %v3393
  %v3420 = vadd.f32 %v3410, %v3411
  %v3421 = vrot.slane %v3420, 4
  %v3422 = vadd.f32 %v3420, %v3421
  %v3423 = vrot.slane %v3422, 2
  %v3424 = vadd.f32 %v3422, %v3423
  %v3425 = vrot.slane %v3424, 1
  %v3426 = vadd.f32 %v3424, %v3425
  %v3427 = vadd.f32 %v3061, %v3426
  %s3428 = scalar_lea.vmem %s2, 576
  %v3429 = vld [vmem:[%s3428] sm:$0xff]
  %v3430 = vld [vmem:[%s3428 + $0x8] sm:$0xff]
  %v3431 = vld [vmem:[%s3428 + $0x10] sm:$0xff]
  %v3432 = vld [vmem:[%s3428 + $0x18] sm:$0xff]
  %v3433 = vld [vmem:[%s3428 + $0x20] sm:$0xff]
  %v3434 = vld [vmem:[%s3428 + $0x28] sm:$0xff]
  %v3435 = vld [vmem:[%s3428 + $0x30] sm:$0xff]
  %v3436 = vld [vmem:[%s3428 + $0x38] sm:$0xff]
  %s3437 = scalar_lea.vmem %s3, 576
  %v3438 = vld [vmem:[%s3437] sm:$0xff]
  %v3439 = vld [vmem:[%s3437 + $0x8] sm:$0xff]
  %v3440 = vld [vmem:[%s3437 + $0x10] sm:$0xff]
  %v3441 = vld [vmem:[%s3437 + $0x18] sm:$0xff]
  %v3442 = vld [vmem:[%s3437 + $0x20] sm:$0xff]
  %v3443 = vld [vmem:[%s3437 + $0x28] sm:$0xff]
  %v3444 = vld [vmem:[%s3437 + $0x30] sm:$0xff]
  %v3445 = vld [vmem:[%s3437 + $0x38] sm:$0xff]
  %3447 = vset.pattern.permute.xlu0 0
  %3448 = vperm.xlu0 %3447, %v3438
  %v3449 = vpop.permute.xlu0 %3448
  %3452 = vset.pattern.permute.xlu0 0
  %3453 = vperm.xlu0 %3452, %v3439
  %v3454 = vpop.permute.xlu0 %3453
  %3457 = vset.pattern.permute.xlu0 0
  %3458 = vperm.xlu0 %3457, %v3440
  %v3459 = vpop.permute.xlu0 %3458
  %3462 = vset.pattern.permute.xlu0 0
  %3463 = vperm.xlu0 %3462, %v3441
  %v3464 = vpop.permute.xlu0 %3463
  %3467 = vset.pattern.permute.xlu0 0
  %3468 = vperm.xlu0 %3467, %v3442
  %v3469 = vpop.permute.xlu0 %3468
  %3472 = vset.pattern.permute.xlu0 0
  %3473 = vperm.xlu0 %3472, %v3443
  %v3474 = vpop.permute.xlu0 %3473
  %3477 = vset.pattern.permute.xlu0 0
  %3478 = vperm.xlu0 %3477, %v3444
  %v3479 = vpop.permute.xlu0 %3478
  %3482 = vset.pattern.permute.xlu0 0
  %3483 = vperm.xlu0 %3482, %v3445
  %v3484 = vpop.permute.xlu0 %3483
  %v3487 = vsel %vm61, %v3429, 0
  %v3490 = vsel %vm61, %v3430, 0
  %v3493 = vsel %vm61, %v3431, 0
  %v3496 = vsel %vm61, %v3432, 0
  %v3499 = vsel %vm61, %v3433, 0
  %v3502 = vsel %vm61, %v3434, 0
  %v3505 = vsel %vm61, %v3435, 0
  %v3508 = vsel %vm61, %v3436, 0
  %3510 = vmatpush.msra.mxu0 0.0
  %3511 = vmatpush.msra.mxu0 0.0
  %3512 = vmatpush.msra.mxu0 0.0
  %3513 = vmatpush.msra.mxu0 0.0
  %3514 = vmatpush.msra.mxu0 0.0
  %3515 = vmatpush.msra.mxu0 0.0
  %3516 = vmatpush.msra.mxu0 0.0
  %3517 = vmatpush.msra.mxu0 0.0
  %3518 = vmatpush.msra.mxu0 0.0
  %3519 = vmatpush.msra.mxu0 0.0
  %3520 = vmatpush.msra.mxu0 0.0
  %3521 = vmatpush.msra.mxu0 0.0
  %3522 = vmatpush.msra.mxu0 0.0
  %3523 = vmatpush.msra.mxu0 0.0
  %3524 = vmatpush.msra.mxu0 %v3419
  %3525 = vmatpush.msra.mxu0 %v3418
  %3526 = vmatmul.f32.gmra.mxu0 %v3487
  %v3527 = vpop.f32.mrf.mxu0
  %v3528 = vadd.f32 %v3449, %v3527
  %3529 = vmatmul.f32.gmra.mxu0 %v3490
  %v3530 = vpop.f32.mrf.mxu0
  %v3531 = vadd.f32 %v3454, %v3530
  %3532 = vmatmul.f32.gmra.mxu0 %v3493
  %v3533 = vpop.f32.mrf.mxu0
  %v3534 = vadd.f32 %v3459, %v3533
  %3535 = vmatmul.f32.gmra.mxu0 %v3496
  %v3536 = vpop.f32.mrf.mxu0
  %v3537 = vadd.f32 %v3464, %v3536
  %3538 = vmatmul.f32.gmra.mxu0 %v3499
  %v3539 = vpop.f32.mrf.mxu0
  %v3540 = vadd.f32 %v3469, %v3539
  %3541 = vmatmul.f32.gmra.mxu0 %v3502
  %v3542 = vpop.f32.mrf.mxu0
  %v3543 = vadd.f32 %v3474, %v3542
  %3544 = vmatmul.f32.gmra.mxu0 %v3505
  %v3545 = vpop.f32.mrf.mxu0
  %v3546 = vadd.f32 %v3479, %v3545
  %3547 = vmatmul.f32.gmra.mxu0 %v3508
  %v3548 = vpop.f32.mrf.mxu0
  %v3549 = vadd.f32 %v3484, %v3548
  %3550 = vdwg.mxu0
  %v3551 = vmax.f32 %v3528, 0.0
  %v3552 = vmax.f32 %v3531, 0.0
  %v3553 = vmax.f32 %v3534, 0.0
  %v3554 = vmax.f32 %v3537, 0.0
  %v3555 = vmax.f32 %v3540, 0.0
  %v3556 = vmax.f32 %v3543, 0.0
  %v3557 = vmax.f32 %v3546, 0.0
  %v3558 = vmax.f32 %v3549, 0.0
  %s3559 = scalar_lea.vmem %s4, 576
  %v3560 = vld [vmem:[%s3559] sm:$0xff]
  %v3561 = vld [vmem:[%s3559 + $0x8] sm:$0xff]
  %v3562 = vld [vmem:[%s3559 + $0x10] sm:$0xff]
  %v3563 = vld [vmem:[%s3559 + $0x18] sm:$0xff]
  %v3564 = vld [vmem:[%s3559 + $0x20] sm:$0xff]
  %v3565 = vld [vmem:[%s3559 + $0x28] sm:$0xff]
  %v3566 = vld [vmem:[%s3559 + $0x30] sm:$0xff]
  %v3567 = vld [vmem:[%s3559 + $0x38] sm:$0xff]
  %s3568 = scalar_lea.vmem %s5, 576
  %v3569 = vld [vmem:[%s3568] sm:$0xff]
  %v3570 = vld [vmem:[%s3568 + $0x8] sm:$0xff]
  %v3571 = vld [vmem:[%s3568 + $0x10] sm:$0xff]
  %v3572 = vld [vmem:[%s3568 + $0x18] sm:$0xff]
  %v3573 = vld [vmem:[%s3568 + $0x20] sm:$0xff]
  %v3574 = vld [vmem:[%s3568 + $0x28] sm:$0xff]
  %v3575 = vld [vmem:[%s3568 + $0x30] sm:$0xff]
  %v3576 = vld [vmem:[%s3568 + $0x38] sm:$0xff]
  %3578 = vset.pattern.permute.xlu0 0
  %3579 = vperm.xlu0 %3578, %v3569
  %v3580 = vpop.permute.xlu0 %3579
  %3583 = vset.pattern.permute.xlu0 0
  %3584 = vperm.xlu0 %3583, %v3570
  %v3585 = vpop.permute.xlu0 %3584
  %3588 = vset.pattern.permute.xlu0 0
  %3589 = vperm.xlu0 %3588, %v3571
  %v3590 = vpop.permute.xlu0 %3589
  %3593 = vset.pattern.permute.xlu0 0
  %3594 = vperm.xlu0 %3593, %v3572
  %v3595 = vpop.permute.xlu0 %3594
  %3598 = vset.pattern.permute.xlu0 0
  %3599 = vperm.xlu0 %3598, %v3573
  %v3600 = vpop.permute.xlu0 %3599
  %3603 = vset.pattern.permute.xlu0 0
  %3604 = vperm.xlu0 %3603, %v3574
  %v3605 = vpop.permute.xlu0 %3604
  %3608 = vset.pattern.permute.xlu0 0
  %3609 = vperm.xlu0 %3608, %v3575
  %v3610 = vpop.permute.xlu0 %3609
  %3613 = vset.pattern.permute.xlu0 0
  %3614 = vperm.xlu0 %3613, %v3576
  %v3615 = vpop.permute.xlu0 %3614
  %v3618 = vsel %vm325, %v3560, 0
  %v3621 = vsel %vm325, %v3561, 0
  %v3624 = vsel %vm325, %v3562, 0
  %v3627 = vsel %vm325, %v3563, 0
  %v3630 = vsel %vm325, %v3564, 0
  %v3633 = vsel %vm325, %v3565, 0
  %v3636 = vsel %vm325, %v3566, 0
  %v3639 = vsel %vm325, %v3567, 0
  %3641 = vmatpush.msra.mxu0 0.0
  %3642 = vmatpush.msra.mxu0 0.0
  %3643 = vmatpush.msra.mxu0 0.0
  %3644 = vmatpush.msra.mxu0 0.0
  %3645 = vmatpush.msra.mxu0 0.0
  %3646 = vmatpush.msra.mxu0 0.0
  %3647 = vmatpush.msra.mxu0 0.0
  %3648 = vmatpush.msra.mxu0 0.0
  %3649 = vmatpush.msra.mxu0 %v3558
  %3650 = vmatpush.msra.mxu0 %v3557
  %3651 = vmatpush.msra.mxu0 %v3556
  %3652 = vmatpush.msra.mxu0 %v3555
  %3653 = vmatpush.msra.mxu0 %v3554
  %3654 = vmatpush.msra.mxu0 %v3553
  %3655 = vmatpush.msra.mxu0 %v3552
  %3656 = vmatpush.msra.mxu0 %v3551
  %3657 = vmatmul.f32.gmra.mxu0 %v3618
  %v3658 = vpop.f32.mrf.mxu0
  %v3659 = vadd.f32 %v3580, %v3658
  %3660 = vmatmul.f32.gmra.mxu0 %v3621
  %v3661 = vpop.f32.mrf.mxu0
  %v3662 = vadd.f32 %v3585, %v3661
  %3663 = vmatmul.f32.gmra.mxu0 %v3624
  %v3664 = vpop.f32.mrf.mxu0
  %v3665 = vadd.f32 %v3590, %v3664
  %3666 = vmatmul.f32.gmra.mxu0 %v3627
  %v3667 = vpop.f32.mrf.mxu0
  %v3668 = vadd.f32 %v3595, %v3667
  %3669 = vmatmul.f32.gmra.mxu0 %v3630
  %v3670 = vpop.f32.mrf.mxu0
  %v3671 = vadd.f32 %v3600, %v3670
  %3672 = vmatmul.f32.gmra.mxu0 %v3633
  %v3673 = vpop.f32.mrf.mxu0
  %v3674 = vadd.f32 %v3605, %v3673
  %3675 = vmatmul.f32.gmra.mxu0 %v3636
  %v3676 = vpop.f32.mrf.mxu0
  %v3677 = vadd.f32 %v3610, %v3676
  %3678 = vmatmul.f32.gmra.mxu0 %v3639
  %v3679 = vpop.f32.mrf.mxu0
  %v3680 = vadd.f32 %v3615, %v3679
  %3681 = vdwg.mxu0
  %v3682 = vmax.f32 %v3659, 0.0
  %v3683 = vmax.f32 %v3662, 0.0
  %v3684 = vmax.f32 %v3665, 0.0
  %v3685 = vmax.f32 %v3668, 0.0
  %v3686 = vmax.f32 %v3671, 0.0
  %v3687 = vmax.f32 %v3674, 0.0
  %v3688 = vmax.f32 %v3677, 0.0
  %v3689 = vmax.f32 %v3680, 0.0
  %s3690 = scalar_lea.vmem %s6, 288
  %v3691 = vld [vmem:[%s3690] sm:$0xff]
  %v3692 = vld [vmem:[%s3690 + $0x8] sm:$0xff]
  %v3693 = vld [vmem:[%s3690 + $0x10] sm:$0xff]
  %v3694 = vld [vmem:[%s3690 + $0x18] sm:$0xff]
  %s3695 = scalar_lea.vmem %s7, 288
  %v3696 = vld [vmem:[%s3695] sm:$0xff]
  %v3697 = vld [vmem:[%s3695 + $0x8] sm:$0xff]
  %v3698 = vld [vmem:[%s3695 + $0x10] sm:$0xff]
  %v3699 = vld [vmem:[%s3695 + $0x18] sm:$0xff]
  %3701 = vset.pattern.permute.xlu0 0
  %3702 = vperm.xlu0 %3701, %v3696
  %v3703 = vpop.permute.xlu0 %3702
  %3706 = vset.pattern.permute.xlu0 0
  %3707 = vperm.xlu0 %3706, %v3697
  %v3708 = vpop.permute.xlu0 %3707
  %3711 = vset.pattern.permute.xlu0 0
  %3712 = vperm.xlu0 %3711, %v3698
  %v3713 = vpop.permute.xlu0 %3712
  %3716 = vset.pattern.permute.xlu0 0
  %3717 = vperm.xlu0 %3716, %v3699
  %v3718 = vpop.permute.xlu0 %3717
  %v3721 = vsel %vm325, %v3691, 0
  %v3724 = vsel %vm325, %v3692, 0
  %v3727 = vsel %vm325, %v3693, 0
  %v3730 = vsel %vm325, %v3694, 0
  %3732 = vmatpush.msra.mxu0 0.0
  %3733 = vmatpush.msra.mxu0 0.0
  %3734 = vmatpush.msra.mxu0 0.0
  %3735 = vmatpush.msra.mxu0 0.0
  %3736 = vmatpush.msra.mxu0 0.0
  %3737 = vmatpush.msra.mxu0 0.0
  %3738 = vmatpush.msra.mxu0 0.0
  %3739 = vmatpush.msra.mxu0 0.0
  %3740 = vmatpush.msra.mxu0 %v3689
  %3741 = vmatpush.msra.mxu0 %v3688
  %3742 = vmatpush.msra.mxu0 %v3687
  %3743 = vmatpush.msra.mxu0 %v3686
  %3744 = vmatpush.msra.mxu0 %v3685
  %3745 = vmatpush.msra.mxu0 %v3684
  %3746 = vmatpush.msra.mxu0 %v3683
  %3747 = vmatpush.msra.mxu0 %v3682
  %3748 = vmatmul.f32.gmra.mxu0 %v3721
  %v3749 = vpop.f32.mrf.mxu0
  %v3750 = vadd.f32 %v3703, %v3749
  %3751 = vmatmul.f32.gmra.mxu0 %v3724
  %v3752 = vpop.f32.mrf.mxu0
  %v3753 = vadd.f32 %v3708, %v3752
  %3754 = vmatmul.f32.gmra.mxu0 %v3727
  %v3755 = vpop.f32.mrf.mxu0
  %v3756 = vadd.f32 %v3713, %v3755
  %3757 = vmatmul.f32.gmra.mxu0 %v3730
  %v3758 = vpop.f32.mrf.mxu0
  %v3759 = vadd.f32 %v3718, %v3758
  %3760 = vdwg.mxu0
  %v3761 = vtanh.pop %v3750
  %v3762 = vtanh.pop %v3753
  %s3763 = scalar_lea.vmem %s8, 144
  %v3764 = vld [vmem:[%s3763] sm:$0xff]
  %v3765 = vld [vmem:[%s3763 + $0x8] sm:$0xff]
  %3767 = vset.pattern.permute.xlu0 0
  %3768 = vperm.xlu0 %3767, %v3764
  %v3769 = vpop.permute.xlu0 %3768
  %3772 = vset.pattern.permute.xlu0 0
  %3773 = vperm.xlu0 %3772, %v3765
  %v3774 = vpop.permute.xlu0 %3773
  %v3776 = vmul.f32 %v3761, %v3769
  %v3777 = vmul.f32 %v3762, %v3774
  %v3778 = vmul.f32 %v3776, 1.442695
  %v3779 = vpow.pop %v3778
  %v3780 = vmul.f32 %v3777, 1.442695
  %v3781 = vpow.pop %v3780
  %v3782 = vmul.f32 %v3418, %v3779
  %v3783 = vmul.f32 %v3419, %v3781
  %v3784 = vadd.f32 %v3782, %v3756
  %v3785 = vadd.f32 %v3783, %v3759
  %v3786 = vadd.f32 %v3776, %v3777
  %v3787 = vrot.slane %v3786, 4
  %v3788 = vadd.f32 %v3786, %v3787
  %v3789 = vrot.slane %v3788, 2
  %v3790 = vadd.f32 %v3788, %v3789
  %v3791 = vrot.slane %v3790, 1
  %v3792 = vadd.f32 %v3790, %v3791
  %v3793 = vadd.f32 %v3427, %v3792
  %v3794 = vadd.s32 %v51, 16
  %v3795 = vadd.s32 %v51, 24
  %v3796 = vadd.s32 %v51, 32
  %v3797 = vadd.s32 %v51, 40
  %v3798 = vadd.s32 %v51, 48
  %v3799 = vadd.s32 %v51, 56
  %v3800 = vadd.s32 %v51, 64
  %v3801 = vadd.s32 %v51, 72
  %v3802 = vadd.s32 %v51, 80
  %v3803 = vadd.s32 %v51, 88
  %v3804 = vadd.s32 %v51, 96
  %v3805 = vadd.s32 %v51, 104
  %v3806 = vadd.s32 %v51, 112
  %v3807 = vadd.s32 %v51, 120
  %vm3808 = vcmp.eq.s32.totalorder %v3794, %v54
  %vm3809 = vcmp.eq.s32.totalorder %v3795, %v54
  %vm3810 = vcmp.eq.s32.totalorder %v3796, %v54
  %vm3811 = vcmp.eq.s32.totalorder %v3797, %v54
  %vm3812 = vcmp.eq.s32.totalorder %v3798, %v54
  %vm3813 = vcmp.eq.s32.totalorder %v3799, %v54
  %vm3814 = vcmp.eq.s32.totalorder %v3800, %v54
  %vm3815 = vcmp.eq.s32.totalorder %v3801, %v54
  %vm3816 = vcmp.eq.s32.totalorder %v3802, %v54
  %vm3817 = vcmp.eq.s32.totalorder %v3803, %v54
  %vm3818 = vcmp.eq.s32.totalorder %v3804, %v54
  %vm3819 = vcmp.eq.s32.totalorder %v3805, %v54
  %vm3820 = vcmp.eq.s32.totalorder %v3806, %v54
  %vm3821 = vcmp.eq.s32.totalorder %v3807, %v54
  %v3822 = vsel %vm3808, 1, 0
  %v3823 = vsel %vm3809, 1, 0
  %v3824 = vsel %vm3810, 1, 0
  %v3825 = vsel %vm3811, 1, 0
  %v3826 = vsel %vm3812, 1, 0
  %v3827 = vsel %vm3813, 1, 0
  %v3828 = vsel %vm3814, 1, 0
  %v3829 = vsel %vm3815, 1, 0
  %v3830 = vsel %vm3816, 1, 0
  %v3831 = vsel %vm3817, 1, 0
  %v3832 = vsel %vm3818, 1, 0
  %v3833 = vsel %vm3819, 1, 0
  %v3834 = vsel %vm3820, 1, 0
  %v3835 = vsel %vm3821, 1, 0
  %v3836 = vcvt.s32.f32 %v3822
  %v3837 = vcvt.s32.f32 %v3823
  %v3838 = vcvt.s32.f32 %v3824
  %v3839 = vcvt.s32.f32 %v3825
  %v3840 = vcvt.s32.f32 %v3826
  %v3841 = vcvt.s32.f32 %v3827
  %v3842 = vcvt.s32.f32 %v3828
  %v3843 = vcvt.s32.f32 %v3829
  %v3844 = vcvt.s32.f32 %v3830
  %v3845 = vcvt.s32.f32 %v3831
  %v3846 = vcvt.s32.f32 %v3832
  %v3847 = vcvt.s32.f32 %v3833
  %v3848 = vcvt.s32.f32 %v3834
  %v3849 = vcvt.s32.f32 %v3835
  %3850 = vmatpush.xpose.msra.mxu0 0.0
  %3851 = vmatpush.xpose.msra.mxu0 0.0
  %3852 = vmatpush.xpose.msra.mxu0 0.0
  %3853 = vmatpush.xpose.msra.mxu0 0.0
  %3854 = vmatpush.xpose.msra.mxu0 0.0
  %3855 = vmatpush.xpose.msra.mxu0 0.0
  %3856 = vmatpush.xpose.msra.mxu0 0.0
  %3857 = vmatpush.xpose.msra.mxu0 0.0
  %3858 = vmatpush.xpose.msra.mxu0 0.0
  %3859 = vmatpush.xpose.msra.mxu0 0.0
  %3860 = vmatpush.xpose.msra.mxu0 0.0
  %3861 = vmatpush.xpose.msra.mxu0 0.0
  %3862 = vmatpush.xpose.msra.mxu0 0.0
  %3863 = vmatpush.xpose.msra.mxu0 0.0
  %3864 = vmatpush.xpose.msra.mxu0 %v3785
  %3865 = vmatpush.xpose.msra.mxu0 %v3784
  %3866 = vmatmul.f32.gmra.mxu0 %v59
  %v3867 = vpop.f32.mrf.mxu0
  %v3868 = vadd.f32 0.0, %v3867
  %3869 = vmatmul.f32.gmra.mxu0 %v60
  %v3870 = vpop.f32.mrf.mxu0
  %v3871 = vadd.f32 0.0, %v3870
  %3872 = vmatmul.f32.gmra.mxu0 %v3836
  %v3873 = vpop.f32.mrf.mxu0
  %v3874 = vadd.f32 0.0, %v3873
  %3875 = vmatmul.f32.gmra.mxu0 %v3837
  %v3876 = vpop.f32.mrf.mxu0
  %v3877 = vadd.f32 0.0, %v3876
  %3878 = vmatmul.f32.gmra.mxu0 %v3838
  %v3879 = vpop.f32.mrf.mxu0
  %v3880 = vadd.f32 0.0, %v3879
  %3881 = vmatmul.f32.gmra.mxu0 %v3839
  %v3882 = vpop.f32.mrf.mxu0
  %v3883 = vadd.f32 0.0, %v3882
  %3884 = vmatmul.f32.gmra.mxu0 %v3840
  %v3885 = vpop.f32.mrf.mxu0
  %v3886 = vadd.f32 0.0, %v3885
  %3887 = vmatmul.f32.gmra.mxu0 %v3841
  %v3888 = vpop.f32.mrf.mxu0
  %v3889 = vadd.f32 0.0, %v3888
  %3890 = vmatmul.f32.gmra.mxu0 %v3842
  %v3891 = vpop.f32.mrf.mxu0
  %v3892 = vadd.f32 0.0, %v3891
  %3893 = vmatmul.f32.gmra.mxu0 %v3843
  %v3894 = vpop.f32.mrf.mxu0
  %v3895 = vadd.f32 0.0, %v3894
  %3896 = vmatmul.f32.gmra.mxu0 %v3844
  %v3897 = vpop.f32.mrf.mxu0
  %v3898 = vadd.f32 0.0, %v3897
  %3899 = vmatmul.f32.gmra.mxu0 %v3845
  %v3900 = vpop.f32.mrf.mxu0
  %v3901 = vadd.f32 0.0, %v3900
  %3902 = vmatmul.f32.gmra.mxu0 %v3846
  %v3903 = vpop.f32.mrf.mxu0
  %v3904 = vadd.f32 0.0, %v3903
  %3905 = vmatmul.f32.gmra.mxu0 %v3847
  %v3906 = vpop.f32.mrf.mxu0
  %v3907 = vadd.f32 0.0, %v3906
  %3908 = vmatmul.f32.gmra.mxu0 %v3848
  %v3909 = vpop.f32.mrf.mxu0
  %v3910 = vadd.f32 0.0, %v3909
  %3911 = vmatmul.f32.gmra.mxu0 %v3849
  %v3912 = vpop.f32.mrf.mxu0
  %v3913 = vadd.f32 0.0, %v3912
  %3914 = vdwg.mxu0
  %3915 = vst.msk [vmem:[%s9] sm:$0xff] %vm61, %v3868
  %3916 = vst.msk [vmem:[%s9 + $0x8] sm:$0xff] %vm61, %v3871
  %3917 = vst.msk [vmem:[%s9 + $0x10] sm:$0xff] %vm61, %v3874
  %3918 = vst.msk [vmem:[%s9 + $0x18] sm:$0xff] %vm61, %v3877
  %3919 = vst.msk [vmem:[%s9 + $0x20] sm:$0xff] %vm61, %v3880
  %3920 = vst.msk [vmem:[%s9 + $0x28] sm:$0xff] %vm61, %v3883
  %3921 = vst.msk [vmem:[%s9 + $0x30] sm:$0xff] %vm61, %v3886
  %3922 = vst.msk [vmem:[%s9 + $0x38] sm:$0xff] %vm61, %v3889
  %3923 = vst.msk [vmem:[%s9 + $0x40] sm:$0xff] %vm61, %v3892
  %3924 = vst.msk [vmem:[%s9 + $0x48] sm:$0xff] %vm61, %v3895
  %3925 = vst.msk [vmem:[%s9 + $0x50] sm:$0xff] %vm61, %v3898
  %3926 = vst.msk [vmem:[%s9 + $0x58] sm:$0xff] %vm61, %v3901
  %3927 = vst.msk [vmem:[%s9 + $0x60] sm:$0xff] %vm61, %v3904
  %3928 = vst.msk [vmem:[%s9 + $0x68] sm:$0xff] %vm61, %v3907
  %3929 = vst.msk [vmem:[%s9 + $0x70] sm:$0xff] %vm61, %v3910
  %3930 = vst.msk [vmem:[%s9 + $0x78] sm:$0xff] %vm61, %v3913
  %3931 = vst [vmem:[%s10] sm:$0x1] %v3793
  // Predicated region
  $region38: #{realnvp_forward.1} parent=0 // pred_check
    _
  $region39: #{realnvp_forward.1} parent=0 // pred_check_branch
    %3933 = sbr.rel (0) target = $region41
  $region40: #{realnvp_forward.1} parent=0 // pred_region
    _
  $region41: #{realnvp_forward.1} parent=0 // pred_fallthru
    _
  // Predicated region
  $region42: #{realnvp_forward.1} parent=0 // pred_check
    _
  $region43: #{realnvp_forward.1} parent=0 // pred_check_branch
    %3935 = sbr.rel (0) target = $region45
  $region44: #{realnvp_forward.1} parent=0 // pred_region
    _
  $region45: #{realnvp_forward.1} parent=0 // pred_fallthru
    _
  // Predicated region
  $region46: #{realnvp_forward.1} parent=0 // pred_check
    _
  $region47: #{realnvp_forward.1} parent=0 // pred_check_branch
    %3937 = sbr.rel (0) target = $region49
  $region48: #{realnvp_forward.1} parent=0 // pred_region
    _
  $region49: #{realnvp_forward.1} parent=0 // pred_fallthru
    _
  // Predicated region
  $region50: #{realnvp_forward.1} parent=0 // pred_check
    _
  $region51: #{realnvp_forward.1} parent=0 // pred_check_branch
    %3939 = sbr.rel (0) target = $region53
  $region52: #{realnvp_forward.1} parent=0 // pred_region
    _
  $region53: #{realnvp_forward.1} parent=0 // pred_fallthru
    _

</llo_original>
